<compile_context>
chip_gen: v7x
topology: tpu7x:2x2x1
jax: 0.10.0
libtpu: 0.0.40
codegen_flags: <defaults>
</compile_context>

<pallas_src>
import jax
import jax.numpy as jnp
from jax import lax
from jax.experimental import pallas as pl
from jax.experimental.pallas import tpu as pltpu


def _node_kernel(t_ref, x_ref,
                 w1_ref, b1_ref, w2_ref, b2_ref, w3_ref, b3_ref, w4_ref, b4_ref,
                 o_ref):
    """Fused NODE forward (RK4 over the MLPStack vector field) for one batch tile."""
    # Parameters are VMEM-resident for the whole call; load once.
    w1 = w1_ref[...]; b1 = b1_ref[...]   # weights bf16, biases f32
    w2 = w2_ref[...]; b2 = b2_ref[...]
    w3 = w3_ref[...]; b3 = b3_ref[...]
    w4 = w4_ref[...]; b4 = b4_ref[...]

    def field(z):
        # bf16 operands into the MXU, f32 accumulation; all elementwise math
        # (bias add, ReLU, residual) stays f32.
        h = jnp.maximum(
            jnp.dot(z.astype(jnp.bfloat16), w1,
                    preferred_element_type=jnp.float32) + b1, 0.0)
        h = jnp.maximum(
            jnp.dot(h.astype(jnp.bfloat16), w2,
                    preferred_element_type=jnp.float32) + b2, 0.0) + h
        h = jnp.maximum(
            jnp.dot(h.astype(jnp.bfloat16), w3,
                    preferred_element_type=jnp.float32) + b3, 0.0) + h
        return jnp.maximum(
            jnp.dot(h.astype(jnp.bfloat16), w4,
                    preferred_element_type=jnp.float32) + b4, 0.0)

    num_steps = t_ref.shape[0] - 1  # static

    def rk4_step(i, z):
        dt = t_ref[i + 1] - t_ref[i]          # scalar SMEM reads
        half_dt = 0.5 * dt
        # Incremental stage-sum accumulation: only {z, acc, current k} live.
        k = field(z)
        acc = k
        k = field(z + half_dt * k)
        acc = acc + 2.0 * k
        k = field(z + half_dt * k)
        acc = acc + 2.0 * k
        k = field(z + dt * k)
        acc = acc + k
        return z + (dt / 6.0) * acc

    # Carry the ODE state in f32.  Loop kept rolled: at MXU-filling tile sizes
    # full unroll only inflates code size / spills (sweep unroll=True if M is
    # ever small again).
    z = lax.fori_loop(0, num_steps, rk4_step, x_ref[...].astype(jnp.float32))
    o_ref[...] = z.astype(o_ref.dtype)


def node_forward(z0, t_span, params, *, block_rows=1024):
    """NODE.forward(t_0=z0, t_span) with take_last=True.

    z0:     [N, D] initial state.
    t_span: [T] integration times (monotone).
    params: ((W1,b1),(W2,b2),(W3,b3),(W4,b4)), W stored pre-transposed [in,out]
            (any float dtype; cast to bf16 here), b stored as [1, out] f32.
    Returns [N, D] state at t_span[-1].
    """
    (w1, b1), (w2, b2), (w3, b3), (w4, b4) = params
    n, d = z0.shape

    # --- batch-tile selection -------------------------------------------------
    bm = min(block_rows, n)
    if n % bm != 0:
        bm = n                      # small / irregular batch: one full tile
    if n // bm == 1 and n >= 512 and (n // 2) % 8 == 0:
        bm = n // 2                 # >=2 tiles so v7x's two TCs both get work
    grid = (n // bm,)

    # Cast matmul weights to bf16 once (MXU-native on v5e/v6e/v7x); biases f32.
    w1 = w1.astype(jnp.bfloat16); w2 = w2.astype(jnp.bfloat16)
    w3 = w3.astype(jnp.bfloat16); w4 = w4.astype(jnp.bfloat16)
    b1 = b1.astype(jnp.float32); b2 = b2.astype(jnp.float32)
    b3 = b3.astype(jnp.float32); b4 = b4.astype(jnp.float32)

    row_map = lambda i: (i, 0)     # batch tile moves with the grid
    const_map = lambda i: (0, 0)   # params stay resident across tiles

    param_specs = [pl.BlockSpec(p.shape, const_map)
                   for p in (w1, b1, w2, b2, w3, b3, w4, b4)]

    return pl.pallas_call(
        _node_kernel,
        out_shape=jax.ShapeDtypeStruct((n, d), z0.dtype),
        grid=grid,
        in_specs=[pl.BlockSpec(memory_space=pltpu.MemorySpace.SMEM)]   # t_span
                 + [pl.BlockSpec((bm, d), row_map)]                    # z0 tile
                 + param_specs,
        out_specs=pl.BlockSpec((bm, d), row_map),
        compiler_params=pltpu.CompilerParams(
            dimension_semantics=("parallel",)),
    )(t_span, z0, w1, b1, w2, b2, w3, b3, w4, b4)


def node_ref(z0, t_span, params):
    """Pure-JAX reference with the SAME numerics as the kernel:
    bf16 matmul operands, f32 accumulation/elementwise, fixed-step RK4,
    take_last=True."""
    (w1, b1), (w2, b2), (w3, b3), (w4, b4) = params
    w1 = w1.astype(jnp.bfloat16); w2 = w2.astype(jnp.bfloat16)
    w3 = w3.astype(jnp.bfloat16); w4 = w4.astype(jnp.bfloat16)

    def field(z):
        h = jnp.maximum(jnp.dot(z.astype(jnp.bfloat16), w1,
                                preferred_element_type=jnp.float32) + b1, 0.0)
        h = jnp.maximum(jnp.dot(h.astype(jnp.bfloat16), w2,
                                preferred_element_type=jnp.float32) + b2, 0.0) + h
        h = jnp.maximum(jnp.dot(h.astype(jnp.bfloat16), w3,
                                preferred_element_type=jnp.float32) + b3, 0.0) + h
        return jnp.maximum(jnp.dot(h.astype(jnp.bfloat16), w4,
                                   preferred_element_type=jnp.float32) + b4, 0.0)

    z = z0.astype(jnp.float32)
    for i in range(t_span.shape[0] - 1):
        dt = t_span[i + 1] - t_span[i]
        k1 = field(z)
        k2 = field(z + 0.5 * dt * k1)
        k3 = field(z + 0.5 * dt * k2)
        k4 = field(z + dt * k3)
        z = z + (dt / 6.0) * (k1 + 2.0 * k2 + 2.0 * k3 + k4)
    return z.astype(z0.dtype)


if __name__ == "__main__":
    # Modest but MXU-respecting shapes: 512x32 f32 state (64 KB), 4 RK4 steps.
    N, D, H = 512, 32, 128    # batch, input_size (= output_size), hidden_size
    T = 5                     # t_span points -> 4 RK4 steps

    key = jax.random.PRNGKey(0)
    keys = jax.random.split(key, 9)

    z0 = jax.random.normal(keys[0], (N, D), dtype=jnp.float32)
    t_span = jnp.linspace(0.0, 1.0, T, dtype=jnp.float32)

    def linear_init(kw, kb, fan_in, fan_out):
        # nn.Linear-style deterministic init, weight stored pre-transposed [in, out].
        bound = 1.0 / (fan_in ** 0.5)
        w = jax.random.uniform(kw, (fan_in, fan_out), minval=-bound, maxval=bound,
                               dtype=jnp.float32)
        b = jax.random.uniform(kb, (1, fan_out), minval=-bound, maxval=bound,
                               dtype=jnp.float32)
        return w, b

    params = (
        linear_init(keys[1], keys[2], D, H),   # input  -> hidden
        linear_init(keys[3], keys[4], H, H),   # hidden -> hidden (+res)
        linear_init(keys[5], keys[6], H, H),   # hidden -> hidden (+res)
        linear_init(keys[7], keys[8], H, D),   # hidden -> output
    )

    out = node_forward(z0, t_span, params)     # -> 2 tiles of 256 rows
    out = jax.block_until_ready(out)

    ref = node_ref(z0, t_span, params)
    assert out.shape == (N, D)
    err = float(jnp.max(jnp.abs(out - ref)))
    assert err < 5e-3, f"mismatch vs reference: {err}"

    print("KERNEL_OK")
</pallas_src>

<mosaic_0001>
module attributes {stable_mosaic.version = 11 : i64} {
  func.func @_node_kernel(%arg0: i32, %arg1: memref<5xf32, #tpu.memory_space<smem>>, %arg2: memref<256x32xf32, #tpu.memory_space<vmem>>, %arg3: memref<32x128xbf16, #tpu.memory_space<vmem>>, %arg4: memref<1x128xf32, #tpu.memory_space<vmem>>, %arg5: memref<128x128xbf16, #tpu.memory_space<vmem>>, %arg6: memref<1x128xf32, #tpu.memory_space<vmem>>, %arg7: memref<128x128xbf16, #tpu.memory_space<vmem>>, %arg8: memref<1x128xf32, #tpu.memory_space<vmem>>, %arg9: memref<128x32xbf16, #tpu.memory_space<vmem>>, %arg10: memref<1x32xf32, #tpu.memory_space<vmem>>, %arg11: memref<256x32xf32, #tpu.memory_space<vmem>>) attributes {dimension_semantics = [#tpu.dimension_semantics<parallel>], iteration_bounds = array<i64: 2>, scalar_prefetch = 0 : i64, scratch_operands = 0 : i64, tpu.core_type = #tpu.core_type<tc>, window_params = [{transform_indices = @transform_0, window_bounds = array<i64: 5>}, {transform_indices = @transform_1, window_bounds = array<i64: 256, 32>}, {pipeline_mode = #tpu.pipeline_mode<synchronous>, transform_indices = @transform_2, window_bounds = array<i64: 32, 128>}, {pipeline_mode = #tpu.pipeline_mode<synchronous>, transform_indices = @transform_3, window_bounds = array<i64: 1, 128>}, {pipeline_mode = #tpu.pipeline_mode<synchronous>, transform_indices = @transform_4, window_bounds = array<i64: 128, 128>}, {pipeline_mode = #tpu.pipeline_mode<synchronous>, transform_indices = @transform_5, window_bounds = array<i64: 1, 128>}, {pipeline_mode = #tpu.pipeline_mode<synchronous>, transform_indices = @transform_6, window_bounds = array<i64: 128, 128>}, {pipeline_mode = #tpu.pipeline_mode<synchronous>, transform_indices = @transform_7, window_bounds = array<i64: 1, 128>}, {pipeline_mode = #tpu.pipeline_mode<synchronous>, transform_indices = @transform_8, window_bounds = array<i64: 128, 32>}, {pipeline_mode = #tpu.pipeline_mode<synchronous>, transform_indices = @transform_9, window_bounds = array<i64: 1, 32>}, {transform_indices = @transform_10, window_bounds = array<i64: 256, 32>}]} {
    %c0 = arith.constant 0 : index
    %c0_0 = arith.constant 0 : index
    %0 = vector.load %arg3[%c0, %c0_0] : memref<32x128xbf16, #tpu.memory_space<vmem>>, vector<32x128xbf16>
    %c0_1 = arith.constant 0 : index
    %c0_2 = arith.constant 0 : index
    %1 = vector.load %arg4[%c0_1, %c0_2] : memref<1x128xf32, #tpu.memory_space<vmem>>, vector<1x128xf32>
    %c0_3 = arith.constant 0 : index
    %c0_4 = arith.constant 0 : index
    %2 = vector.load %arg5[%c0_3, %c0_4] : memref<128x128xbf16, #tpu.memory_space<vmem>>, vector<128x128xbf16>
    %c0_5 = arith.constant 0 : index
    %c0_6 = arith.constant 0 : index
    %3 = vector.load %arg6[%c0_5, %c0_6] : memref<1x128xf32, #tpu.memory_space<vmem>>, vector<1x128xf32>
    %c0_7 = arith.constant 0 : index
    %c0_8 = arith.constant 0 : index
    %4 = vector.load %arg7[%c0_7, %c0_8] : memref<128x128xbf16, #tpu.memory_space<vmem>>, vector<128x128xbf16>
    %c0_9 = arith.constant 0 : index
    %c0_10 = arith.constant 0 : index
    %5 = vector.load %arg8[%c0_9, %c0_10] : memref<1x128xf32, #tpu.memory_space<vmem>>, vector<1x128xf32>
    %c0_11 = arith.constant 0 : index
    %c0_12 = arith.constant 0 : index
    %6 = vector.load %arg9[%c0_11, %c0_12] : memref<128x32xbf16, #tpu.memory_space<vmem>>, vector<128x32xbf16>
    %c0_13 = arith.constant 0 : index
    %c0_14 = arith.constant 0 : index
    %7 = vector.load %arg10[%c0_13, %c0_14] : memref<1x32xf32, #tpu.memory_space<vmem>>, vector<1x32xf32>
    %c0_15 = arith.constant 0 : index
    %c0_16 = arith.constant 0 : index
    %8 = vector.load %arg2[%c0_15, %c0_16] : memref<256x32xf32, #tpu.memory_space<vmem>>, vector<256x32xf32>
    %c0_i32 = arith.constant 0 : i32
    %c4_i32 = arith.constant 4 : i32
    %9 = arith.addi %c0_i32, %c4_i32 : i32
    %c1_i32 = arith.constant 1 : i32
    %10 = scf.for %arg12 = %c0_i32 to %9 step %c1_i32 iter_args(%arg13 = %8) -> (vector<256x32xf32>)  : i32 {
      %c1_i32_20 = arith.constant 1 : i32
      %12 = arith.addi %arg12, %c1_i32_20 : i32
      %13 = arith.index_cast %12 : i32 to index
      %14 = memref.load %arg1[%13] : memref<5xf32, #tpu.memory_space<smem>>
      %15 = arith.index_cast %arg12 : i32 to index
      %16 = memref.load %arg1[%15] : memref<5xf32, #tpu.memory_space<smem>>
      %17 = arith.subf %14, %16 : f32
      %cst = arith.constant 5.000000e-01 : f32
      %18 = arith.mulf %cst, %17 : f32
      %19 = arith.truncf %arg13 : vector<256x32xf32> to vector<256x32xbf16>
      %cst_21 = arith.constant dense<0.000000e+00> : vector<256x128xf32>
      %20 = tpu.matmul %19, %0, %cst_21 {dimension_numbers = #tpu.dot_dimension_numbers<[1], [0], [0], [1], [0, 0, 1, 1], [], []>} : vector<256x32xbf16>, vector<32x128xbf16>, vector<256x128xf32> -> vector<256x128xf32>
      %21 = vector.broadcast %1 : vector<1x128xf32> to vector<256x128xf32>
      %22 = arith.addf %20, %21 : vector<256x128xf32>
      %cst_22 = arith.constant 0.000000e+00 : f32
      %23 = vector.broadcast %cst_22 : f32 to vector<256x128xf32>
      %24 = arith.maximumf %22, %23 : vector<256x128xf32>
      %25 = arith.truncf %24 : vector<256x128xf32> to vector<256x128xbf16>
      %cst_23 = arith.constant dense<0.000000e+00> : vector<256x128xf32>
      %26 = tpu.matmul %25, %2, %cst_23 {dimension_numbers = #tpu.dot_dimension_numbers<[1], [0], [0], [1], [0, 0, 1, 1], [], []>} : vector<256x128xbf16>, vector<128x128xbf16>, vector<256x128xf32> -> vector<256x128xf32>
      %27 = vector.broadcast %3 : vector<1x128xf32> to vector<256x128xf32>
      %28 = arith.addf %26, %27 : vector<256x128xf32>
      %cst_24 = arith.constant 0.000000e+00 : f32
      %29 = vector.broadcast %cst_24 : f32 to vector<256x128xf32>
      %30 = arith.maximumf %28, %29 : vector<256x128xf32>
      %31 = arith.addf %30, %24 : vector<256x128xf32>
      %32 = arith.truncf %31 : vector<256x128xf32> to vector<256x128xbf16>
      %cst_25 = arith.constant dense<0.000000e+00> : vector<256x128xf32>
      %33 = tpu.matmul %32, %4, %cst_25 {dimension_numbers = #tpu.dot_dimension_numbers<[1], [0], [0], [1], [0, 0, 1, 1], [], []>} : vector<256x128xbf16>, vector<128x128xbf16>, vector<256x128xf32> -> vector<256x128xf32>
      %34 = vector.broadcast %5 : vector<1x128xf32> to vector<256x128xf32>
      %35 = arith.addf %33, %34 : vector<256x128xf32>
      %cst_26 = arith.constant 0.000000e+00 : f32
      %36 = vector.broadcast %cst_26 : f32 to vector<256x128xf32>
      %37 = arith.maximumf %35, %36 : vector<256x128xf32>
      %38 = arith.addf %37, %31 : vector<256x128xf32>
      %39 = arith.truncf %38 : vector<256x128xf32> to vector<256x128xbf16>
      %cst_27 = arith.constant dense<0.000000e+00> : vector<256x32xf32>
      %40 = tpu.matmul %39, %6, %cst_27 {dimension_numbers = #tpu.dot_dimension_numbers<[1], [0], [0], [1], [0, 0, 1, 1], [], []>} : vector<256x128xbf16>, vector<128x32xbf16>, vector<256x32xf32> -> vector<256x32xf32>
      %41 = vector.broadcast %7 : vector<1x32xf32> to vector<256x32xf32>
      %42 = arith.addf %40, %41 : vector<256x32xf32>
      %cst_28 = arith.constant 0.000000e+00 : f32
      %43 = vector.broadcast %cst_28 : f32 to vector<256x32xf32>
      %44 = arith.maximumf %42, %43 : vector<256x32xf32>
      %45 = vector.broadcast %18 : f32 to vector<256x32xf32>
      %46 = arith.mulf %45, %44 : vector<256x32xf32>
      %47 = arith.addf %arg13, %46 : vector<256x32xf32>
      %48 = arith.truncf %47 : vector<256x32xf32> to vector<256x32xbf16>
      %cst_29 = arith.constant dense<0.000000e+00> : vector<256x128xf32>
      %49 = tpu.matmul %48, %0, %cst_29 {dimension_numbers = #tpu.dot_dimension_numbers<[1], [0], [0], [1], [0, 0, 1, 1], [], []>} : vector<256x32xbf16>, vector<32x128xbf16>, vector<256x128xf32> -> vector<256x128xf32>
      %50 = vector.broadcast %1 : vector<1x128xf32> to vector<256x128xf32>
      %51 = arith.addf %49, %50 : vector<256x128xf32>
      %cst_30 = arith.constant 0.000000e+00 : f32
      %52 = vector.broadcast %cst_30 : f32 to vector<256x128xf32>
      %53 = arith.maximumf %51, %52 : vector<256x128xf32>
      %54 = arith.truncf %53 : vector<256x128xf32> to vector<256x128xbf16>
      %cst_31 = arith.constant dense<0.000000e+00> : vector<256x128xf32>
      %55 = tpu.matmul %54, %2, %cst_31 {dimension_numbers = #tpu.dot_dimension_numbers<[1], [0], [0], [1], [0, 0, 1, 1], [], []>} : vector<256x128xbf16>, vector<128x128xbf16>, vector<256x128xf32> -> vector<256x128xf32>
      %56 = vector.broadcast %3 : vector<1x128xf32> to vector<256x128xf32>
      %57 = arith.addf %55, %56 : vector<256x128xf32>
      %cst_32 = arith.constant 0.000000e+00 : f32
      %58 = vector.broadcast %cst_32 : f32 to vector<256x128xf32>
      %59 = arith.maximumf %57, %58 : vector<256x128xf32>
      %60 = arith.addf %59, %53 : vector<256x128xf32>
      %61 = arith.truncf %60 : vector<256x128xf32> to vector<256x128xbf16>
      %cst_33 = arith.constant dense<0.000000e+00> : vector<256x128xf32>
      %62 = tpu.matmul %61, %4, %cst_33 {dimension_numbers = #tpu.dot_dimension_numbers<[1], [0], [0], [1], [0, 0, 1, 1], [], []>} : vector<256x128xbf16>, vector<128x128xbf16>, vector<256x128xf32> -> vector<256x128xf32>
      %63 = vector.broadcast %5 : vector<1x128xf32> to vector<256x128xf32>
      %64 = arith.addf %62, %63 : vector<256x128xf32>
      %cst_34 = arith.constant 0.000000e+00 : f32
      %65 = vector.broadcast %cst_34 : f32 to vector<256x128xf32>
      %66 = arith.maximumf %64, %65 : vector<256x128xf32>
      %67 = arith.addf %66, %60 : vector<256x128xf32>
      %68 = arith.truncf %67 : vector<256x128xf32> to vector<256x128xbf16>
      %cst_35 = arith.constant dense<0.000000e+00> : vector<256x32xf32>
      %69 = tpu.matmul %68, %6, %cst_35 {dimension_numbers = #tpu.dot_dimension_numbers<[1], [0], [0], [1], [0, 0, 1, 1], [], []>} : vector<256x128xbf16>, vector<128x32xbf16>, vector<256x32xf32> -> vector<256x32xf32>
      %70 = vector.broadcast %7 : vector<1x32xf32> to vector<256x32xf32>
      %71 = arith.addf %69, %70 : vector<256x32xf32>
      %cst_36 = arith.constant 0.000000e+00 : f32
      %72 = vector.broadcast %cst_36 : f32 to vector<256x32xf32>
      %73 = arith.maximumf %71, %72 : vector<256x32xf32>
      %cst_37 = arith.constant 2.000000e+00 : f32
      %74 = vector.broadcast %cst_37 : f32 to vector<256x32xf32>
      %75 = arith.mulf %74, %73 : vector<256x32xf32>
      %76 = arith.addf %44, %75 : vector<256x32xf32>
      %77 = vector.broadcast %18 : f32 to vector<256x32xf32>
      %78 = arith.mulf %77, %73 : vector<256x32xf32>
      %79 = arith.addf %arg13, %78 : vector<256x32xf32>
      %80 = arith.truncf %79 : vector<256x32xf32> to vector<256x32xbf16>
      %cst_38 = arith.constant dense<0.000000e+00> : vector<256x128xf32>
      %81 = tpu.matmul %80, %0, %cst_38 {dimension_numbers = #tpu.dot_dimension_numbers<[1], [0], [0], [1], [0, 0, 1, 1], [], []>} : vector<256x32xbf16>, vector<32x128xbf16>, vector<256x128xf32> -> vector<256x128xf32>
      %82 = vector.broadcast %1 : vector<1x128xf32> to vector<256x128xf32>
      %83 = arith.addf %81, %82 : vector<256x128xf32>
      %cst_39 = arith.constant 0.000000e+00 : f32
      %84 = vector.broadcast %cst_39 : f32 to vector<256x128xf32>
      %85 = arith.maximumf %83, %84 : vector<256x128xf32>
      %86 = arith.truncf %85 : vector<256x128xf32> to vector<256x128xbf16>
      %cst_40 = arith.constant dense<0.000000e+00> : vector<256x128xf32>
      %87 = tpu.matmul %86, %2, %cst_40 {dimension_numbers = #tpu.dot_dimension_numbers<[1], [0], [0], [1], [0, 0, 1, 1], [], []>} : vector<256x128xbf16>, vector<128x128xbf16>, vector<256x128xf32> -> vector<256x128xf32>
      %88 = vector.broadcast %3 : vector<1x128xf32> to vector<256x128xf32>
      %89 = arith.addf %87, %88 : vector<256x128xf32>
      %cst_41 = arith.constant 0.000000e+00 : f32
      %90 = vector.broadcast %cst_41 : f32 to vector<256x128xf32>
      %91 = arith.maximumf %89, %90 : vector<256x128xf32>
      %92 = arith.addf %91, %85 : vector<256x128xf32>
      %93 = arith.truncf %92 : vector<256x128xf32> to vector<256x128xbf16>
      %cst_42 = arith.constant dense<0.000000e+00> : vector<256x128xf32>
      %94 = tpu.matmul %93, %4, %cst_42 {dimension_numbers = #tpu.dot_dimension_numbers<[1], [0], [0], [1], [0, 0, 1, 1], [], []>} : vector<256x128xbf16>, vector<128x128xbf16>, vector<256x128xf32> -> vector<256x128xf32>
      %95 = vector.broadcast %5 : vector<1x128xf32> to vector<256x128xf32>
      %96 = arith.addf %94, %95 : vector<256x128xf32>
      %cst_43 = arith.constant 0.000000e+00 : f32
      %97 = vector.broadcast %cst_43 : f32 to vector<256x128xf32>
      %98 = arith.maximumf %96, %97 : vector<256x128xf32>
      %99 = arith.addf %98, %92 : vector<256x128xf32>
      %100 = arith.truncf %99 : vector<256x128xf32> to vector<256x128xbf16>
      %cst_44 = arith.constant dense<0.000000e+00> : vector<256x32xf32>
      %101 = tpu.matmul %100, %6, %cst_44 {dimension_numbers = #tpu.dot_dimension_numbers<[1], [0], [0], [1], [0, 0, 1, 1], [], []>} : vector<256x128xbf16>, vector<128x32xbf16>, vector<256x32xf32> -> vector<256x32xf32>
      %102 = vector.broadcast %7 : vector<1x32xf32> to vector<256x32xf32>
      %103 = arith.addf %101, %102 : vector<256x32xf32>
      %cst_45 = arith.constant 0.000000e+00 : f32
      %104 = vector.broadcast %cst_45 : f32 to vector<256x32xf32>
      %105 = arith.maximumf %103, %104 : vector<256x32xf32>
      %cst_46 = arith.constant 2.000000e+00 : f32
      %106 = vector.broadcast %cst_46 : f32 to vector<256x32xf32>
      %107 = arith.mulf %106, %105 : vector<256x32xf32>
      %108 = arith.addf %76, %107 : vector<256x32xf32>
      %109 = vector.broadcast %17 : f32 to vector<256x32xf32>
      %110 = arith.mulf %109, %105 : vector<256x32xf32>
      %111 = arith.addf %arg13, %110 : vector<256x32xf32>
      %112 = arith.truncf %111 : vector<256x32xf32> to vector<256x32xbf16>
      %cst_47 = arith.constant dense<0.000000e+00> : vector<256x128xf32>
      %113 = tpu.matmul %112, %0, %cst_47 {dimension_numbers = #tpu.dot_dimension_numbers<[1], [0], [0], [1], [0, 0, 1, 1], [], []>} : vector<256x32xbf16>, vector<32x128xbf16>, vector<256x128xf32> -> vector<256x128xf32>
      %114 = vector.broadcast %1 : vector<1x128xf32> to vector<256x128xf32>
      %115 = arith.addf %113, %114 : vector<256x128xf32>
      %cst_48 = arith.constant 0.000000e+00 : f32
      %116 = vector.broadcast %cst_48 : f32 to vector<256x128xf32>
      %117 = arith.maximumf %115, %116 : vector<256x128xf32>
      %118 = arith.truncf %117 : vector<256x128xf32> to vector<256x128xbf16>
      %cst_49 = arith.constant dense<0.000000e+00> : vector<256x128xf32>
      %119 = tpu.matmul %118, %2, %cst_49 {dimension_numbers = #tpu.dot_dimension_numbers<[1], [0], [0], [1], [0, 0, 1, 1], [], []>} : vector<256x128xbf16>, vector<128x128xbf16>, vector<256x128xf32> -> vector<256x128xf32>
      %120 = vector.broadcast %3 : vector<1x128xf32> to vector<256x128xf32>
      %121 = arith.addf %119, %120 : vector<256x128xf32>
      %cst_50 = arith.constant 0.000000e+00 : f32
      %122 = vector.broadcast %cst_50 : f32 to vector<256x128xf32>
      %123 = arith.maximumf %121, %122 : vector<256x128xf32>
      %124 = arith.addf %123, %117 : vector<256x128xf32>
      %125 = arith.truncf %124 : vector<256x128xf32> to vector<256x128xbf16>
      %cst_51 = arith.constant dense<0.000000e+00> : vector<256x128xf32>
      %126 = tpu.matmul %125, %4, %cst_51 {dimension_numbers = #tpu.dot_dimension_numbers<[1], [0], [0], [1], [0, 0, 1, 1], [], []>} : vector<256x128xbf16>, vector<128x128xbf16>, vector<256x128xf32> -> vector<256x128xf32>
      %127 = vector.broadcast %5 : vector<1x128xf32> to vector<256x128xf32>
      %128 = arith.addf %126, %127 : vector<256x128xf32>
      %cst_52 = arith.constant 0.000000e+00 : f32
      %129 = vector.broadcast %cst_52 : f32 to vector<256x128xf32>
      %130 = arith.maximumf %128, %129 : vector<256x128xf32>
      %131 = arith.addf %130, %124 : vector<256x128xf32>
      %132 = arith.truncf %131 : vector<256x128xf32> to vector<256x128xbf16>
      %cst_53 = arith.constant dense<0.000000e+00> : vector<256x32xf32>
      %133 = tpu.matmul %132, %6, %cst_53 {dimension_numbers = #tpu.dot_dimension_numbers<[1], [0], [0], [1], [0, 0, 1, 1], [], []>} : vector<256x128xbf16>, vector<128x32xbf16>, vector<256x32xf32> -> vector<256x32xf32>
      %134 = vector.broadcast %7 : vector<1x32xf32> to vector<256x32xf32>
      %135 = arith.addf %133, %134 : vector<256x32xf32>
      %cst_54 = arith.constant 0.000000e+00 : f32
      %136 = vector.broadcast %cst_54 : f32 to vector<256x32xf32>
      %137 = arith.maximumf %135, %136 : vector<256x32xf32>
      %138 = arith.addf %108, %137 : vector<256x32xf32>
      %cst_55 = arith.constant 6.000000e+00 : f32
      %139 = arith.divf %17, %cst_55 : f32
      %140 = vector.broadcast %139 : f32 to vector<256x32xf32>
      %141 = arith.mulf %140, %138 : vector<256x32xf32>
      %142 = arith.addf %arg13, %141 : vector<256x32xf32>
      scf.yield %142 : vector<256x32xf32>
    }
    %c4_i32_17 = arith.constant 4 : i32
    %c0_18 = arith.constant 0 : index
    %c0_19 = arith.constant 0 : index
    %11 = vector.load %arg11[%c0_18, %c0_19] : memref<256x32xf32, #tpu.memory_space<vmem>>, vector<256x32xf32>
    tpu.vector_store %arg11[%c0_18, %c0_19], %10 {strides = array<i32>} : memref<256x32xf32, #tpu.memory_space<vmem>>, vector<256x32xf32>,
    return
  }
  func.func @transform_0(%arg0: i32) -> i32 {
    %c0_i32 = arith.constant 0 : i32
    %c0_i32_0 = arith.constant 0 : i32
    return %c0_i32 : i32
  }
  func.func @transform_1(%arg0: i32) -> (i32, i32) {
    %c0_i32 = arith.constant 0 : i32
    %c0_i32_0 = arith.constant 0 : i32
    return %arg0, %c0_i32 : i32, i32
  }
  func.func @transform_2(%arg0: i32) -> (i32, i32) {
    %c0_i32 = arith.constant 0 : i32
    %c0_i32_0 = arith.constant 0 : i32
    %c0_i32_1 = arith.constant 0 : i32
    return %c0_i32, %c0_i32_0 : i32, i32
  }
  func.func @transform_3(%arg0: i32) -> (i32, i32) {
    %c0_i32 = arith.constant 0 : i32
    %c0_i32_0 = arith.constant 0 : i32
    %c0_i32_1 = arith.constant 0 : i32
    return %c0_i32, %c0_i32_0 : i32, i32
  }
  func.func @transform_4(%arg0: i32) -> (i32, i32) {
    %c0_i32 = arith.constant 0 : i32
    %c0_i32_0 = arith.constant 0 : i32
    %c0_i32_1 = arith.constant 0 : i32
    return %c0_i32, %c0_i32_0 : i32, i32
  }
  func.func @transform_5(%arg0: i32) -> (i32, i32) {
    %c0_i32 = arith.constant 0 : i32
    %c0_i32_0 = arith.constant 0 : i32
    %c0_i32_1 = arith.constant 0 : i32
    return %c0_i32, %c0_i32_0 : i32, i32
  }
  func.func @transform_6(%arg0: i32) -> (i32, i32) {
    %c0_i32 = arith.constant 0 : i32
    %c0_i32_0 = arith.constant 0 : i32
    %c0_i32_1 = arith.constant 0 : i32
    return %c0_i32, %c0_i32_0 : i32, i32
  }
  func.func @transform_7(%arg0: i32) -> (i32, i32) {
    %c0_i32 = arith.constant 0 : i32
    %c0_i32_0 = arith.constant 0 : i32
    %c0_i32_1 = arith.constant 0 : i32
    return %c0_i32, %c0_i32_0 : i32, i32
  }
  func.func @transform_8(%arg0: i32) -> (i32, i32) {
    %c0_i32 = arith.constant 0 : i32
    %c0_i32_0 = arith.constant 0 : i32
    %c0_i32_1 = arith.constant 0 : i32
    return %c0_i32, %c0_i32_0 : i32, i32
  }
  func.func @transform_9(%arg0: i32) -> (i32, i32) {
    %c0_i32 = arith.constant 0 : i32
    %c0_i32_0 = arith.constant 0 : i32
    %c0_i32_1 = arith.constant 0 : i32
    return %c0_i32, %c0_i32_0 : i32, i32
  }
  func.func @transform_10(%arg0: i32) -> (i32, i32) {
    %c0_i32 = arith.constant 0 : i32
    %c0_i32_0 = arith.constant 0 : i32
    return %arg0, %c0_i32 : i32, i32
  }
}

</mosaic_0001>

<llo_original>
// kernel: tpu_custom_call.1
$region0: #{tpu_custom_call.1}
  #allocation0 [shape = 'u32[]', space=smem, size = 0x4, offset = 0x4, fixed_abs, tag = 'smem constant byte address 0x4 - core index']
  #allocation1 [shape = 'u32[144,128]{1,0:T(1,128)}', space=vmem, size = 0x12000, scoped, tag = 'internal scratch']
  %s0 = inlined_call_operand.vmem [shape: f32[5], index: 0, kind: input, shape index: {}]
  %s1 = inlined_call_operand.vmem [shape: f32[512,32], index: 1, kind: input, shape index: {}]
  %s2 = inlined_call_operand.vmem [shape: bf16[32,128], index: 2, kind: input, shape index: {}]
  %s3 = inlined_call_operand.vmem [shape: f32[1,128], index: 3, kind: input, shape index: {}]
  %s4 = inlined_call_operand.vmem [shape: bf16[128,128], index: 4, kind: input, shape index: {}]
  %s5 = inlined_call_operand.vmem [shape: f32[1,128], index: 5, kind: input, shape index: {}]
  %s6 = inlined_call_operand.vmem [shape: bf16[128,128], index: 6, kind: input, shape index: {}]
  %s7 = inlined_call_operand.vmem [shape: f32[1,128], index: 7, kind: input, shape index: {}]
  %s8 = inlined_call_operand.vmem [shape: bf16[128,32], index: 8, kind: input, shape index: {}]
  %s9 = inlined_call_operand.vmem [shape: f32[1,32], index: 9, kind: input, shape index: {}]
  %s10 = inlined_call_operand.vmem [shape: f32[512,32], index: 10, kind: output, shape index: {}]
  %s11 = sld [smem:[#allocation0]]
  $region84: #{tpu_custom_call.1} parent=0
    _
  %s13 = ssub.s32 1, %s11
  %s14 = scalar_select 0, %s13, %s11
  $region1: #{tpu_custom_call.1} parent=0
    #allocation2 [shape = 'u8[512]{0}', space=smem, size = 0x200, scoped, tag = 'input window, operand 0, single buffered']
    #allocation3 [shape = 's32[2]{0}', space=sflag, size = 0x8, scoped, tag = 'scoped memory for tpu_custom_call.1']
    %15 = vsyncpa [#allocation3], 0
    loop: start=0, step=1, limit=4
    $region2: #{tpu_custom_call.1} parent=1 // loop_pre_header
      _
    $region3: #{tpu_custom_call.1} parent=1 // loop_header
      %s17 = sphi 0, %s21
      %p18 = scmp.ge.s32.totalorder %s17, 4
      %s25 = sphi 0, %s25
      %s27 = sphi 0, %s25
      %s28 = sphi 0, %s27
      %s42 = sphi 0, %s28
      %s48 = sphi 0, %s50
      %s51 = sphi 0, %s48
      %s52 = sphi 0, %s51
      %s68 = sphi 0, %s52
      %s72 = sphi 0, %s72
      %s74 = sphi 0, %s72
      %s75 = sphi 0, %s74
      %s89 = sphi 0, %s75
      %s93 = sphi 0, %s93
      %s95 = sphi 0, %s93
      %s96 = sphi 0, %s95
      %s110 = sphi 0, %s96
      %s114 = sphi 0, %s114
      %s116 = sphi 0, %s114
      %s117 = sphi 0, %s116
      %s131 = sphi 0, %s117
      %s135 = sphi 0, %s135
      %s137 = sphi 0, %s135
      %s138 = sphi 0, %s137
      %s152 = sphi 0, %s138
      %s156 = sphi 0, %s156
      %s158 = sphi 0, %s156
      %s159 = sphi 0, %s158
      %s173 = sphi 0, %s159
      %s177 = sphi 0, %s177
      %s179 = sphi 0, %s177
      %s180 = sphi 0, %s179
      %s194 = sphi 0, %s180
      %s198 = sphi 0, %s198
      %s200 = sphi 0, %s198
      %s201 = sphi 0, %s200
      %s215 = sphi 0, %s201
      %s219 = sphi 0, %s219
      %s221 = sphi 0, %s219
      %s222 = sphi 0, %s221
      %s236 = sphi 0, %s222
      %s242 = sphi 0, %s244
      %s245 = sphi 0, %s242
      %s246 = sphi 0, %s245
      %s262 = sphi 0, %s246
    $region4: #{tpu_custom_call.1} parent=1 // loop_header_branch
      %20 = sbr.rel (%p18) target = $region8
    $region5: #{tpu_custom_call.1} parent=1 // loop_body
      %s22 = ssub.s32 %s17, 1
      %s23 = ssub.s32 %s17, 2
      %s24 = sadd.s32 %s17, 1
      %s26 = sadd.s32 %s25, 1
      %p29 = scmp.eq.s32.totalorder %s17, 1
      %p30 = scmp.ne.s32.totalorder %s25, %s27
      %p31 = scmp.eq.s32.totalorder %s17, 0
      %p32 = por %p30, %p31
      %p33 = scmp.ne.s32.totalorder %s25, %s27
      %p34 = scmp.eq.s32.totalorder %s22, 1
      %p35 = por %p33, %p34
      %p36 = scmp.ne.s32.totalorder %s27, %s28
      %p37 = scmp.eq.s32.totalorder %s22, 0
      %p38 = por %p36, %p37
      %p39 = scmp.ne.s32.totalorder %s27, %s28
      %p40 = scmp.eq.s32.totalorder %s23, 1
      %p41 = por %p39, %p40
      %p43 = scmp.ne.s32.totalorder %s28, %s42
      %p44 = scmp.eq.s32.totalorder %s23, 0
      %p45 = por %p43, %p44
      %s46 = ssub.s32 %s17, %s24
      %p47 = scmp.eq.s32.totalorder %s46, 0
      %s49 = sadd.s32 %s48, 1
      %s50 = scalar_select %p47, %s48, %s49
      %p53 = pneg %p47
      %p54 = scmp.eq.s32.totalorder %s17, 1
      %p55 = por %p53, %p54
      %p56 = scmp.ne.s32.totalorder %s48, %s51
      %p57 = scmp.eq.s32.totalorder %s17, 0
      %p58 = por %p56, %p57
      %p59 = scmp.ne.s32.totalorder %s48, %s51
      %p60 = scmp.eq.s32.totalorder %s22, 1
      %p61 = por %p59, %p60
      %p62 = scmp.ne.s32.totalorder %s51, %s52
      %p63 = scmp.eq.s32.totalorder %s22, 0
      %p64 = por %p62, %p63
      %p65 = scmp.ne.s32.totalorder %s51, %s52
      %p66 = scmp.eq.s32.totalorder %s23, 1
      %p67 = por %p65, %p66
      %p69 = scmp.ne.s32.totalorder %s52, %s68
      %p70 = scmp.eq.s32.totalorder %s23, 0
      %p71 = por %p69, %p70
      %s73 = sadd.s32 %s72, 1
      %p76 = scmp.eq.s32.totalorder %s17, 1
      %p77 = scmp.ne.s32.totalorder %s72, %s74
      %p78 = scmp.eq.s32.totalorder %s17, 0
      %p79 = por %p77, %p78
      %p80 = scmp.ne.s32.totalorder %s72, %s74
      %p81 = scmp.eq.s32.totalorder %s22, 1
      %p82 = por %p80, %p81
      %p83 = scmp.ne.s32.totalorder %s74, %s75
      %p84 = scmp.eq.s32.totalorder %s22, 0
      %p85 = por %p83, %p84
      %p86 = scmp.ne.s32.totalorder %s74, %s75
      %p87 = scmp.eq.s32.totalorder %s23, 1
      %p88 = por %p86, %p87
      %p90 = scmp.ne.s32.totalorder %s75, %s89
      %p91 = scmp.eq.s32.totalorder %s23, 0
      %p92 = por %p90, %p91
      %s94 = sadd.s32 %s93, 1
      %p97 = scmp.eq.s32.totalorder %s17, 1
      %p98 = scmp.ne.s32.totalorder %s93, %s95
      %p99 = scmp.eq.s32.totalorder %s17, 0
      %p100 = por %p98, %p99
      %p101 = scmp.ne.s32.totalorder %s93, %s95
      %p102 = scmp.eq.s32.totalorder %s22, 1
      %p103 = por %p101, %p102
      %p104 = scmp.ne.s32.totalorder %s95, %s96
      %p105 = scmp.eq.s32.totalorder %s22, 0
      %p106 = por %p104, %p105
      %p107 = scmp.ne.s32.totalorder %s95, %s96
      %p108 = scmp.eq.s32.totalorder %s23, 1
      %p109 = por %p107, %p108
      %p111 = scmp.ne.s32.totalorder %s96, %s110
      %p112 = scmp.eq.s32.totalorder %s23, 0
      %p113 = por %p111, %p112
      %s115 = sadd.s32 %s114, 1
      %p118 = scmp.eq.s32.totalorder %s17, 1
      %p119 = scmp.ne.s32.totalorder %s114, %s116
      %p120 = scmp.eq.s32.totalorder %s17, 0
      %p121 = por %p119, %p120
      %p122 = scmp.ne.s32.totalorder %s114, %s116
      %p123 = scmp.eq.s32.totalorder %s22, 1
      %p124 = por %p122, %p123
      %p125 = scmp.ne.s32.totalorder %s116, %s117
      %p126 = scmp.eq.s32.totalorder %s22, 0
      %p127 = por %p125, %p126
      %p128 = scmp.ne.s32.totalorder %s116, %s117
      %p129 = scmp.eq.s32.totalorder %s23, 1
      %p130 = por %p128, %p129
      %p132 = scmp.ne.s32.totalorder %s117, %s131
      %p133 = scmp.eq.s32.totalorder %s23, 0
      %p134 = por %p132, %p133
      %s136 = sadd.s32 %s135, 1
      %p139 = scmp.eq.s32.totalorder %s17, 1
      %p140 = scmp.ne.s32.totalorder %s135, %s137
      %p141 = scmp.eq.s32.totalorder %s17, 0
      %p142 = por %p140, %p141
      %p143 = scmp.ne.s32.totalorder %s135, %s137
      %p144 = scmp.eq.s32.totalorder %s22, 1
      %p145 = por %p143, %p144
      %p146 = scmp.ne.s32.totalorder %s137, %s138
      %p147 = scmp.eq.s32.totalorder %s22, 0
      %p148 = por %p146, %p147
      %p149 = scmp.ne.s32.totalorder %s137, %s138
      %p150 = scmp.eq.s32.totalorder %s23, 1
      %p151 = por %p149, %p150
      %p153 = scmp.ne.s32.totalorder %s138, %s152
      %p154 = scmp.eq.s32.totalorder %s23, 0
      %p155 = por %p153, %p154
      %s157 = sadd.s32 %s156, 1
      %p160 = scmp.eq.s32.totalorder %s17, 1
      %p161 = scmp.ne.s32.totalorder %s156, %s158
      %p162 = scmp.eq.s32.totalorder %s17, 0
      %p163 = por %p161, %p162
      %p164 = scmp.ne.s32.totalorder %s156, %s158
      %p165 = scmp.eq.s32.totalorder %s22, 1
      %p166 = por %p164, %p165
      %p167 = scmp.ne.s32.totalorder %s158, %s159
      %p168 = scmp.eq.s32.totalorder %s22, 0
      %p169 = por %p167, %p168
      %p170 = scmp.ne.s32.totalorder %s158, %s159
      %p171 = scmp.eq.s32.totalorder %s23, 1
      %p172 = por %p170, %p171
      %p174 = scmp.ne.s32.totalorder %s159, %s173
      %p175 = scmp.eq.s32.totalorder %s23, 0
      %p176 = por %p174, %p175
      %s178 = sadd.s32 %s177, 1
      %p181 = scmp.eq.s32.totalorder %s17, 1
      %p182 = scmp.ne.s32.totalorder %s177, %s179
      %p183 = scmp.eq.s32.totalorder %s17, 0
      %p184 = por %p182, %p183
      %p185 = scmp.ne.s32.totalorder %s177, %s179
      %p186 = scmp.eq.s32.totalorder %s22, 1
      %p187 = por %p185, %p186
      %p188 = scmp.ne.s32.totalorder %s179, %s180
      %p189 = scmp.eq.s32.totalorder %s22, 0
      %p190 = por %p188, %p189
      %p191 = scmp.ne.s32.totalorder %s179, %s180
      %p192 = scmp.eq.s32.totalorder %s23, 1
      %p193 = por %p191, %p192
      %p195 = scmp.ne.s32.totalorder %s180, %s194
      %p196 = scmp.eq.s32.totalorder %s23, 0
      %p197 = por %p195, %p196
      %s199 = sadd.s32 %s198, 1
      %p202 = scmp.eq.s32.totalorder %s17, 1
      %p203 = scmp.ne.s32.totalorder %s198, %s200
      %p204 = scmp.eq.s32.totalorder %s17, 0
      %p205 = por %p203, %p204
      %p206 = scmp.ne.s32.totalorder %s198, %s200
      %p207 = scmp.eq.s32.totalorder %s22, 1
      %p208 = por %p206, %p207
      %p209 = scmp.ne.s32.totalorder %s200, %s201
      %p210 = scmp.eq.s32.totalorder %s22, 0
      %p211 = por %p209, %p210
      %p212 = scmp.ne.s32.totalorder %s200, %s201
      %p213 = scmp.eq.s32.totalorder %s23, 1
      %p214 = por %p212, %p213
      %p216 = scmp.ne.s32.totalorder %s201, %s215
      %p217 = scmp.eq.s32.totalorder %s23, 0
      %p218 = por %p216, %p217
      %s220 = sadd.s32 %s219, 1
      %p223 = scmp.eq.s32.totalorder %s17, 1
      %p224 = scmp.ne.s32.totalorder %s219, %s221
      %p225 = scmp.eq.s32.totalorder %s17, 0
      %p226 = por %p224, %p225
      %p227 = scmp.ne.s32.totalorder %s219, %s221
      %p228 = scmp.eq.s32.totalorder %s22, 1
      %p229 = por %p227, %p228
      %p230 = scmp.ne.s32.totalorder %s221, %s222
      %p231 = scmp.eq.s32.totalorder %s22, 0
      %p232 = por %p230, %p231
      %p233 = scmp.ne.s32.totalorder %s221, %s222
      %p234 = scmp.eq.s32.totalorder %s23, 1
      %p235 = por %p233, %p234
      %p237 = scmp.ne.s32.totalorder %s222, %s236
      %p238 = scmp.eq.s32.totalorder %s23, 0
      %p239 = por %p237, %p238
      %s240 = ssub.s32 %s17, %s24
      %p241 = scmp.eq.s32.totalorder %s240, 0
      %s243 = sadd.s32 %s242, 1
      %s244 = scalar_select %p241, %s242, %s243
      %p247 = pneg %p241
      %p248 = scmp.eq.s32.totalorder %s17, 1
      %p249 = por %p247, %p248
      %p250 = scmp.ne.s32.totalorder %s242, %s245
      %p251 = scmp.eq.s32.totalorder %s17, 0
      %p252 = por %p250, %p251
      %p253 = scmp.ne.s32.totalorder %s242, %s245
      %p254 = scmp.eq.s32.totalorder %s22, 1
      %p255 = por %p253, %p254
      %p256 = scmp.ne.s32.totalorder %s245, %s246
      %p257 = scmp.eq.s32.totalorder %s22, 0
      %p258 = por %p256, %p257
      %p259 = scmp.ne.s32.totalorder %s245, %s246
      %p260 = scmp.eq.s32.totalorder %s23, 1
      %p261 = por %p259, %p260
      %p263 = scmp.ne.s32.totalorder %s246, %s262
      %p264 = scmp.eq.s32.totalorder %s23, 0
      %p265 = por %p263, %p264
      %p266 = scmp.le.s32.totalorder 1, %s17
      %p267 = scmp.lt.s32.totalorder %s17, 3
      %p268 = pnand %p266, %p267
      %p269 = pneg %p268
      // Predicated region
      $region9: #{tpu_custom_call.1} parent=5 // pred_check
        _
      $region10: #{tpu_custom_call.1} parent=5 // pred_check_branch
        %271 = sbr.rel (%p268) target = $region12
      $region11: #{tpu_custom_call.1} parent=5 // pred_region
        %s272 = ssub.s32 %s17, 1
        // Predicated region
        $region13: #{tpu_custom_call.1} parent=11 // pred_check
          %p273 = pneg %p38
        $region14: #{tpu_custom_call.1} parent=11 // pred_check_branch
          %275 = sbr.rel (%p273) target = $region16
        $region15: #{tpu_custom_call.1} parent=11 // pred_region
          %s277 = ssub.s32 16, 16
          %278 = vsyncadd [#allocation3], %s277
          %s280 = sshll.u32 %s0, 4
          %s281 = int_to_ptr.vmem [resolvable:$true] %s280
          %283 = dma.vmem_to_smem %s281, 16, [#allocation2], [#allocation3]
        $region16: #{tpu_custom_call.1} parent=11 // pred_fallthru
          _
        // Predicated region
        $region17: #{tpu_custom_call.1} parent=11 // pred_check
          %p284 = pneg %p85
        $region18: #{tpu_custom_call.1} parent=11 // pred_check_branch
          %286 = sbr.rel (%p284) target = $region20
        $region19: #{tpu_custom_call.1} parent=11 // pred_region
          _
        $region20: #{tpu_custom_call.1} parent=11 // pred_fallthru
          _
        // Predicated region
        $region21: #{tpu_custom_call.1} parent=11 // pred_check
          %p287 = pneg %p106
        $region22: #{tpu_custom_call.1} parent=11 // pred_check_branch
          %289 = sbr.rel (%p287) target = $region24
        $region23: #{tpu_custom_call.1} parent=11 // pred_region
          _
        $region24: #{tpu_custom_call.1} parent=11 // pred_fallthru
          _
        // Predicated region
        $region25: #{tpu_custom_call.1} parent=11 // pred_check
          %p290 = pneg %p127
        $region26: #{tpu_custom_call.1} parent=11 // pred_check_branch
          %292 = sbr.rel (%p290) target = $region28
        $region27: #{tpu_custom_call.1} parent=11 // pred_region
          _
        $region28: #{tpu_custom_call.1} parent=11 // pred_fallthru
          _
        // Predicated region
        $region29: #{tpu_custom_call.1} parent=11 // pred_check
          %p293 = pneg %p148
        $region30: #{tpu_custom_call.1} parent=11 // pred_check_branch
          %295 = sbr.rel (%p293) target = $region32
        $region31: #{tpu_custom_call.1} parent=11 // pred_region
          _
        $region32: #{tpu_custom_call.1} parent=11 // pred_fallthru
          _
        // Predicated region
        $region33: #{tpu_custom_call.1} parent=11 // pred_check
          %p296 = pneg %p169
        $region34: #{tpu_custom_call.1} parent=11 // pred_check_branch
          %298 = sbr.rel (%p296) target = $region36
        $region35: #{tpu_custom_call.1} parent=11 // pred_region
          _
        $region36: #{tpu_custom_call.1} parent=11 // pred_fallthru
          _
        // Predicated region
        $region37: #{tpu_custom_call.1} parent=11 // pred_check
          %p299 = pneg %p190
        $region38: #{tpu_custom_call.1} parent=11 // pred_check_branch
          %301 = sbr.rel (%p299) target = $region40
        $region39: #{tpu_custom_call.1} parent=11 // pred_region
          _
        $region40: #{tpu_custom_call.1} parent=11 // pred_fallthru
          _
        // Predicated region
        $region41: #{tpu_custom_call.1} parent=11 // pred_check
          %p302 = pneg %p211
        $region42: #{tpu_custom_call.1} parent=11 // pred_check_branch
          %304 = sbr.rel (%p302) target = $region44
        $region43: #{tpu_custom_call.1} parent=11 // pred_region
          _
        $region44: #{tpu_custom_call.1} parent=11 // pred_fallthru
          _
        // Predicated region
        $region45: #{tpu_custom_call.1} parent=11 // pred_check
          %p305 = pneg %p232
        $region46: #{tpu_custom_call.1} parent=11 // pred_check_branch
          %307 = sbr.rel (%p305) target = $region48
        $region47: #{tpu_custom_call.1} parent=11 // pred_region
          _
        $region48: #{tpu_custom_call.1} parent=11 // pred_fallthru
          _
      $region12: #{tpu_custom_call.1} parent=5 // pred_fallthru
        _
      %p308 = scmp.lt.s32.totalorder %s17, 2
      // Predicated region
      $region49: #{tpu_custom_call.1} parent=5 // pred_check
        %p309 = pneg %p308
      $region50: #{tpu_custom_call.1} parent=5 // pred_check_branch
        %311 = sbr.rel (%p309) target = $region52
      $region51: #{tpu_custom_call.1} parent=5 // pred_region
        // Predicated region
        $region53: #{tpu_custom_call.1} parent=51 // pred_check
          %p312 = pneg %p58
        $region54: #{tpu_custom_call.1} parent=51 // pred_check_branch
          %314 = sbr.rel (%p312) target = $region56
        $region55: #{tpu_custom_call.1} parent=51 // pred_region
          %s315 = smul.u32 32, %s17
          %p316 = scmp.lt.s32.totalorder %s315, 63
          %s317 = scalar_select %p316, %s315, 63
          %s318 = smul.addr %s317, 8
          %s319 = scalar_lea.vmem %s1, %s318
          %s320 = smul.u32 32, %s17
        $region56: #{tpu_custom_call.1} parent=51 // pred_fallthru
          _
      $region52: #{tpu_custom_call.1} parent=5 // pred_fallthru
        _
      %p321 = scmp.le.s32.totalorder 1, %s17
      %p322 = scmp.lt.s32.totalorder %s17, 3
      %p323 = pnand %p321, %p322
      %p324 = pneg %p323
      // Predicated region
      $region57: #{tpu_custom_call.1} parent=5 // pred_check
        _
      $region58: #{tpu_custom_call.1} parent=5 // pred_check_branch
        %326 = sbr.rel (%p323) target = $region60
      $region59: #{tpu_custom_call.1} parent=5 // pred_region
        %s327 = ssub.s32 %s17, 1
        // Predicated region
        $region61: #{tpu_custom_call.1} parent=59 // pred_check
          %p328 = pneg %p38
        $region62: #{tpu_custom_call.1} parent=59 // pred_check_branch
          %330 = sbr.rel (%p328) target = $region64
        $region63: #{tpu_custom_call.1} parent=59 // pred_region
          %331 = dma.done [#allocation3], 16
        $region64: #{tpu_custom_call.1} parent=59 // pred_fallthru
          _
        %332 = sfence
        %p333 = pneg %p38
        %p334 = pneg %p35
        %s335 = smul.u32 32, %s22
        %p336 = scmp.lt.s32.totalorder %s335, 63
        %s337 = scalar_select %p336, %s335, 63
        %s338 = smul.addr %s337, 8
        %s339 = scalar_lea.vmem %s1, %s338
        %p340 = pneg %p64
        %p341 = pneg %p61
        %p342 = pneg %p85
        %p343 = pneg %p82
        %p344 = pneg %p106
        %p345 = pneg %p103
        %p346 = pneg %p127
        %p347 = pneg %p124
        %p348 = pneg %p148
        %p349 = pneg %p145
        %p350 = pneg %p169
        %p351 = pneg %p166
        %p352 = pneg %p190
        %p353 = pneg %p187
        %p354 = pneg %p211
        %p355 = pneg %p208
        %p356 = pneg %p232
        %p357 = pneg %p229
        %p358 = pneg %p258
        %p359 = pneg %p255
        %s360 = smul.u32 32, %s22
        %p361 = scmp.lt.s32.totalorder %s360, 63
        %s362 = scalar_select %p361, %s360, 63
        %s363 = smul.addr %s362, 8
        %s364 = scalar_lea.vmem %s10, %s363
        %s365 = smul.u32 32, %s22
        %p366 = scmp.lt.s32.totalorder %s365, 63
        %s367 = scalar_select %p366, %s365, 63
        %s368 = smul.addr %s367, 8
        %s369 = scalar_lea.vmem %s1, %s368
        %s370 = smul.u32 32, %s22
        %s371 = smul.u32 32, %s22
        %p372 = scmp.lt.s32.totalorder %s371, 63
        %s373 = scalar_select %p372, %s371, 63
        %s374 = smul.addr %s373, 8
        %s375 = scalar_lea.vmem %s10, %s374
        %s376 = smul.u32 32, %s22
        %v378 = vld [vmem:[%s2] sm:$0xf]
        %v379 = vld [vmem:[%s2 + $0x4] sm:$0xf]
        %v380 = vld [vmem:[%s2 + $0x8] sm:$0xf]
        %v381 = vld [vmem:[%s2 + $0xc] sm:$0xf]
        %v382 = vld [vmem:[%s3] sm:$0x1]
        %v383 = vld [vmem:[%s4] sm:$0xf]
        %v384 = vld [vmem:[%s4 + $0x4] sm:$0xf]
        %v385 = vld [vmem:[%s4 + $0x8] sm:$0xf]
        %v386 = vld [vmem:[%s4 + $0xc] sm:$0xf]
        %v387 = vld [vmem:[%s4 + $0x10] sm:$0xf]
        %v388 = vld [vmem:[%s4 + $0x14] sm:$0xf]
        %v389 = vld [vmem:[%s4 + $0x18] sm:$0xf]
        %v390 = vld [vmem:[%s4 + $0x1c] sm:$0xf]
        %v391 = vld [vmem:[%s4 + $0x20] sm:$0xf]
        %v392 = vld [vmem:[%s4 + $0x24] sm:$0xf]
        %v393 = vld [vmem:[%s4 + $0x28] sm:$0xf]
        %v394 = vld [vmem:[%s4 + $0x2c] sm:$0xf]
        %v395 = vld [vmem:[%s4 + $0x30] sm:$0xf]
        %v396 = vld [vmem:[%s4 + $0x34] sm:$0xf]
        %v397 = vld [vmem:[%s4 + $0x38] sm:$0xf]
        %v398 = vld [vmem:[%s4 + $0x3c] sm:$0xf]
        %v399 = vld [vmem:[%s5] sm:$0x1]
        %v400 = vld [vmem:[%s6] sm:$0xf]
        %v401 = vld [vmem:[%s6 + $0x4] sm:$0xf]
        %v402 = vld [vmem:[%s6 + $0x8] sm:$0xf]
        %v403 = vld [vmem:[%s6 + $0xc] sm:$0xf]
        %v404 = vld [vmem:[%s6 + $0x10] sm:$0xf]
        %v405 = vld [vmem:[%s6 + $0x14] sm:$0xf]
        %v406 = vld [vmem:[%s6 + $0x18] sm:$0xf]
        %v407 = vld [vmem:[%s6 + $0x1c] sm:$0xf]
        %v408 = vld [vmem:[%s6 + $0x20] sm:$0xf]
        %v409 = vld [vmem:[%s6 + $0x24] sm:$0xf]
        %v410 = vld [vmem:[%s6 + $0x28] sm:$0xf]
        %v411 = vld [vmem:[%s6 + $0x2c] sm:$0xf]
        %v412 = vld [vmem:[%s6 + $0x30] sm:$0xf]
        %v413 = vld [vmem:[%s6 + $0x34] sm:$0xf]
        %v414 = vld [vmem:[%s6 + $0x38] sm:$0xf]
        %v415 = vld [vmem:[%s6 + $0x3c] sm:$0xf]
        %v416 = vld [vmem:[%s7] sm:$0x1]
        %v417 = vld [vmem:[%s8] sm:$0xf]
        %v418 = vld [vmem:[%s8 + $0x4] sm:$0xf]
        %v419 = vld [vmem:[%s8 + $0x8] sm:$0xf]
        %v420 = vld [vmem:[%s8 + $0xc] sm:$0xf]
        %v421 = vld [vmem:[%s8 + $0x10] sm:$0xf]
        %v422 = vld [vmem:[%s8 + $0x14] sm:$0xf]
        %v423 = vld [vmem:[%s8 + $0x18] sm:$0xf]
        %v424 = vld [vmem:[%s8 + $0x1c] sm:$0xf]
        %v425 = vld [vmem:[%s8 + $0x20] sm:$0xf]
        %v426 = vld [vmem:[%s8 + $0x24] sm:$0xf]
        %v427 = vld [vmem:[%s8 + $0x28] sm:$0xf]
        %v428 = vld [vmem:[%s8 + $0x2c] sm:$0xf]
        %v429 = vld [vmem:[%s8 + $0x30] sm:$0xf]
        %v430 = vld [vmem:[%s8 + $0x34] sm:$0xf]
        %v431 = vld [vmem:[%s8 + $0x38] sm:$0xf]
        %v432 = vld [vmem:[%s8 + $0x3c] sm:$0xf]
        %v433 = vld [vmem:[%s9] sm:$0x1]
        %v434 = vld [vmem:[%s369] sm:$0xff]
        %v435 = vld [vmem:[%s369 + $0x8] sm:$0xff]
        %v436 = vld [vmem:[%s369 + $0x10] sm:$0xff]
        %v437 = vld [vmem:[%s369 + $0x18] sm:$0xff]
        %v438 = vld [vmem:[%s369 + $0x20] sm:$0xff]
        %v439 = vld [vmem:[%s369 + $0x28] sm:$0xff]
        %v440 = vld [vmem:[%s369 + $0x30] sm:$0xff]
        %v441 = vld [vmem:[%s369 + $0x38] sm:$0xff]
        %v442 = vld [vmem:[%s369 + $0x40] sm:$0xff]
        %v443 = vld [vmem:[%s369 + $0x48] sm:$0xff]
        %v444 = vld [vmem:[%s369 + $0x50] sm:$0xff]
        %v445 = vld [vmem:[%s369 + $0x58] sm:$0xff]
        %v446 = vld [vmem:[%s369 + $0x60] sm:$0xff]
        %v447 = vld [vmem:[%s369 + $0x68] sm:$0xff]
        %v448 = vld [vmem:[%s369 + $0x70] sm:$0xff]
        %v449 = vld [vmem:[%s369 + $0x78] sm:$0xff]
        %v450 = vld [vmem:[%s369 + $0x80] sm:$0xff]
        %v451 = vld [vmem:[%s369 + $0x88] sm:$0xff]
        %v452 = vld [vmem:[%s369 + $0x90] sm:$0xff]
        %v453 = vld [vmem:[%s369 + $0x98] sm:$0xff]
        %v454 = vld [vmem:[%s369 + $0xa0] sm:$0xff]
        %v455 = vld [vmem:[%s369 + $0xa8] sm:$0xff]
        %v456 = vld [vmem:[%s369 + $0xb0] sm:$0xff]
        %v457 = vld [vmem:[%s369 + $0xb8] sm:$0xff]
        %v458 = vld [vmem:[%s369 + $0xc0] sm:$0xff]
        %v459 = vld [vmem:[%s369 + $0xc8] sm:$0xff]
        %v460 = vld [vmem:[%s369 + $0xd0] sm:$0xff]
        %v461 = vld [vmem:[%s369 + $0xd8] sm:$0xff]
        %v462 = vld [vmem:[%s369 + $0xe0] sm:$0xff]
        %v463 = vld [vmem:[%s369 + $0xe8] sm:$0xff]
        %v464 = vld [vmem:[%s369 + $0xf0] sm:$0xff]
        %v465 = vld [vmem:[%s369 + $0xf8] sm:$0xff]
        loop: start=0, step=1, limit=4
        $region65: #{tpu_custom_call.1} parent=59 // loop_pre_header
          _
        $region66: #{tpu_custom_call.1} parent=59 // loop_header
          %s467 = sphi 0, %s471
          %p468 = scmp.ge.s32.totalorder %s467, 4
          %v472 = vphi %v434, %v4872
          %v473 = vphi %v435, %v4873
          %v474 = vphi %v436, %v4874
          %v475 = vphi %v437, %v4875
          %v476 = vphi %v438, %v4876
          %v477 = vphi %v439, %v4877
          %v478 = vphi %v440, %v4878
          %v479 = vphi %v441, %v4879
          %v480 = vphi %v442, %v4880
          %v481 = vphi %v443, %v4881
          %v482 = vphi %v444, %v4882
          %v483 = vphi %v445, %v4883
          %v484 = vphi %v446, %v4884
          %v485 = vphi %v447, %v4885
          %v486 = vphi %v448, %v4886
          %v487 = vphi %v449, %v4887
          %v488 = vphi %v450, %v4888
          %v489 = vphi %v451, %v4889
          %v490 = vphi %v452, %v4890
          %v491 = vphi %v453, %v4891
          %v492 = vphi %v454, %v4892
          %v493 = vphi %v455, %v4893
          %v494 = vphi %v456, %v4894
          %v495 = vphi %v457, %v4895
          %v496 = vphi %v458, %v4896
          %v497 = vphi %v459, %v4897
          %v498 = vphi %v460, %v4898
          %v499 = vphi %v461, %v4899
          %v500 = vphi %v462, %v4900
          %v501 = vphi %v463, %v4901
          %v502 = vphi %v464, %v4902
          %v503 = vphi %v465, %v4903
        $region67: #{tpu_custom_call.1} parent=59 // loop_header_branch
          %470 = sbr.rel (%p468) target = $region71
        $region68: #{tpu_custom_call.1} parent=59 // loop_body
          %s504 = sadd.s32 %s467, 1
          %s505 = sld [smem:[#allocation2 + %s504]]
          %s506 = sld [smem:[#allocation2 + %s467]]
          %s507 = ssub.f32 %s505, %s506
          %s508 = smul.f32 %s507, 0.5
          %v509 = vpack.c.bf16 %v473, %v472
          %v510 = vpack.c.bf16 %v475, %v474
          %v511 = vpack.c.bf16 %v477, %v476
          %v512 = vpack.c.bf16 %v479, %v478
          %v513 = vpack.c.bf16 %v481, %v480
          %v514 = vpack.c.bf16 %v483, %v482
          %v515 = vpack.c.bf16 %v485, %v484
          %v516 = vpack.c.bf16 %v487, %v486
          %v517 = vpack.c.bf16 %v489, %v488
          %v518 = vpack.c.bf16 %v491, %v490
          %v519 = vpack.c.bf16 %v493, %v492
          %v520 = vpack.c.bf16 %v495, %v494
          %v521 = vpack.c.bf16 %v497, %v496
          %v522 = vpack.c.bf16 %v499, %v498
          %v523 = vpack.c.bf16 %v501, %v500
          %v524 = vpack.c.bf16 %v503, %v502
          %v526 = vlaneseq
          %v527 = vshrl.u32 %v526, 7
          %v528 = vsub.s32 0, %v527
          %v529 = vrot.slane %v382, %v528
          %v535 = vunpack.c.l.b16 %v378
          %v536 = vunpack.c.l.b16 %v379
          %v537 = vunpack.c.l.b16 %v380
          %v538 = vunpack.c.l.b16 %v381
          %v539 = vpack.c.b16 %v536, %v535
          %v540 = vpack.c.b16 %v538, %v537
          %vm543 = vcmask 261120
          %v545 = vsel %vm543, %v509, 0
          %v548 = vsel %vm543, %v510, 0
          %v551 = vsel %vm543, %v511, 0
          %v554 = vsel %vm543, %v512, 0
          %v557 = vsel %vm543, %v513, 0
          %v560 = vsel %vm543, %v514, 0
          %v563 = vsel %vm543, %v515, 0
          %v566 = vsel %vm543, %v516, 0
          %v569 = vsel %vm543, %v517, 0
          %v572 = vsel %vm543, %v518, 0
          %v575 = vsel %vm543, %v519, 0
          %v578 = vsel %vm543, %v520, 0
          %v581 = vsel %vm543, %v521, 0
          %v584 = vsel %vm543, %v522, 0
          %v587 = vsel %vm543, %v523, 0
          %v590 = vsel %vm543, %v524, 0
          %592 = vmatprep.subr.bf16.mxu0 0
          %593 = vmatpush1.bf16.msra.mxu0 %v539
          %594 = vmatprep.subr.bf16.mxu0 0
          %595 = vmatpush1.bf16.msra.mxu0 %v540
          %596 = vmatprep.subr.bf16.mxu0 0
          %597 = vmatpush1.bf16.msra.mxu0 0
          %598 = vmatprep.subr.bf16.mxu0 0
          %599 = vmatpush1.bf16.msra.mxu0 0
          %600 = vmatprep.subr.bf16.mxu0 0
          %601 = vmatpush1.bf16.msra.mxu0 0
          %602 = vmatprep.subr.bf16.mxu0 0
          %603 = vmatpush1.bf16.msra.mxu0 0
          %604 = vmatprep.subr.bf16.mxu0 0
          %605 = vmatpush1.bf16.msra.mxu0 0
          %606 = vmatprep.subr.bf16.mxu0 0
          %607 = vmatpush1.bf16.msra.mxu0 0
          %608 = vmatprep.subr.bf16.mxu0 0
          %609 = vmatpush1.bf16.msra.mxu0 0
          %610 = vmatprep.subr.bf16.mxu0 0
          %611 = vmatpush1.bf16.msra.mxu0 0
          %612 = vmatprep.subr.bf16.mxu0 0
          %613 = vmatpush1.bf16.msra.mxu0 0
          %614 = vmatprep.subr.bf16.mxu0 0
          %615 = vmatpush1.bf16.msra.mxu0 0
          %616 = vmatprep.subr.bf16.mxu0 0
          %617 = vmatpush1.bf16.msra.mxu0 0
          %618 = vmatprep.subr.bf16.mxu0 0
          %619 = vmatpush1.bf16.msra.mxu0 0
          %620 = vmatprep.subr.bf16.mxu0 0
          %621 = vmatpush1.bf16.msra.mxu0 0
          %622 = vmatprep.subr.bf16.mxu0 0
          %623 = vmatpush1.bf16.msra.mxu0 0
          %624 = vmatprep.mubr.bf16.mxu0 0
          %625 = vmatmul.mubr.bf16.gmra.mrb[0].mxu0 %v545
          %v626 = vpop.f32.mrb[0].mxu0
          %v627 = vadd.f32 %v529, %v626
          %v628 = vpop.f32.mrb[0].mxu0
          %v629 = vpop.f32.mrb[0].mxu0
          %v630 = vadd.f32 %v529, %v629
          %v631 = vpop.f32.mrb[0].mxu0
          %632 = vmatprep.mubr.bf16.mxu0 0
          %633 = vmatmul.mubr.bf16.gmra.mrb[0].mxu0 %v548
          %v634 = vpop.f32.mrb[0].mxu0
          %v635 = vadd.f32 %v529, %v634
          %v636 = vpop.f32.mrb[0].mxu0
          %v637 = vpop.f32.mrb[0].mxu0
          %v638 = vadd.f32 %v529, %v637
          %v639 = vpop.f32.mrb[0].mxu0
          %640 = vmatprep.mubr.bf16.mxu0 0
          %641 = vmatmul.mubr.bf16.gmra.mrb[0].mxu0 %v551
          %v642 = vpop.f32.mrb[0].mxu0
          %v643 = vadd.f32 %v529, %v642
          %v644 = vpop.f32.mrb[0].mxu0
          %v645 = vpop.f32.mrb[0].mxu0
          %v646 = vadd.f32 %v529, %v645
          %v647 = vpop.f32.mrb[0].mxu0
          %648 = vmatprep.mubr.bf16.mxu0 0
          %649 = vmatmul.mubr.bf16.gmra.mrb[0].mxu0 %v554
          %v650 = vpop.f32.mrb[0].mxu0
          %v651 = vadd.f32 %v529, %v650
          %v652 = vpop.f32.mrb[0].mxu0
          %v653 = vpop.f32.mrb[0].mxu0
          %v654 = vadd.f32 %v529, %v653
          %v655 = vpop.f32.mrb[0].mxu0
          %656 = vmatprep.mubr.bf16.mxu0 0
          %657 = vmatmul.mubr.bf16.gmra.mrb[0].mxu0 %v557
          %v658 = vpop.f32.mrb[0].mxu0
          %v659 = vadd.f32 %v529, %v658
          %v660 = vpop.f32.mrb[0].mxu0
          %v661 = vpop.f32.mrb[0].mxu0
          %v662 = vadd.f32 %v529, %v661
          %v663 = vpop.f32.mrb[0].mxu0
          %664 = vmatprep.mubr.bf16.mxu0 0
          %665 = vmatmul.mubr.bf16.gmra.mrb[0].mxu0 %v560
          %v666 = vpop.f32.mrb[0].mxu0
          %v667 = vadd.f32 %v529, %v666
          %v668 = vpop.f32.mrb[0].mxu0
          %v669 = vpop.f32.mrb[0].mxu0
          %v670 = vadd.f32 %v529, %v669
          %v671 = vpop.f32.mrb[0].mxu0
          %672 = vmatprep.mubr.bf16.mxu0 0
          %673 = vmatmul.mubr.bf16.gmra.mrb[0].mxu0 %v563
          %v674 = vpop.f32.mrb[0].mxu0
          %v675 = vadd.f32 %v529, %v674
          %v676 = vpop.f32.mrb[0].mxu0
          %v677 = vpop.f32.mrb[0].mxu0
          %v678 = vadd.f32 %v529, %v677
          %v679 = vpop.f32.mrb[0].mxu0
          %680 = vmatprep.mubr.bf16.mxu0 0
          %681 = vmatmul.mubr.bf16.gmra.mrb[0].mxu0 %v566
          %v682 = vpop.f32.mrb[0].mxu0
          %v683 = vadd.f32 %v529, %v682
          %v684 = vpop.f32.mrb[0].mxu0
          %v685 = vpop.f32.mrb[0].mxu0
          %v686 = vadd.f32 %v529, %v685
          %v687 = vpop.f32.mrb[0].mxu0
          %688 = vmatprep.mubr.bf16.mxu0 0
          %689 = vmatmul.mubr.bf16.gmra.mrb[0].mxu0 %v569
          %v690 = vpop.f32.mrb[0].mxu0
          %v691 = vadd.f32 %v529, %v690
          %v692 = vpop.f32.mrb[0].mxu0
          %v693 = vpop.f32.mrb[0].mxu0
          %v694 = vadd.f32 %v529, %v693
          %v695 = vpop.f32.mrb[0].mxu0
          %696 = vmatprep.mubr.bf16.mxu0 0
          %697 = vmatmul.mubr.bf16.gmra.mrb[0].mxu0 %v572
          %v698 = vpop.f32.mrb[0].mxu0
          %v699 = vadd.f32 %v529, %v698
          %v700 = vpop.f32.mrb[0].mxu0
          %v701 = vpop.f32.mrb[0].mxu0
          %v702 = vadd.f32 %v529, %v701
          %v703 = vpop.f32.mrb[0].mxu0
          %704 = vmatprep.mubr.bf16.mxu0 0
          %705 = vmatmul.mubr.bf16.gmra.mrb[0].mxu0 %v575
          %v706 = vpop.f32.mrb[0].mxu0
          %v707 = vadd.f32 %v529, %v706
          %v708 = vpop.f32.mrb[0].mxu0
          %v709 = vpop.f32.mrb[0].mxu0
          %v710 = vadd.f32 %v529, %v709
          %v711 = vpop.f32.mrb[0].mxu0
          %712 = vmatprep.mubr.bf16.mxu0 0
          %713 = vmatmul.mubr.bf16.gmra.mrb[0].mxu0 %v578
          %v714 = vpop.f32.mrb[0].mxu0
          %v715 = vadd.f32 %v529, %v714
          %v716 = vpop.f32.mrb[0].mxu0
          %v717 = vpop.f32.mrb[0].mxu0
          %v718 = vadd.f32 %v529, %v717
          %v719 = vpop.f32.mrb[0].mxu0
          %720 = vmatprep.mubr.bf16.mxu0 0
          %721 = vmatmul.mubr.bf16.gmra.mrb[0].mxu0 %v581
          %v722 = vpop.f32.mrb[0].mxu0
          %v723 = vadd.f32 %v529, %v722
          %v724 = vpop.f32.mrb[0].mxu0
          %v725 = vpop.f32.mrb[0].mxu0
          %v726 = vadd.f32 %v529, %v725
          %v727 = vpop.f32.mrb[0].mxu0
          %728 = vmatprep.mubr.bf16.mxu0 0
          %729 = vmatmul.mubr.bf16.gmra.mrb[0].mxu0 %v584
          %v730 = vpop.f32.mrb[0].mxu0
          %v731 = vadd.f32 %v529, %v730
          %v732 = vpop.f32.mrb[0].mxu0
          %v733 = vpop.f32.mrb[0].mxu0
          %v734 = vadd.f32 %v529, %v733
          %v735 = vpop.f32.mrb[0].mxu0
          %736 = vmatprep.mubr.bf16.mxu0 0
          %737 = vmatmul.mubr.bf16.gmra.mrb[0].mxu0 %v587
          %v738 = vpop.f32.mrb[0].mxu0
          %v739 = vadd.f32 %v529, %v738
          %v740 = vpop.f32.mrb[0].mxu0
          %v741 = vpop.f32.mrb[0].mxu0
          %v742 = vadd.f32 %v529, %v741
          %v743 = vpop.f32.mrb[0].mxu0
          %744 = vmatprep.mubr.bf16.mxu0 0
          %745 = vmatmul.mubr.bf16.gmra.mrb[0].mxu0 %v590
          %v746 = vpop.f32.mrb[0].mxu0
          %v747 = vadd.f32 %v529, %v746
          %v748 = vpop.f32.mrb[0].mxu0
          %v749 = vpop.f32.mrb[0].mxu0
          %v750 = vadd.f32 %v529, %v749
          %v751 = vpop.f32.mrb[0].mxu0
          %752 = vdwg.mxu0
          %v753 = vmax.f32 %v627, 0.0
          %v754 = vmax.f32 %v630, 0.0
          %v755 = vmax.f32 %v635, 0.0
          %v756 = vmax.f32 %v638, 0.0
          %v757 = vmax.f32 %v643, 0.0
          %v758 = vmax.f32 %v646, 0.0
          %v759 = vmax.f32 %v651, 0.0
          %v760 = vmax.f32 %v654, 0.0
          %v761 = vmax.f32 %v659, 0.0
          %v762 = vmax.f32 %v662, 0.0
          %v763 = vmax.f32 %v667, 0.0
          %v764 = vmax.f32 %v670, 0.0
          %v765 = vmax.f32 %v675, 0.0
          %v766 = vmax.f32 %v678, 0.0
          %v767 = vmax.f32 %v683, 0.0
          %v768 = vmax.f32 %v686, 0.0
          %v769 = vmax.f32 %v691, 0.0
          %v770 = vmax.f32 %v694, 0.0
          %v771 = vmax.f32 %v699, 0.0
          %v772 = vmax.f32 %v702, 0.0
          %v773 = vmax.f32 %v707, 0.0
          %v774 = vmax.f32 %v710, 0.0
          %v775 = vmax.f32 %v715, 0.0
          %v776 = vmax.f32 %v718, 0.0
          %v777 = vmax.f32 %v723, 0.0
          %v778 = vmax.f32 %v726, 0.0
          %v779 = vmax.f32 %v731, 0.0
          %v780 = vmax.f32 %v734, 0.0
          %v781 = vmax.f32 %v739, 0.0
          %v782 = vmax.f32 %v742, 0.0
          %v783 = vmax.f32 %v747, 0.0
          %v784 = vmax.f32 %v750, 0.0
          %v785 = vpack.c.bf16 %v754, %v753
          %v786 = vpack.c.bf16 %v756, %v755
          %v787 = vpack.c.bf16 %v758, %v757
          %v788 = vpack.c.bf16 %v760, %v759
          %v789 = vpack.c.bf16 %v762, %v761
          %v790 = vpack.c.bf16 %v764, %v763
          %v791 = vpack.c.bf16 %v766, %v765
          %v792 = vpack.c.bf16 %v768, %v767
          %v793 = vpack.c.bf16 %v770, %v769
          %v794 = vpack.c.bf16 %v772, %v771
          %v795 = vpack.c.bf16 %v774, %v773
          %v796 = vpack.c.bf16 %v776, %v775
          %v797 = vpack.c.bf16 %v778, %v777
          %v798 = vpack.c.bf16 %v780, %v779
          %v799 = vpack.c.bf16 %v782, %v781
          %v800 = vpack.c.bf16 %v784, %v783
          %v802 = vlaneseq
          %v803 = vshrl.u32 %v802, 7
          %v804 = vsub.s32 0, %v803
          %v805 = vrot.slane %v399, %v804
          %v823 = vunpack.c.l.b16 %v383
          %v824 = vunpack.c.l.b16 %v384
          %v825 = vunpack.c.l.b16 %v385
          %v826 = vunpack.c.l.b16 %v386
          %v827 = vunpack.c.l.b16 %v387
          %v828 = vunpack.c.l.b16 %v388
          %v829 = vunpack.c.l.b16 %v389
          %v830 = vunpack.c.l.b16 %v390
          %v831 = vunpack.c.l.b16 %v391
          %v832 = vunpack.c.l.b16 %v392
          %v833 = vunpack.c.l.b16 %v393
          %v834 = vunpack.c.l.b16 %v394
          %v835 = vunpack.c.l.b16 %v395
          %v836 = vunpack.c.l.b16 %v396
          %v837 = vunpack.c.l.b16 %v397
          %v838 = vunpack.c.l.b16 %v398
          %v839 = vpack.c.b16 %v824, %v823
          %v840 = vpack.c.b16 %v826, %v825
          %v841 = vpack.c.b16 %v828, %v827
          %v842 = vpack.c.b16 %v830, %v829
          %v843 = vpack.c.b16 %v832, %v831
          %v844 = vpack.c.b16 %v834, %v833
          %v845 = vpack.c.b16 %v836, %v835
          %v846 = vpack.c.b16 %v838, %v837
          %855 = vmatprep.subr.bf16.mxu0 0
          %856 = vmatpush1.bf16.msra.mxu0 %v839
          %857 = vmatprep.subr.bf16.mxu0 0
          %858 = vmatpush1.bf16.msra.mxu0 %v840
          %859 = vmatprep.subr.bf16.mxu0 0
          %860 = vmatpush1.bf16.msra.mxu0 %v841
          %861 = vmatprep.subr.bf16.mxu0 0
          %862 = vmatpush1.bf16.msra.mxu0 %v842
          %863 = vmatprep.subr.bf16.mxu0 0
          %864 = vmatpush1.bf16.msra.mxu0 %v843
          %865 = vmatprep.subr.bf16.mxu0 0
          %866 = vmatpush1.bf16.msra.mxu0 %v844
          %867 = vmatprep.subr.bf16.mxu0 0
          %868 = vmatpush1.bf16.msra.mxu0 %v845
          %869 = vmatprep.subr.bf16.mxu0 0
          %870 = vmatpush1.bf16.msra.mxu0 %v846
          %871 = vmatprep.subr.bf16.mxu0 0
          %872 = vmatpush1.bf16.msra.mxu0 0
          %873 = vmatprep.subr.bf16.mxu0 0
          %874 = vmatpush1.bf16.msra.mxu0 0
          %875 = vmatprep.subr.bf16.mxu0 0
          %876 = vmatpush1.bf16.msra.mxu0 0
          %877 = vmatprep.subr.bf16.mxu0 0
          %878 = vmatpush1.bf16.msra.mxu0 0
          %879 = vmatprep.subr.bf16.mxu0 0
          %880 = vmatpush1.bf16.msra.mxu0 0
          %881 = vmatprep.subr.bf16.mxu0 0
          %882 = vmatpush1.bf16.msra.mxu0 0
          %883 = vmatprep.subr.bf16.mxu0 0
          %884 = vmatpush1.bf16.msra.mxu0 0
          %885 = vmatprep.subr.bf16.mxu0 0
          %886 = vmatpush1.bf16.msra.mxu0 0
          %887 = vmatprep.mubr.bf16.mxu0 0
          %888 = vmatmul.mubr.bf16.gmra.mrb[0].mxu0 %v785
          %v889 = vpop.f32.mrb[0].mxu0
          %v890 = vadd.f32 %v805, %v889
          %v891 = vpop.f32.mrb[0].mxu0
          %v892 = vpop.f32.mrb[0].mxu0
          %v893 = vadd.f32 %v805, %v892
          %v894 = vpop.f32.mrb[0].mxu0
          %895 = vmatprep.mubr.bf16.mxu0 0
          %896 = vmatmul.mubr.bf16.gmra.mrb[0].mxu0 %v786
          %v897 = vpop.f32.mrb[0].mxu0
          %v898 = vadd.f32 %v805, %v897
          %v899 = vpop.f32.mrb[0].mxu0
          %v900 = vpop.f32.mrb[0].mxu0
          %v901 = vadd.f32 %v805, %v900
          %v902 = vpop.f32.mrb[0].mxu0
          %903 = vmatprep.mubr.bf16.mxu0 0
          %904 = vmatmul.mubr.bf16.gmra.mrb[0].mxu0 %v787
          %v905 = vpop.f32.mrb[0].mxu0
          %v906 = vadd.f32 %v805, %v905
          %v907 = vpop.f32.mrb[0].mxu0
          %v908 = vpop.f32.mrb[0].mxu0
          %v909 = vadd.f32 %v805, %v908
          %v910 = vpop.f32.mrb[0].mxu0
          %911 = vmatprep.mubr.bf16.mxu0 0
          %912 = vmatmul.mubr.bf16.gmra.mrb[0].mxu0 %v788
          %v913 = vpop.f32.mrb[0].mxu0
          %v914 = vadd.f32 %v805, %v913
          %v915 = vpop.f32.mrb[0].mxu0
          %v916 = vpop.f32.mrb[0].mxu0
          %v917 = vadd.f32 %v805, %v916
          %v918 = vpop.f32.mrb[0].mxu0
          %919 = vmatprep.mubr.bf16.mxu0 0
          %920 = vmatmul.mubr.bf16.gmra.mrb[0].mxu0 %v789
          %v921 = vpop.f32.mrb[0].mxu0
          %v922 = vadd.f32 %v805, %v921
          %v923 = vpop.f32.mrb[0].mxu0
          %v924 = vpop.f32.mrb[0].mxu0
          %v925 = vadd.f32 %v805, %v924
          %v926 = vpop.f32.mrb[0].mxu0
          %927 = vmatprep.mubr.bf16.mxu0 0
          %928 = vmatmul.mubr.bf16.gmra.mrb[0].mxu0 %v790
          %v929 = vpop.f32.mrb[0].mxu0
          %v930 = vadd.f32 %v805, %v929
          %v931 = vpop.f32.mrb[0].mxu0
          %v932 = vpop.f32.mrb[0].mxu0
          %v933 = vadd.f32 %v805, %v932
          %v934 = vpop.f32.mrb[0].mxu0
          %935 = vmatprep.mubr.bf16.mxu0 0
          %936 = vmatmul.mubr.bf16.gmra.mrb[0].mxu0 %v791
          %v937 = vpop.f32.mrb[0].mxu0
          %v938 = vadd.f32 %v805, %v937
          %v939 = vpop.f32.mrb[0].mxu0
          %v940 = vpop.f32.mrb[0].mxu0
          %v941 = vadd.f32 %v805, %v940
          %v942 = vpop.f32.mrb[0].mxu0
          %943 = vmatprep.mubr.bf16.mxu0 0
          %944 = vmatmul.mubr.bf16.gmra.mrb[0].mxu0 %v792
          %v945 = vpop.f32.mrb[0].mxu0
          %v946 = vadd.f32 %v805, %v945
          %v947 = vpop.f32.mrb[0].mxu0
          %v948 = vpop.f32.mrb[0].mxu0
          %v949 = vadd.f32 %v805, %v948
          %v950 = vpop.f32.mrb[0].mxu0
          %951 = vmatprep.mubr.bf16.mxu0 0
          %952 = vmatmul.mubr.bf16.gmra.mrb[0].mxu0 %v793
          %v953 = vpop.f32.mrb[0].mxu0
          %v954 = vadd.f32 %v805, %v953
          %v955 = vpop.f32.mrb[0].mxu0
          %v956 = vpop.f32.mrb[0].mxu0
          %v957 = vadd.f32 %v805, %v956
          %v958 = vpop.f32.mrb[0].mxu0
          %959 = vmatprep.mubr.bf16.mxu0 0
          %960 = vmatmul.mubr.bf16.gmra.mrb[0].mxu0 %v794
          %v961 = vpop.f32.mrb[0].mxu0
          %v962 = vadd.f32 %v805, %v961
          %v963 = vpop.f32.mrb[0].mxu0
          %v964 = vpop.f32.mrb[0].mxu0
          %v965 = vadd.f32 %v805, %v964
          %v966 = vpop.f32.mrb[0].mxu0
          %967 = vmatprep.mubr.bf16.mxu0 0
          %968 = vmatmul.mubr.bf16.gmra.mrb[0].mxu0 %v795
          %v969 = vpop.f32.mrb[0].mxu0
          %v970 = vadd.f32 %v805, %v969
          %v971 = vpop.f32.mrb[0].mxu0
          %v972 = vpop.f32.mrb[0].mxu0
          %v973 = vadd.f32 %v805, %v972
          %v974 = vpop.f32.mrb[0].mxu0
          %975 = vmatprep.mubr.bf16.mxu0 0
          %976 = vmatmul.mubr.bf16.gmra.mrb[0].mxu0 %v796
          %v977 = vpop.f32.mrb[0].mxu0
          %v978 = vadd.f32 %v805, %v977
          %v979 = vpop.f32.mrb[0].mxu0
          %v980 = vpop.f32.mrb[0].mxu0
          %v981 = vadd.f32 %v805, %v980
          %v982 = vpop.f32.mrb[0].mxu0
          %983 = vmatprep.mubr.bf16.mxu0 0
          %984 = vmatmul.mubr.bf16.gmra.mrb[0].mxu0 %v797
          %v985 = vpop.f32.mrb[0].mxu0
          %v986 = vadd.f32 %v805, %v985
          %v987 = vpop.f32.mrb[0].mxu0
          %v988 = vpop.f32.mrb[0].mxu0
          %v989 = vadd.f32 %v805, %v988
          %v990 = vpop.f32.mrb[0].mxu0
          %991 = vmatprep.mubr.bf16.mxu0 0
          %992 = vmatmul.mubr.bf16.gmra.mrb[0].mxu0 %v798
          %v993 = vpop.f32.mrb[0].mxu0
          %v994 = vadd.f32 %v805, %v993
          %v995 = vpop.f32.mrb[0].mxu0
          %v996 = vpop.f32.mrb[0].mxu0
          %v997 = vadd.f32 %v805, %v996
          %v998 = vpop.f32.mrb[0].mxu0
          %999 = vmatprep.mubr.bf16.mxu0 0
          %1000 = vmatmul.mubr.bf16.gmra.mrb[0].mxu0 %v799
          %v1001 = vpop.f32.mrb[0].mxu0
          %v1002 = vadd.f32 %v805, %v1001
          %v1003 = vpop.f32.mrb[0].mxu0
          %v1004 = vpop.f32.mrb[0].mxu0
          %v1005 = vadd.f32 %v805, %v1004
          %v1006 = vpop.f32.mrb[0].mxu0
          %1007 = vmatprep.mubr.bf16.mxu0 0
          %1008 = vmatmul.mubr.bf16.gmra.mrb[0].mxu0 %v800
          %v1009 = vpop.f32.mrb[0].mxu0
          %v1010 = vadd.f32 %v805, %v1009
          %v1011 = vpop.f32.mrb[0].mxu0
          %v1012 = vpop.f32.mrb[0].mxu0
          %v1013 = vadd.f32 %v805, %v1012
          %v1014 = vpop.f32.mrb[0].mxu0
          %1015 = vdwg.mxu0
          %v1016 = vmax.f32 %v890, 0.0
          %v1017 = vmax.f32 %v893, 0.0
          %v1018 = vmax.f32 %v898, 0.0
          %v1019 = vmax.f32 %v901, 0.0
          %v1020 = vmax.f32 %v906, 0.0
          %v1021 = vmax.f32 %v909, 0.0
          %v1022 = vmax.f32 %v914, 0.0
          %v1023 = vmax.f32 %v917, 0.0
          %v1024 = vmax.f32 %v922, 0.0
          %v1025 = vmax.f32 %v925, 0.0
          %v1026 = vmax.f32 %v930, 0.0
          %v1027 = vmax.f32 %v933, 0.0
          %v1028 = vmax.f32 %v938, 0.0
          %v1029 = vmax.f32 %v941, 0.0
          %v1030 = vmax.f32 %v946, 0.0
          %v1031 = vmax.f32 %v949, 0.0
          %v1032 = vmax.f32 %v954, 0.0
          %v1033 = vmax.f32 %v957, 0.0
          %v1034 = vmax.f32 %v962, 0.0
          %v1035 = vmax.f32 %v965, 0.0
          %v1036 = vmax.f32 %v970, 0.0
          %v1037 = vmax.f32 %v973, 0.0
          %v1038 = vmax.f32 %v978, 0.0
          %v1039 = vmax.f32 %v981, 0.0
          %v1040 = vmax.f32 %v986, 0.0
          %v1041 = vmax.f32 %v989, 0.0
          %v1042 = vmax.f32 %v994, 0.0
          %v1043 = vmax.f32 %v997, 0.0
          %v1044 = vmax.f32 %v1002, 0.0
          %v1045 = vmax.f32 %v1005, 0.0
          %v1046 = vmax.f32 %v1010, 0.0
          %v1047 = vmax.f32 %v1013, 0.0
          %v1048 = vadd.f32 %v1016, %v753
          %v1049 = vadd.f32 %v1017, %v754
          %v1050 = vadd.f32 %v1018, %v755
          %v1051 = vadd.f32 %v1019, %v756
          %v1052 = vadd.f32 %v1020, %v757
          %v1053 = vadd.f32 %v1021, %v758
          %v1054 = vadd.f32 %v1022, %v759
          %v1055 = vadd.f32 %v1023, %v760
          %v1056 = vadd.f32 %v1024, %v761
          %v1057 = vadd.f32 %v1025, %v762
          %v1058 = vadd.f32 %v1026, %v763
          %v1059 = vadd.f32 %v1027, %v764
          %v1060 = vadd.f32 %v1028, %v765
          %v1061 = vadd.f32 %v1029, %v766
          %v1062 = vadd.f32 %v1030, %v767
          %v1063 = vadd.f32 %v1031, %v768
          %v1064 = vadd.f32 %v1032, %v769
          %v1065 = vadd.f32 %v1033, %v770
          %v1066 = vadd.f32 %v1034, %v771
          %v1067 = vadd.f32 %v1035, %v772
          %v1068 = vadd.f32 %v1036, %v773
          %v1069 = vadd.f32 %v1037, %v774
          %v1070 = vadd.f32 %v1038, %v775
          %v1071 = vadd.f32 %v1039, %v776
          %v1072 = vadd.f32 %v1040, %v777
          %v1073 = vadd.f32 %v1041, %v778
          %v1074 = vadd.f32 %v1042, %v779
          %v1075 = vadd.f32 %v1043, %v780
          %v1076 = vadd.f32 %v1044, %v781
          %v1077 = vadd.f32 %v1045, %v782
          %v1078 = vadd.f32 %v1046, %v783
          %v1079 = vadd.f32 %v1047, %v784
          %v1080 = vpack.c.bf16 %v1049, %v1048
          %v1081 = vpack.c.bf16 %v1051, %v1050
          %v1082 = vpack.c.bf16 %v1053, %v1052
          %v1083 = vpack.c.bf16 %v1055, %v1054
          %v1084 = vpack.c.bf16 %v1057, %v1056
          %v1085 = vpack.c.bf16 %v1059, %v1058
          %v1086 = vpack.c.bf16 %v1061, %v1060
          %v1087 = vpack.c.bf16 %v1063, %v1062
          %v1088 = vpack.c.bf16 %v1065, %v1064
          %v1089 = vpack.c.bf16 %v1067, %v1066
          %v1090 = vpack.c.bf16 %v1069, %v1068
          %v1091 = vpack.c.bf16 %v1071, %v1070
          %v1092 = vpack.c.bf16 %v1073, %v1072
          %v1093 = vpack.c.bf16 %v1075, %v1074
          %v1094 = vpack.c.bf16 %v1077, %v1076
          %v1095 = vpack.c.bf16 %v1079, %v1078
          %v1097 = vlaneseq
          %v1098 = vshrl.u32 %v1097, 7
          %v1099 = vsub.s32 0, %v1098
          %v1100 = vrot.slane %v416, %v1099
          %v1118 = vunpack.c.l.b16 %v400
          %v1119 = vunpack.c.l.b16 %v401
          %v1120 = vunpack.c.l.b16 %v402
          %v1121 = vunpack.c.l.b16 %v403
          %v1122 = vunpack.c.l.b16 %v404
          %v1123 = vunpack.c.l.b16 %v405
          %v1124 = vunpack.c.l.b16 %v406
          %v1125 = vunpack.c.l.b16 %v407
          %v1126 = vunpack.c.l.b16 %v408
          %v1127 = vunpack.c.l.b16 %v409
          %v1128 = vunpack.c.l.b16 %v410
          %v1129 = vunpack.c.l.b16 %v411
          %v1130 = vunpack.c.l.b16 %v412
          %v1131 = vunpack.c.l.b16 %v413
          %v1132 = vunpack.c.l.b16 %v414
          %v1133 = vunpack.c.l.b16 %v415
          %v1134 = vpack.c.b16 %v1119, %v1118
          %v1135 = vpack.c.b16 %v1121, %v1120
          %v1136 = vpack.c.b16 %v1123, %v1122
          %v1137 = vpack.c.b16 %v1125, %v1124
          %v1138 = vpack.c.b16 %v1127, %v1126
          %v1139 = vpack.c.b16 %v1129, %v1128
          %v1140 = vpack.c.b16 %v1131, %v1130
          %v1141 = vpack.c.b16 %v1133, %v1132
          %1150 = vmatprep.subr.bf16.mxu0 0
          %1151 = vmatpush1.bf16.msra.mxu0 %v1134
          %1152 = vmatprep.subr.bf16.mxu0 0
          %1153 = vmatpush1.bf16.msra.mxu0 %v1135
          %1154 = vmatprep.subr.bf16.mxu0 0
          %1155 = vmatpush1.bf16.msra.mxu0 %v1136
          %1156 = vmatprep.subr.bf16.mxu0 0
          %1157 = vmatpush1.bf16.msra.mxu0 %v1137
          %1158 = vmatprep.subr.bf16.mxu0 0
          %1159 = vmatpush1.bf16.msra.mxu0 %v1138
          %1160 = vmatprep.subr.bf16.mxu0 0
          %1161 = vmatpush1.bf16.msra.mxu0 %v1139
          %1162 = vmatprep.subr.bf16.mxu0 0
          %1163 = vmatpush1.bf16.msra.mxu0 %v1140
          %1164 = vmatprep.subr.bf16.mxu0 0
          %1165 = vmatpush1.bf16.msra.mxu0 %v1141
          %1166 = vmatprep.subr.bf16.mxu0 0
          %1167 = vmatpush1.bf16.msra.mxu0 0
          %1168 = vmatprep.subr.bf16.mxu0 0
          %1169 = vmatpush1.bf16.msra.mxu0 0
          %1170 = vmatprep.subr.bf16.mxu0 0
          %1171 = vmatpush1.bf16.msra.mxu0 0
          %1172 = vmatprep.subr.bf16.mxu0 0
          %1173 = vmatpush1.bf16.msra.mxu0 0
          %1174 = vmatprep.subr.bf16.mxu0 0
          %1175 = vmatpush1.bf16.msra.mxu0 0
          %1176 = vmatprep.subr.bf16.mxu0 0
          %1177 = vmatpush1.bf16.msra.mxu0 0
          %1178 = vmatprep.subr.bf16.mxu0 0
          %1179 = vmatpush1.bf16.msra.mxu0 0
          %1180 = vmatprep.subr.bf16.mxu0 0
          %1181 = vmatpush1.bf16.msra.mxu0 0
          %1182 = vmatprep.mubr.bf16.mxu0 0
          %1183 = vmatmul.mubr.bf16.gmra.mrb[0].mxu0 %v1080
          %v1184 = vpop.f32.mrb[0].mxu0
          %v1185 = vadd.f32 %v1100, %v1184
          %v1186 = vpop.f32.mrb[0].mxu0
          %v1187 = vpop.f32.mrb[0].mxu0
          %v1188 = vadd.f32 %v1100, %v1187
          %v1189 = vpop.f32.mrb[0].mxu0
          %1190 = vmatprep.mubr.bf16.mxu0 0
          %1191 = vmatmul.mubr.bf16.gmra.mrb[0].mxu0 %v1081
          %v1192 = vpop.f32.mrb[0].mxu0
          %v1193 = vadd.f32 %v1100, %v1192
          %v1194 = vpop.f32.mrb[0].mxu0
          %v1195 = vpop.f32.mrb[0].mxu0
          %v1196 = vadd.f32 %v1100, %v1195
          %v1197 = vpop.f32.mrb[0].mxu0
          %1198 = vmatprep.mubr.bf16.mxu0 0
          %1199 = vmatmul.mubr.bf16.gmra.mrb[0].mxu0 %v1082
          %v1200 = vpop.f32.mrb[0].mxu0
          %v1201 = vadd.f32 %v1100, %v1200
          %v1202 = vpop.f32.mrb[0].mxu0
          %v1203 = vpop.f32.mrb[0].mxu0
          %v1204 = vadd.f32 %v1100, %v1203
          %v1205 = vpop.f32.mrb[0].mxu0
          %1206 = vmatprep.mubr.bf16.mxu0 0
          %1207 = vmatmul.mubr.bf16.gmra.mrb[0].mxu0 %v1083
          %v1208 = vpop.f32.mrb[0].mxu0
          %v1209 = vadd.f32 %v1100, %v1208
          %v1210 = vpop.f32.mrb[0].mxu0
          %v1211 = vpop.f32.mrb[0].mxu0
          %v1212 = vadd.f32 %v1100, %v1211
          %v1213 = vpop.f32.mrb[0].mxu0
          %1214 = vmatprep.mubr.bf16.mxu0 0
          %1215 = vmatmul.mubr.bf16.gmra.mrb[0].mxu0 %v1084
          %v1216 = vpop.f32.mrb[0].mxu0
          %v1217 = vadd.f32 %v1100, %v1216
          %v1218 = vpop.f32.mrb[0].mxu0
          %v1219 = vpop.f32.mrb[0].mxu0
          %v1220 = vadd.f32 %v1100, %v1219
          %v1221 = vpop.f32.mrb[0].mxu0
          %1222 = vmatprep.mubr.bf16.mxu0 0
          %1223 = vmatmul.mubr.bf16.gmra.mrb[0].mxu0 %v1085
          %v1224 = vpop.f32.mrb[0].mxu0
          %v1225 = vadd.f32 %v1100, %v1224
          %v1226 = vpop.f32.mrb[0].mxu0
          %v1227 = vpop.f32.mrb[0].mxu0
          %v1228 = vadd.f32 %v1100, %v1227
          %v1229 = vpop.f32.mrb[0].mxu0
          %1230 = vmatprep.mubr.bf16.mxu0 0
          %1231 = vmatmul.mubr.bf16.gmra.mrb[0].mxu0 %v1086
          %v1232 = vpop.f32.mrb[0].mxu0
          %v1233 = vadd.f32 %v1100, %v1232
          %v1234 = vpop.f32.mrb[0].mxu0
          %v1235 = vpop.f32.mrb[0].mxu0
          %v1236 = vadd.f32 %v1100, %v1235
          %v1237 = vpop.f32.mrb[0].mxu0
          %1238 = vmatprep.mubr.bf16.mxu0 0
          %1239 = vmatmul.mubr.bf16.gmra.mrb[0].mxu0 %v1087
          %v1240 = vpop.f32.mrb[0].mxu0
          %v1241 = vadd.f32 %v1100, %v1240
          %v1242 = vpop.f32.mrb[0].mxu0
          %v1243 = vpop.f32.mrb[0].mxu0
          %v1244 = vadd.f32 %v1100, %v1243
          %v1245 = vpop.f32.mrb[0].mxu0
          %1246 = vmatprep.mubr.bf16.mxu0 0
          %1247 = vmatmul.mubr.bf16.gmra.mrb[0].mxu0 %v1088
          %v1248 = vpop.f32.mrb[0].mxu0
          %v1249 = vadd.f32 %v1100, %v1248
          %v1250 = vpop.f32.mrb[0].mxu0
          %v1251 = vpop.f32.mrb[0].mxu0
          %v1252 = vadd.f32 %v1100, %v1251
          %v1253 = vpop.f32.mrb[0].mxu0
          %1254 = vmatprep.mubr.bf16.mxu0 0
          %1255 = vmatmul.mubr.bf16.gmra.mrb[0].mxu0 %v1089
          %v1256 = vpop.f32.mrb[0].mxu0
          %v1257 = vadd.f32 %v1100, %v1256
          %v1258 = vpop.f32.mrb[0].mxu0
          %v1259 = vpop.f32.mrb[0].mxu0
          %v1260 = vadd.f32 %v1100, %v1259
          %v1261 = vpop.f32.mrb[0].mxu0
          %1262 = vmatprep.mubr.bf16.mxu0 0
          %1263 = vmatmul.mubr.bf16.gmra.mrb[0].mxu0 %v1090
          %v1264 = vpop.f32.mrb[0].mxu0
          %v1265 = vadd.f32 %v1100, %v1264
          %v1266 = vpop.f32.mrb[0].mxu0
          %v1267 = vpop.f32.mrb[0].mxu0
          %v1268 = vadd.f32 %v1100, %v1267
          %v1269 = vpop.f32.mrb[0].mxu0
          %1270 = vmatprep.mubr.bf16.mxu0 0
          %1271 = vmatmul.mubr.bf16.gmra.mrb[0].mxu0 %v1091
          %v1272 = vpop.f32.mrb[0].mxu0
          %v1273 = vadd.f32 %v1100, %v1272
          %v1274 = vpop.f32.mrb[0].mxu0
          %v1275 = vpop.f32.mrb[0].mxu0
          %v1276 = vadd.f32 %v1100, %v1275
          %v1277 = vpop.f32.mrb[0].mxu0
          %1278 = vmatprep.mubr.bf16.mxu0 0
          %1279 = vmatmul.mubr.bf16.gmra.mrb[0].mxu0 %v1092
          %v1280 = vpop.f32.mrb[0].mxu0
          %v1281 = vadd.f32 %v1100, %v1280
          %v1282 = vpop.f32.mrb[0].mxu0
          %v1283 = vpop.f32.mrb[0].mxu0
          %v1284 = vadd.f32 %v1100, %v1283
          %v1285 = vpop.f32.mrb[0].mxu0
          %1286 = vmatprep.mubr.bf16.mxu0 0
          %1287 = vmatmul.mubr.bf16.gmra.mrb[0].mxu0 %v1093
          %v1288 = vpop.f32.mrb[0].mxu0
          %v1289 = vadd.f32 %v1100, %v1288
          %v1290 = vpop.f32.mrb[0].mxu0
          %v1291 = vpop.f32.mrb[0].mxu0
          %v1292 = vadd.f32 %v1100, %v1291
          %v1293 = vpop.f32.mrb[0].mxu0
          %1294 = vmatprep.mubr.bf16.mxu0 0
          %1295 = vmatmul.mubr.bf16.gmra.mrb[0].mxu0 %v1094
          %v1296 = vpop.f32.mrb[0].mxu0
          %v1297 = vadd.f32 %v1100, %v1296
          %v1298 = vpop.f32.mrb[0].mxu0
          %v1299 = vpop.f32.mrb[0].mxu0
          %v1300 = vadd.f32 %v1100, %v1299
          %v1301 = vpop.f32.mrb[0].mxu0
          %1302 = vmatprep.mubr.bf16.mxu0 0
          %1303 = vmatmul.mubr.bf16.gmra.mrb[0].mxu0 %v1095
          %v1304 = vpop.f32.mrb[0].mxu0
          %v1305 = vadd.f32 %v1100, %v1304
          %v1306 = vpop.f32.mrb[0].mxu0
          %v1307 = vpop.f32.mrb[0].mxu0
          %v1308 = vadd.f32 %v1100, %v1307
          %v1309 = vpop.f32.mrb[0].mxu0
          %1310 = vdwg.mxu0
          %v1311 = vmax.f32 %v1185, 0.0
          %v1312 = vmax.f32 %v1188, 0.0
          %v1313 = vmax.f32 %v1193, 0.0
          %v1314 = vmax.f32 %v1196, 0.0
          %v1315 = vmax.f32 %v1201, 0.0
          %v1316 = vmax.f32 %v1204, 0.0
          %v1317 = vmax.f32 %v1209, 0.0
          %v1318 = vmax.f32 %v1212, 0.0
          %v1319 = vmax.f32 %v1217, 0.0
          %v1320 = vmax.f32 %v1220, 0.0
          %v1321 = vmax.f32 %v1225, 0.0
          %v1322 = vmax.f32 %v1228, 0.0
          %v1323 = vmax.f32 %v1233, 0.0
          %v1324 = vmax.f32 %v1236, 0.0
          %v1325 = vmax.f32 %v1241, 0.0
          %v1326 = vmax.f32 %v1244, 0.0
          %v1327 = vmax.f32 %v1249, 0.0
          %v1328 = vmax.f32 %v1252, 0.0
          %v1329 = vmax.f32 %v1257, 0.0
          %v1330 = vmax.f32 %v1260, 0.0
          %v1331 = vmax.f32 %v1265, 0.0
          %v1332 = vmax.f32 %v1268, 0.0
          %v1333 = vmax.f32 %v1273, 0.0
          %v1334 = vmax.f32 %v1276, 0.0
          %v1335 = vmax.f32 %v1281, 0.0
          %v1336 = vmax.f32 %v1284, 0.0
          %v1337 = vmax.f32 %v1289, 0.0
          %v1338 = vmax.f32 %v1292, 0.0
          %v1339 = vmax.f32 %v1297, 0.0
          %v1340 = vmax.f32 %v1300, 0.0
          %v1341 = vmax.f32 %v1305, 0.0
          %v1342 = vmax.f32 %v1308, 0.0
          %v1343 = vadd.f32 %v1311, %v1048
          %v1344 = vadd.f32 %v1312, %v1049
          %v1345 = vadd.f32 %v1313, %v1050
          %v1346 = vadd.f32 %v1314, %v1051
          %v1347 = vadd.f32 %v1315, %v1052
          %v1348 = vadd.f32 %v1316, %v1053
          %v1349 = vadd.f32 %v1317, %v1054
          %v1350 = vadd.f32 %v1318, %v1055
          %v1351 = vadd.f32 %v1319, %v1056
          %v1352 = vadd.f32 %v1320, %v1057
          %v1353 = vadd.f32 %v1321, %v1058
          %v1354 = vadd.f32 %v1322, %v1059
          %v1355 = vadd.f32 %v1323, %v1060
          %v1356 = vadd.f32 %v1324, %v1061
          %v1357 = vadd.f32 %v1325, %v1062
          %v1358 = vadd.f32 %v1326, %v1063
          %v1359 = vadd.f32 %v1327, %v1064
          %v1360 = vadd.f32 %v1328, %v1065
          %v1361 = vadd.f32 %v1329, %v1066
          %v1362 = vadd.f32 %v1330, %v1067
          %v1363 = vadd.f32 %v1331, %v1068
          %v1364 = vadd.f32 %v1332, %v1069
          %v1365 = vadd.f32 %v1333, %v1070
          %v1366 = vadd.f32 %v1334, %v1071
          %v1367 = vadd.f32 %v1335, %v1072
          %v1368 = vadd.f32 %v1336, %v1073
          %v1369 = vadd.f32 %v1337, %v1074
          %v1370 = vadd.f32 %v1338, %v1075
          %v1371 = vadd.f32 %v1339, %v1076
          %v1372 = vadd.f32 %v1340, %v1077
          %v1373 = vadd.f32 %v1341, %v1078
          %v1374 = vadd.f32 %v1342, %v1079
          %v1375 = vpack.c.bf16 %v1344, %v1343
          %v1376 = vpack.c.bf16 %v1346, %v1345
          %v1377 = vpack.c.bf16 %v1348, %v1347
          %v1378 = vpack.c.bf16 %v1350, %v1349
          %v1379 = vpack.c.bf16 %v1352, %v1351
          %v1380 = vpack.c.bf16 %v1354, %v1353
          %v1381 = vpack.c.bf16 %v1356, %v1355
          %v1382 = vpack.c.bf16 %v1358, %v1357
          %v1383 = vpack.c.bf16 %v1360, %v1359
          %v1384 = vpack.c.bf16 %v1362, %v1361
          %v1385 = vpack.c.bf16 %v1364, %v1363
          %v1386 = vpack.c.bf16 %v1366, %v1365
          %v1387 = vpack.c.bf16 %v1368, %v1367
          %v1388 = vpack.c.bf16 %v1370, %v1369
          %v1389 = vpack.c.bf16 %v1372, %v1371
          %v1390 = vpack.c.bf16 %v1374, %v1373
          %v1392 = vlaneseq
          %v1393 = vshrl.u32 %v1392, 7
          %v1394 = vsub.s32 0, %v1393
          %v1395 = vrot.slane %v433, %v1394
          %v1413 = vunpack.c.l.b16 %v417
          %v1414 = vunpack.c.l.b16 %v418
          %v1415 = vunpack.c.l.b16 %v419
          %v1416 = vunpack.c.l.b16 %v420
          %v1417 = vunpack.c.l.b16 %v421
          %v1418 = vunpack.c.l.b16 %v422
          %v1419 = vunpack.c.l.b16 %v423
          %v1420 = vunpack.c.l.b16 %v424
          %v1421 = vunpack.c.l.b16 %v425
          %v1422 = vunpack.c.l.b16 %v426
          %v1423 = vunpack.c.l.b16 %v427
          %v1424 = vunpack.c.l.b16 %v428
          %v1425 = vunpack.c.l.b16 %v429
          %v1426 = vunpack.c.l.b16 %v430
          %v1427 = vunpack.c.l.b16 %v431
          %v1428 = vunpack.c.l.b16 %v432
          %v1429 = vpack.c.b16 %v1414, %v1413
          %v1430 = vpack.c.b16 %v1416, %v1415
          %v1431 = vpack.c.b16 %v1418, %v1417
          %v1432 = vpack.c.b16 %v1420, %v1419
          %v1433 = vpack.c.b16 %v1422, %v1421
          %v1434 = vpack.c.b16 %v1424, %v1423
          %v1435 = vpack.c.b16 %v1426, %v1425
          %v1436 = vpack.c.b16 %v1428, %v1427
          %1445 = vmatprep.subr.bf16.mxu0 0
          %1446 = vmatpush1.bf16.msra.mxu0 %v1429
          %1447 = vmatprep.subr.bf16.mxu0 0
          %1448 = vmatpush1.bf16.msra.mxu0 %v1430
          %1449 = vmatprep.subr.bf16.mxu0 0
          %1450 = vmatpush1.bf16.msra.mxu0 %v1431
          %1451 = vmatprep.subr.bf16.mxu0 0
          %1452 = vmatpush1.bf16.msra.mxu0 %v1432
          %1453 = vmatprep.subr.bf16.mxu0 0
          %1454 = vmatpush1.bf16.msra.mxu0 %v1433
          %1455 = vmatprep.subr.bf16.mxu0 0
          %1456 = vmatpush1.bf16.msra.mxu0 %v1434
          %1457 = vmatprep.subr.bf16.mxu0 0
          %1458 = vmatpush1.bf16.msra.mxu0 %v1435
          %1459 = vmatprep.subr.bf16.mxu0 0
          %1460 = vmatpush1.bf16.msra.mxu0 %v1436
          %1461 = vmatprep.subr.bf16.mxu0 0
          %1462 = vmatpush1.bf16.msra.mxu0 0
          %1463 = vmatprep.subr.bf16.mxu0 0
          %1464 = vmatpush1.bf16.msra.mxu0 0
          %1465 = vmatprep.subr.bf16.mxu0 0
          %1466 = vmatpush1.bf16.msra.mxu0 0
          %1467 = vmatprep.subr.bf16.mxu0 0
          %1468 = vmatpush1.bf16.msra.mxu0 0
          %1469 = vmatprep.subr.bf16.mxu0 0
          %1470 = vmatpush1.bf16.msra.mxu0 0
          %1471 = vmatprep.subr.bf16.mxu0 0
          %1472 = vmatpush1.bf16.msra.mxu0 0
          %1473 = vmatprep.subr.bf16.mxu0 0
          %1474 = vmatpush1.bf16.msra.mxu0 0
          %1475 = vmatprep.subr.bf16.mxu0 0
          %1476 = vmatpush1.bf16.msra.mxu0 0
          %1477 = vmatprep.mubr.bf16.mxu0 0
          %1478 = vmatmul.mubr.bf16.gmra.mrb[0].mxu0 %v1375
          %v1479 = vpop.f32.mrb[0].mxu0
          %v1480 = vadd.f32 %v1395, %v1479
          %v1481 = vpop.f32.mrb[0].mxu0
          %v1482 = vpop.f32.mrb[0].mxu0
          %v1483 = vadd.f32 %v1395, %v1482
          %v1484 = vpop.f32.mrb[0].mxu0
          %1485 = vmatprep.mubr.bf16.mxu0 0
          %1486 = vmatmul.mubr.bf16.gmra.mrb[0].mxu0 %v1376
          %v1487 = vpop.f32.mrb[0].mxu0
          %v1488 = vadd.f32 %v1395, %v1487
          %v1489 = vpop.f32.mrb[0].mxu0
          %v1490 = vpop.f32.mrb[0].mxu0
          %v1491 = vadd.f32 %v1395, %v1490
          %v1492 = vpop.f32.mrb[0].mxu0
          %1493 = vmatprep.mubr.bf16.mxu0 0
          %1494 = vmatmul.mubr.bf16.gmra.mrb[0].mxu0 %v1377
          %v1495 = vpop.f32.mrb[0].mxu0
          %v1496 = vadd.f32 %v1395, %v1495
          %v1497 = vpop.f32.mrb[0].mxu0
          %v1498 = vpop.f32.mrb[0].mxu0
          %v1499 = vadd.f32 %v1395, %v1498
          %v1500 = vpop.f32.mrb[0].mxu0
          %1501 = vmatprep.mubr.bf16.mxu0 0
          %1502 = vmatmul.mubr.bf16.gmra.mrb[0].mxu0 %v1378
          %v1503 = vpop.f32.mrb[0].mxu0
          %v1504 = vadd.f32 %v1395, %v1503
          %v1505 = vpop.f32.mrb[0].mxu0
          %v1506 = vpop.f32.mrb[0].mxu0
          %v1507 = vadd.f32 %v1395, %v1506
          %v1508 = vpop.f32.mrb[0].mxu0
          %1509 = vmatprep.mubr.bf16.mxu0 0
          %1510 = vmatmul.mubr.bf16.gmra.mrb[0].mxu0 %v1379
          %v1511 = vpop.f32.mrb[0].mxu0
          %v1512 = vadd.f32 %v1395, %v1511
          %v1513 = vpop.f32.mrb[0].mxu0
          %v1514 = vpop.f32.mrb[0].mxu0
          %v1515 = vadd.f32 %v1395, %v1514
          %v1516 = vpop.f32.mrb[0].mxu0
          %1517 = vmatprep.mubr.bf16.mxu0 0
          %1518 = vmatmul.mubr.bf16.gmra.mrb[0].mxu0 %v1380
          %v1519 = vpop.f32.mrb[0].mxu0
          %v1520 = vadd.f32 %v1395, %v1519
          %v1521 = vpop.f32.mrb[0].mxu0
          %v1522 = vpop.f32.mrb[0].mxu0
          %v1523 = vadd.f32 %v1395, %v1522
          %v1524 = vpop.f32.mrb[0].mxu0
          %1525 = vmatprep.mubr.bf16.mxu0 0
          %1526 = vmatmul.mubr.bf16.gmra.mrb[0].mxu0 %v1381
          %v1527 = vpop.f32.mrb[0].mxu0
          %v1528 = vadd.f32 %v1395, %v1527
          %v1529 = vpop.f32.mrb[0].mxu0
          %v1530 = vpop.f32.mrb[0].mxu0
          %v1531 = vadd.f32 %v1395, %v1530
          %v1532 = vpop.f32.mrb[0].mxu0
          %1533 = vmatprep.mubr.bf16.mxu0 0
          %1534 = vmatmul.mubr.bf16.gmra.mrb[0].mxu0 %v1382
          %v1535 = vpop.f32.mrb[0].mxu0
          %v1536 = vadd.f32 %v1395, %v1535
          %v1537 = vpop.f32.mrb[0].mxu0
          %v1538 = vpop.f32.mrb[0].mxu0
          %v1539 = vadd.f32 %v1395, %v1538
          %v1540 = vpop.f32.mrb[0].mxu0
          %1541 = vmatprep.mubr.bf16.mxu0 0
          %1542 = vmatmul.mubr.bf16.gmra.mrb[0].mxu0 %v1383
          %v1543 = vpop.f32.mrb[0].mxu0
          %v1544 = vadd.f32 %v1395, %v1543
          %v1545 = vpop.f32.mrb[0].mxu0
          %v1546 = vpop.f32.mrb[0].mxu0
          %v1547 = vadd.f32 %v1395, %v1546
          %v1548 = vpop.f32.mrb[0].mxu0
          %1549 = vmatprep.mubr.bf16.mxu0 0
          %1550 = vmatmul.mubr.bf16.gmra.mrb[0].mxu0 %v1384
          %v1551 = vpop.f32.mrb[0].mxu0
          %v1552 = vadd.f32 %v1395, %v1551
          %v1553 = vpop.f32.mrb[0].mxu0
          %v1554 = vpop.f32.mrb[0].mxu0
          %v1555 = vadd.f32 %v1395, %v1554
          %v1556 = vpop.f32.mrb[0].mxu0
          %1557 = vmatprep.mubr.bf16.mxu0 0
          %1558 = vmatmul.mubr.bf16.gmra.mrb[0].mxu0 %v1385
          %v1559 = vpop.f32.mrb[0].mxu0
          %v1560 = vadd.f32 %v1395, %v1559
          %v1561 = vpop.f32.mrb[0].mxu0
          %v1562 = vpop.f32.mrb[0].mxu0
          %v1563 = vadd.f32 %v1395, %v1562
          %v1564 = vpop.f32.mrb[0].mxu0
          %1565 = vmatprep.mubr.bf16.mxu0 0
          %1566 = vmatmul.mubr.bf16.gmra.mrb[0].mxu0 %v1386
          %v1567 = vpop.f32.mrb[0].mxu0
          %v1568 = vadd.f32 %v1395, %v1567
          %v1569 = vpop.f32.mrb[0].mxu0
          %v1570 = vpop.f32.mrb[0].mxu0
          %v1571 = vadd.f32 %v1395, %v1570
          %v1572 = vpop.f32.mrb[0].mxu0
          %1573 = vmatprep.mubr.bf16.mxu0 0
          %1574 = vmatmul.mubr.bf16.gmra.mrb[0].mxu0 %v1387
          %v1575 = vpop.f32.mrb[0].mxu0
          %v1576 = vadd.f32 %v1395, %v1575
          %v1577 = vpop.f32.mrb[0].mxu0
          %v1578 = vpop.f32.mrb[0].mxu0
          %v1579 = vadd.f32 %v1395, %v1578
          %v1580 = vpop.f32.mrb[0].mxu0
          %1581 = vmatprep.mubr.bf16.mxu0 0
          %1582 = vmatmul.mubr.bf16.gmra.mrb[0].mxu0 %v1388
          %v1583 = vpop.f32.mrb[0].mxu0
          %v1584 = vadd.f32 %v1395, %v1583
          %v1585 = vpop.f32.mrb[0].mxu0
          %v1586 = vpop.f32.mrb[0].mxu0
          %v1587 = vadd.f32 %v1395, %v1586
          %v1588 = vpop.f32.mrb[0].mxu0
          %1589 = vmatprep.mubr.bf16.mxu0 0
          %1590 = vmatmul.mubr.bf16.gmra.mrb[0].mxu0 %v1389
          %v1591 = vpop.f32.mrb[0].mxu0
          %v1592 = vadd.f32 %v1395, %v1591
          %v1593 = vpop.f32.mrb[0].mxu0
          %v1594 = vpop.f32.mrb[0].mxu0
          %v1595 = vadd.f32 %v1395, %v1594
          %v1596 = vpop.f32.mrb[0].mxu0
          %1597 = vmatprep.mubr.bf16.mxu0 0
          %1598 = vmatmul.mubr.bf16.gmra.mrb[0].mxu0 %v1390
          %v1599 = vpop.f32.mrb[0].mxu0
          %v1600 = vadd.f32 %v1395, %v1599
          %v1601 = vpop.f32.mrb[0].mxu0
          %v1602 = vpop.f32.mrb[0].mxu0
          %v1603 = vadd.f32 %v1395, %v1602
          %v1604 = vpop.f32.mrb[0].mxu0
          %1605 = vdwg.mxu0
          %v1606 = vmax.f32 %v1480, 0.0
          %v1607 = vmax.f32 %v1483, 0.0
          %v1608 = vmax.f32 %v1488, 0.0
          %v1609 = vmax.f32 %v1491, 0.0
          %v1610 = vmax.f32 %v1496, 0.0
          %v1611 = vmax.f32 %v1499, 0.0
          %v1612 = vmax.f32 %v1504, 0.0
          %v1613 = vmax.f32 %v1507, 0.0
          %v1614 = vmax.f32 %v1512, 0.0
          %v1615 = vmax.f32 %v1515, 0.0
          %v1616 = vmax.f32 %v1520, 0.0
          %v1617 = vmax.f32 %v1523, 0.0
          %v1618 = vmax.f32 %v1528, 0.0
          %v1619 = vmax.f32 %v1531, 0.0
          %v1620 = vmax.f32 %v1536, 0.0
          %v1621 = vmax.f32 %v1539, 0.0
          %v1622 = vmax.f32 %v1544, 0.0
          %v1623 = vmax.f32 %v1547, 0.0
          %v1624 = vmax.f32 %v1552, 0.0
          %v1625 = vmax.f32 %v1555, 0.0
          %v1626 = vmax.f32 %v1560, 0.0
          %v1627 = vmax.f32 %v1563, 0.0
          %v1628 = vmax.f32 %v1568, 0.0
          %v1629 = vmax.f32 %v1571, 0.0
          %v1630 = vmax.f32 %v1576, 0.0
          %v1631 = vmax.f32 %v1579, 0.0
          %v1632 = vmax.f32 %v1584, 0.0
          %v1633 = vmax.f32 %v1587, 0.0
          %v1634 = vmax.f32 %v1592, 0.0
          %v1635 = vmax.f32 %v1595, 0.0
          %v1636 = vmax.f32 %v1600, 0.0
          %v1637 = vmax.f32 %v1603, 0.0
          %v1638 = vstv %s508
          %v1639 = vmul.f32 %v1638, %v1606
          %v1640 = vmul.f32 %v1638, %v1607
          %v1641 = vmul.f32 %v1638, %v1608
          %v1642 = vmul.f32 %v1638, %v1609
          %v1643 = vmul.f32 %v1638, %v1610
          %v1644 = vmul.f32 %v1638, %v1611
          %v1645 = vmul.f32 %v1638, %v1612
          %v1646 = vmul.f32 %v1638, %v1613
          %v1647 = vmul.f32 %v1638, %v1614
          %v1648 = vmul.f32 %v1638, %v1615
          %v1649 = vmul.f32 %v1638, %v1616
          %v1650 = vmul.f32 %v1638, %v1617
          %v1651 = vmul.f32 %v1638, %v1618
          %v1652 = vmul.f32 %v1638, %v1619
          %v1653 = vmul.f32 %v1638, %v1620
          %v1654 = vmul.f32 %v1638, %v1621
          %v1655 = vmul.f32 %v1638, %v1622
          %v1656 = vmul.f32 %v1638, %v1623
          %v1657 = vmul.f32 %v1638, %v1624
          %v1658 = vmul.f32 %v1638, %v1625
          %v1659 = vmul.f32 %v1638, %v1626
          %v1660 = vmul.f32 %v1638, %v1627
          %v1661 = vmul.f32 %v1638, %v1628
          %v1662 = vmul.f32 %v1638, %v1629
          %v1663 = vmul.f32 %v1638, %v1630
          %v1664 = vmul.f32 %v1638, %v1631
          %v1665 = vmul.f32 %v1638, %v1632
          %v1666 = vmul.f32 %v1638, %v1633
          %v1667 = vmul.f32 %v1638, %v1634
          %v1668 = vmul.f32 %v1638, %v1635
          %v1669 = vmul.f32 %v1638, %v1636
          %v1670 = vmul.f32 %v1638, %v1637
          %v1671 = vadd.f32 %v472, %v1639
          %v1672 = vadd.f32 %v473, %v1640
          %v1673 = vadd.f32 %v474, %v1641
          %v1674 = vadd.f32 %v475, %v1642
          %v1675 = vadd.f32 %v476, %v1643
          %v1676 = vadd.f32 %v477, %v1644
          %v1677 = vadd.f32 %v478, %v1645
          %v1678 = vadd.f32 %v479, %v1646
          %v1679 = vadd.f32 %v480, %v1647
          %v1680 = vadd.f32 %v481, %v1648
          %v1681 = vadd.f32 %v482, %v1649
          %v1682 = vadd.f32 %v483, %v1650
          %v1683 = vadd.f32 %v484, %v1651
          %v1684 = vadd.f32 %v485, %v1652
          %v1685 = vadd.f32 %v486, %v1653
          %v1686 = vadd.f32 %v487, %v1654
          %v1687 = vadd.f32 %v488, %v1655
          %v1688 = vadd.f32 %v489, %v1656
          %v1689 = vadd.f32 %v490, %v1657
          %v1690 = vadd.f32 %v491, %v1658
          %v1691 = vadd.f32 %v492, %v1659
          %v1692 = vadd.f32 %v493, %v1660
          %v1693 = vadd.f32 %v494, %v1661
          %v1694 = vadd.f32 %v495, %v1662
          %v1695 = vadd.f32 %v496, %v1663
          %v1696 = vadd.f32 %v497, %v1664
          %v1697 = vadd.f32 %v498, %v1665
          %v1698 = vadd.f32 %v499, %v1666
          %v1699 = vadd.f32 %v500, %v1667
          %v1700 = vadd.f32 %v501, %v1668
          %v1701 = vadd.f32 %v502, %v1669
          %v1702 = vadd.f32 %v503, %v1670
          %v1703 = vpack.c.bf16 %v1672, %v1671
          %v1704 = vpack.c.bf16 %v1674, %v1673
          %v1705 = vpack.c.bf16 %v1676, %v1675
          %v1706 = vpack.c.bf16 %v1678, %v1677
          %v1707 = vpack.c.bf16 %v1680, %v1679
          %v1708 = vpack.c.bf16 %v1682, %v1681
          %v1709 = vpack.c.bf16 %v1684, %v1683
          %v1710 = vpack.c.bf16 %v1686, %v1685
          %v1711 = vpack.c.bf16 %v1688, %v1687
          %v1712 = vpack.c.bf16 %v1690, %v1689
          %v1713 = vpack.c.bf16 %v1692, %v1691
          %v1714 = vpack.c.bf16 %v1694, %v1693
          %v1715 = vpack.c.bf16 %v1696, %v1695
          %v1716 = vpack.c.bf16 %v1698, %v1697
          %v1717 = vpack.c.bf16 %v1700, %v1699
          %v1718 = vpack.c.bf16 %v1702, %v1701
          %v1720 = vsel %vm543, %v1703, 0
          %v1723 = vsel %vm543, %v1704, 0
          %v1726 = vsel %vm543, %v1705, 0
          %v1729 = vsel %vm543, %v1706, 0
          %v1732 = vsel %vm543, %v1707, 0
          %v1735 = vsel %vm543, %v1708, 0
          %v1738 = vsel %vm543, %v1709, 0
          %v1741 = vsel %vm543, %v1710, 0
          %v1744 = vsel %vm543, %v1711, 0
          %v1747 = vsel %vm543, %v1712, 0
          %v1750 = vsel %vm543, %v1713, 0
          %v1753 = vsel %vm543, %v1714, 0
          %v1756 = vsel %vm543, %v1715, 0
          %v1759 = vsel %vm543, %v1716, 0
          %v1762 = vsel %vm543, %v1717, 0
          %v1765 = vsel %vm543, %v1718, 0
          %1767 = vmatprep.subr.bf16.mxu0 0
          %1768 = vmatpush1.bf16.msra.mxu0 %v539
          %1769 = vmatprep.subr.bf16.mxu0 0
          %1770 = vmatpush1.bf16.msra.mxu0 %v540
          %1771 = vmatprep.subr.bf16.mxu0 0
          %1772 = vmatpush1.bf16.msra.mxu0 0
          %1773 = vmatprep.subr.bf16.mxu0 0
          %1774 = vmatpush1.bf16.msra.mxu0 0
          %1775 = vmatprep.subr.bf16.mxu0 0
          %1776 = vmatpush1.bf16.msra.mxu0 0
          %1777 = vmatprep.subr.bf16.mxu0 0
          %1778 = vmatpush1.bf16.msra.mxu0 0
          %1779 = vmatprep.subr.bf16.mxu0 0
          %1780 = vmatpush1.bf16.msra.mxu0 0
          %1781 = vmatprep.subr.bf16.mxu0 0
          %1782 = vmatpush1.bf16.msra.mxu0 0
          %1783 = vmatprep.subr.bf16.mxu0 0
          %1784 = vmatpush1.bf16.msra.mxu0 0
          %1785 = vmatprep.subr.bf16.mxu0 0
          %1786 = vmatpush1.bf16.msra.mxu0 0
          %1787 = vmatprep.subr.bf16.mxu0 0
          %1788 = vmatpush1.bf16.msra.mxu0 0
          %1789 = vmatprep.subr.bf16.mxu0 0
          %1790 = vmatpush1.bf16.msra.mxu0 0
          %1791 = vmatprep.subr.bf16.mxu0 0
          %1792 = vmatpush1.bf16.msra.mxu0 0
          %1793 = vmatprep.subr.bf16.mxu0 0
          %1794 = vmatpush1.bf16.msra.mxu0 0
          %1795 = vmatprep.subr.bf16.mxu0 0
          %1796 = vmatpush1.bf16.msra.mxu0 0
          %1797 = vmatprep.subr.bf16.mxu0 0
          %1798 = vmatpush1.bf16.msra.mxu0 0
          %1799 = vmatprep.mubr.bf16.mxu0 0
          %1800 = vmatmul.mubr.bf16.gmra.mrb[0].mxu0 %v1720
          %v1801 = vpop.f32.mrb[0].mxu0
          %v1802 = vadd.f32 %v529, %v1801
          %v1803 = vpop.f32.mrb[0].mxu0
          %v1804 = vpop.f32.mrb[0].mxu0
          %v1805 = vadd.f32 %v529, %v1804
          %v1806 = vpop.f32.mrb[0].mxu0
          %1807 = vmatprep.mubr.bf16.mxu0 0
          %1808 = vmatmul.mubr.bf16.gmra.mrb[0].mxu0 %v1723
          %v1809 = vpop.f32.mrb[0].mxu0
          %v1810 = vadd.f32 %v529, %v1809
          %v1811 = vpop.f32.mrb[0].mxu0
          %v1812 = vpop.f32.mrb[0].mxu0
          %v1813 = vadd.f32 %v529, %v1812
          %v1814 = vpop.f32.mrb[0].mxu0
          %1815 = vmatprep.mubr.bf16.mxu0 0
          %1816 = vmatmul.mubr.bf16.gmra.mrb[0].mxu0 %v1726
          %v1817 = vpop.f32.mrb[0].mxu0
          %v1818 = vadd.f32 %v529, %v1817
          %v1819 = vpop.f32.mrb[0].mxu0
          %v1820 = vpop.f32.mrb[0].mxu0
          %v1821 = vadd.f32 %v529, %v1820
          %v1822 = vpop.f32.mrb[0].mxu0
          %1823 = vmatprep.mubr.bf16.mxu0 0
          %1824 = vmatmul.mubr.bf16.gmra.mrb[0].mxu0 %v1729
          %v1825 = vpop.f32.mrb[0].mxu0
          %v1826 = vadd.f32 %v529, %v1825
          %v1827 = vpop.f32.mrb[0].mxu0
          %v1828 = vpop.f32.mrb[0].mxu0
          %v1829 = vadd.f32 %v529, %v1828
          %v1830 = vpop.f32.mrb[0].mxu0
          %1831 = vmatprep.mubr.bf16.mxu0 0
          %1832 = vmatmul.mubr.bf16.gmra.mrb[0].mxu0 %v1732
          %v1833 = vpop.f32.mrb[0].mxu0
          %v1834 = vadd.f32 %v529, %v1833
          %v1835 = vpop.f32.mrb[0].mxu0
          %v1836 = vpop.f32.mrb[0].mxu0
          %v1837 = vadd.f32 %v529, %v1836
          %v1838 = vpop.f32.mrb[0].mxu0
          %1839 = vmatprep.mubr.bf16.mxu0 0
          %1840 = vmatmul.mubr.bf16.gmra.mrb[0].mxu0 %v1735
          %v1841 = vpop.f32.mrb[0].mxu0
          %v1842 = vadd.f32 %v529, %v1841
          %v1843 = vpop.f32.mrb[0].mxu0
          %v1844 = vpop.f32.mrb[0].mxu0
          %v1845 = vadd.f32 %v529, %v1844
          %v1846 = vpop.f32.mrb[0].mxu0
          %1847 = vmatprep.mubr.bf16.mxu0 0
          %1848 = vmatmul.mubr.bf16.gmra.mrb[0].mxu0 %v1738
          %v1849 = vpop.f32.mrb[0].mxu0
          %v1850 = vadd.f32 %v529, %v1849
          %v1851 = vpop.f32.mrb[0].mxu0
          %v1852 = vpop.f32.mrb[0].mxu0
          %v1853 = vadd.f32 %v529, %v1852
          %v1854 = vpop.f32.mrb[0].mxu0
          %1855 = vmatprep.mubr.bf16.mxu0 0
          %1856 = vmatmul.mubr.bf16.gmra.mrb[0].mxu0 %v1741
          %v1857 = vpop.f32.mrb[0].mxu0
          %v1858 = vadd.f32 %v529, %v1857
          %v1859 = vpop.f32.mrb[0].mxu0
          %v1860 = vpop.f32.mrb[0].mxu0
          %v1861 = vadd.f32 %v529, %v1860
          %v1862 = vpop.f32.mrb[0].mxu0
          %1863 = vmatprep.mubr.bf16.mxu0 0
          %1864 = vmatmul.mubr.bf16.gmra.mrb[0].mxu0 %v1744
          %v1865 = vpop.f32.mrb[0].mxu0
          %v1866 = vadd.f32 %v529, %v1865
          %v1867 = vpop.f32.mrb[0].mxu0
          %v1868 = vpop.f32.mrb[0].mxu0
          %v1869 = vadd.f32 %v529, %v1868
          %v1870 = vpop.f32.mrb[0].mxu0
          %1871 = vmatprep.mubr.bf16.mxu0 0
          %1872 = vmatmul.mubr.bf16.gmra.mrb[0].mxu0 %v1747
          %v1873 = vpop.f32.mrb[0].mxu0
          %v1874 = vadd.f32 %v529, %v1873
          %v1875 = vpop.f32.mrb[0].mxu0
          %v1876 = vpop.f32.mrb[0].mxu0
          %v1877 = vadd.f32 %v529, %v1876
          %v1878 = vpop.f32.mrb[0].mxu0
          %1879 = vmatprep.mubr.bf16.mxu0 0
          %1880 = vmatmul.mubr.bf16.gmra.mrb[0].mxu0 %v1750
          %v1881 = vpop.f32.mrb[0].mxu0
          %v1882 = vadd.f32 %v529, %v1881
          %v1883 = vpop.f32.mrb[0].mxu0
          %v1884 = vpop.f32.mrb[0].mxu0
          %v1885 = vadd.f32 %v529, %v1884
          %v1886 = vpop.f32.mrb[0].mxu0
          %1887 = vmatprep.mubr.bf16.mxu0 0
          %1888 = vmatmul.mubr.bf16.gmra.mrb[0].mxu0 %v1753
          %v1889 = vpop.f32.mrb[0].mxu0
          %v1890 = vadd.f32 %v529, %v1889
          %v1891 = vpop.f32.mrb[0].mxu0
          %v1892 = vpop.f32.mrb[0].mxu0
          %v1893 = vadd.f32 %v529, %v1892
          %v1894 = vpop.f32.mrb[0].mxu0
          %1895 = vmatprep.mubr.bf16.mxu0 0
          %1896 = vmatmul.mubr.bf16.gmra.mrb[0].mxu0 %v1756
          %v1897 = vpop.f32.mrb[0].mxu0
          %v1898 = vadd.f32 %v529, %v1897
          %v1899 = vpop.f32.mrb[0].mxu0
          %v1900 = vpop.f32.mrb[0].mxu0
          %v1901 = vadd.f32 %v529, %v1900
          %v1902 = vpop.f32.mrb[0].mxu0
          %1903 = vmatprep.mubr.bf16.mxu0 0
          %1904 = vmatmul.mubr.bf16.gmra.mrb[0].mxu0 %v1759
          %v1905 = vpop.f32.mrb[0].mxu0
          %v1906 = vadd.f32 %v529, %v1905
          %v1907 = vpop.f32.mrb[0].mxu0
          %v1908 = vpop.f32.mrb[0].mxu0
          %v1909 = vadd.f32 %v529, %v1908
          %v1910 = vpop.f32.mrb[0].mxu0
          %1911 = vmatprep.mubr.bf16.mxu0 0
          %1912 = vmatmul.mubr.bf16.gmra.mrb[0].mxu0 %v1762
          %v1913 = vpop.f32.mrb[0].mxu0
          %v1914 = vadd.f32 %v529, %v1913
          %v1915 = vpop.f32.mrb[0].mxu0
          %v1916 = vpop.f32.mrb[0].mxu0
          %v1917 = vadd.f32 %v529, %v1916
          %v1918 = vpop.f32.mrb[0].mxu0
          %1919 = vmatprep.mubr.bf16.mxu0 0
          %1920 = vmatmul.mubr.bf16.gmra.mrb[0].mxu0 %v1765
          %v1921 = vpop.f32.mrb[0].mxu0
          %v1922 = vadd.f32 %v529, %v1921
          %v1923 = vpop.f32.mrb[0].mxu0
          %v1924 = vpop.f32.mrb[0].mxu0
          %v1925 = vadd.f32 %v529, %v1924
          %v1926 = vpop.f32.mrb[0].mxu0
          %1927 = vdwg.mxu0
          %v1928 = vmax.f32 %v1802, 0.0
          %v1929 = vmax.f32 %v1805, 0.0
          %v1930 = vmax.f32 %v1810, 0.0
          %v1931 = vmax.f32 %v1813, 0.0
          %v1932 = vmax.f32 %v1818, 0.0
          %v1933 = vmax.f32 %v1821, 0.0
          %v1934 = vmax.f32 %v1826, 0.0
          %v1935 = vmax.f32 %v1829, 0.0
          %v1936 = vmax.f32 %v1834, 0.0
          %v1937 = vmax.f32 %v1837, 0.0
          %v1938 = vmax.f32 %v1842, 0.0
          %v1939 = vmax.f32 %v1845, 0.0
          %v1940 = vmax.f32 %v1850, 0.0
          %v1941 = vmax.f32 %v1853, 0.0
          %v1942 = vmax.f32 %v1858, 0.0
          %v1943 = vmax.f32 %v1861, 0.0
          %v1944 = vmax.f32 %v1866, 0.0
          %v1945 = vmax.f32 %v1869, 0.0
          %v1946 = vmax.f32 %v1874, 0.0
          %v1947 = vmax.f32 %v1877, 0.0
          %v1948 = vmax.f32 %v1882, 0.0
          %v1949 = vmax.f32 %v1885, 0.0
          %v1950 = vmax.f32 %v1890, 0.0
          %v1951 = vmax.f32 %v1893, 0.0
          %v1952 = vmax.f32 %v1898, 0.0
          %v1953 = vmax.f32 %v1901, 0.0
          %v1954 = vmax.f32 %v1906, 0.0
          %v1955 = vmax.f32 %v1909, 0.0
          %v1956 = vmax.f32 %v1914, 0.0
          %v1957 = vmax.f32 %v1917, 0.0
          %v1958 = vmax.f32 %v1922, 0.0
          %v1959 = vmax.f32 %v1925, 0.0
          %v1960 = vpack.c.bf16 %v1929, %v1928
          %v1961 = vpack.c.bf16 %v1931, %v1930
          %v1962 = vpack.c.bf16 %v1933, %v1932
          %v1963 = vpack.c.bf16 %v1935, %v1934
          %v1964 = vpack.c.bf16 %v1937, %v1936
          %v1965 = vpack.c.bf16 %v1939, %v1938
          %v1966 = vpack.c.bf16 %v1941, %v1940
          %v1967 = vpack.c.bf16 %v1943, %v1942
          %v1968 = vpack.c.bf16 %v1945, %v1944
          %v1969 = vpack.c.bf16 %v1947, %v1946
          %v1970 = vpack.c.bf16 %v1949, %v1948
          %v1971 = vpack.c.bf16 %v1951, %v1950
          %v1972 = vpack.c.bf16 %v1953, %v1952
          %v1973 = vpack.c.bf16 %v1955, %v1954
          %v1974 = vpack.c.bf16 %v1957, %v1956
          %v1975 = vpack.c.bf16 %v1959, %v1958
          %1976 = vmatprep.subr.bf16.mxu0 0
          %1977 = vmatpush1.bf16.msra.mxu0 %v839
          %1978 = vmatprep.subr.bf16.mxu0 0
          %1979 = vmatpush1.bf16.msra.mxu0 %v840
          %1980 = vmatprep.subr.bf16.mxu0 0
          %1981 = vmatpush1.bf16.msra.mxu0 %v841
          %1982 = vmatprep.subr.bf16.mxu0 0
          %1983 = vmatpush1.bf16.msra.mxu0 %v842
          %1984 = vmatprep.subr.bf16.mxu0 0
          %1985 = vmatpush1.bf16.msra.mxu0 %v843
          %1986 = vmatprep.subr.bf16.mxu0 0
          %1987 = vmatpush1.bf16.msra.mxu0 %v844
          %1988 = vmatprep.subr.bf16.mxu0 0
          %1989 = vmatpush1.bf16.msra.mxu0 %v845
          %1990 = vmatprep.subr.bf16.mxu0 0
          %1991 = vmatpush1.bf16.msra.mxu0 %v846
          %1992 = vmatprep.subr.bf16.mxu0 0
          %1993 = vmatpush1.bf16.msra.mxu0 0
          %1994 = vmatprep.subr.bf16.mxu0 0
          %1995 = vmatpush1.bf16.msra.mxu0 0
          %1996 = vmatprep.subr.bf16.mxu0 0
          %1997 = vmatpush1.bf16.msra.mxu0 0
          %1998 = vmatprep.subr.bf16.mxu0 0
          %1999 = vmatpush1.bf16.msra.mxu0 0
          %2000 = vmatprep.subr.bf16.mxu0 0
          %2001 = vmatpush1.bf16.msra.mxu0 0
          %2002 = vmatprep.subr.bf16.mxu0 0
          %2003 = vmatpush1.bf16.msra.mxu0 0
          %2004 = vmatprep.subr.bf16.mxu0 0
          %2005 = vmatpush1.bf16.msra.mxu0 0
          %2006 = vmatprep.subr.bf16.mxu0 0
          %2007 = vmatpush1.bf16.msra.mxu0 0
          %2008 = vmatprep.mubr.bf16.mxu0 0
          %2009 = vmatmul.mubr.bf16.gmra.mrb[0].mxu0 %v1960
          %v2010 = vpop.f32.mrb[0].mxu0
          %v2011 = vadd.f32 %v805, %v2010
          %v2012 = vpop.f32.mrb[0].mxu0
          %v2013 = vpop.f32.mrb[0].mxu0
          %v2014 = vadd.f32 %v805, %v2013
          %v2015 = vpop.f32.mrb[0].mxu0
          %2016 = vmatprep.mubr.bf16.mxu0 0
          %2017 = vmatmul.mubr.bf16.gmra.mrb[0].mxu0 %v1961
          %v2018 = vpop.f32.mrb[0].mxu0
          %v2019 = vadd.f32 %v805, %v2018
          %v2020 = vpop.f32.mrb[0].mxu0
          %v2021 = vpop.f32.mrb[0].mxu0
          %v2022 = vadd.f32 %v805, %v2021
          %v2023 = vpop.f32.mrb[0].mxu0
          %2024 = vmatprep.mubr.bf16.mxu0 0
          %2025 = vmatmul.mubr.bf16.gmra.mrb[0].mxu0 %v1962
          %v2026 = vpop.f32.mrb[0].mxu0
          %v2027 = vadd.f32 %v805, %v2026
          %v2028 = vpop.f32.mrb[0].mxu0
          %v2029 = vpop.f32.mrb[0].mxu0
          %v2030 = vadd.f32 %v805, %v2029
          %v2031 = vpop.f32.mrb[0].mxu0
          %2032 = vmatprep.mubr.bf16.mxu0 0
          %2033 = vmatmul.mubr.bf16.gmra.mrb[0].mxu0 %v1963
          %v2034 = vpop.f32.mrb[0].mxu0
          %v2035 = vadd.f32 %v805, %v2034
          %v2036 = vpop.f32.mrb[0].mxu0
          %v2037 = vpop.f32.mrb[0].mxu0
          %v2038 = vadd.f32 %v805, %v2037
          %v2039 = vpop.f32.mrb[0].mxu0
          %2040 = vmatprep.mubr.bf16.mxu0 0
          %2041 = vmatmul.mubr.bf16.gmra.mrb[0].mxu0 %v1964
          %v2042 = vpop.f32.mrb[0].mxu0
          %v2043 = vadd.f32 %v805, %v2042
          %v2044 = vpop.f32.mrb[0].mxu0
          %v2045 = vpop.f32.mrb[0].mxu0
          %v2046 = vadd.f32 %v805, %v2045
          %v2047 = vpop.f32.mrb[0].mxu0
          %2048 = vmatprep.mubr.bf16.mxu0 0
          %2049 = vmatmul.mubr.bf16.gmra.mrb[0].mxu0 %v1965
          %v2050 = vpop.f32.mrb[0].mxu0
          %v2051 = vadd.f32 %v805, %v2050
          %v2052 = vpop.f32.mrb[0].mxu0
          %v2053 = vpop.f32.mrb[0].mxu0
          %v2054 = vadd.f32 %v805, %v2053
          %v2055 = vpop.f32.mrb[0].mxu0
          %2056 = vmatprep.mubr.bf16.mxu0 0
          %2057 = vmatmul.mubr.bf16.gmra.mrb[0].mxu0 %v1966
          %v2058 = vpop.f32.mrb[0].mxu0
          %v2059 = vadd.f32 %v805, %v2058
          %v2060 = vpop.f32.mrb[0].mxu0
          %v2061 = vpop.f32.mrb[0].mxu0
          %v2062 = vadd.f32 %v805, %v2061
          %v2063 = vpop.f32.mrb[0].mxu0
          %2064 = vmatprep.mubr.bf16.mxu0 0
          %2065 = vmatmul.mubr.bf16.gmra.mrb[0].mxu0 %v1967
          %v2066 = vpop.f32.mrb[0].mxu0
          %v2067 = vadd.f32 %v805, %v2066
          %v2068 = vpop.f32.mrb[0].mxu0
          %v2069 = vpop.f32.mrb[0].mxu0
          %v2070 = vadd.f32 %v805, %v2069
          %v2071 = vpop.f32.mrb[0].mxu0
          %2072 = vmatprep.mubr.bf16.mxu0 0
          %2073 = vmatmul.mubr.bf16.gmra.mrb[0].mxu0 %v1968
          %v2074 = vpop.f32.mrb[0].mxu0
          %v2075 = vadd.f32 %v805, %v2074
          %v2076 = vpop.f32.mrb[0].mxu0
          %v2077 = vpop.f32.mrb[0].mxu0
          %v2078 = vadd.f32 %v805, %v2077
          %v2079 = vpop.f32.mrb[0].mxu0
          %2080 = vmatprep.mubr.bf16.mxu0 0
          %2081 = vmatmul.mubr.bf16.gmra.mrb[0].mxu0 %v1969
          %v2082 = vpop.f32.mrb[0].mxu0
          %v2083 = vadd.f32 %v805, %v2082
          %v2084 = vpop.f32.mrb[0].mxu0
          %v2085 = vpop.f32.mrb[0].mxu0
          %v2086 = vadd.f32 %v805, %v2085
          %v2087 = vpop.f32.mrb[0].mxu0
          %2088 = vmatprep.mubr.bf16.mxu0 0
          %2089 = vmatmul.mubr.bf16.gmra.mrb[0].mxu0 %v1970
          %v2090 = vpop.f32.mrb[0].mxu0
          %v2091 = vadd.f32 %v805, %v2090
          %v2092 = vpop.f32.mrb[0].mxu0
          %v2093 = vpop.f32.mrb[0].mxu0
          %v2094 = vadd.f32 %v805, %v2093
          %v2095 = vpop.f32.mrb[0].mxu0
          %2096 = vmatprep.mubr.bf16.mxu0 0
          %2097 = vmatmul.mubr.bf16.gmra.mrb[0].mxu0 %v1971
          %v2098 = vpop.f32.mrb[0].mxu0
          %v2099 = vadd.f32 %v805, %v2098
          %v2100 = vpop.f32.mrb[0].mxu0
          %v2101 = vpop.f32.mrb[0].mxu0
          %v2102 = vadd.f32 %v805, %v2101
          %v2103 = vpop.f32.mrb[0].mxu0
          %2104 = vmatprep.mubr.bf16.mxu0 0
          %2105 = vmatmul.mubr.bf16.gmra.mrb[0].mxu0 %v1972
          %v2106 = vpop.f32.mrb[0].mxu0
          %v2107 = vadd.f32 %v805, %v2106
          %v2108 = vpop.f32.mrb[0].mxu0
          %v2109 = vpop.f32.mrb[0].mxu0
          %v2110 = vadd.f32 %v805, %v2109
          %v2111 = vpop.f32.mrb[0].mxu0
          %2112 = vmatprep.mubr.bf16.mxu0 0
          %2113 = vmatmul.mubr.bf16.gmra.mrb[0].mxu0 %v1973
          %v2114 = vpop.f32.mrb[0].mxu0
          %v2115 = vadd.f32 %v805, %v2114
          %v2116 = vpop.f32.mrb[0].mxu0
          %v2117 = vpop.f32.mrb[0].mxu0
          %v2118 = vadd.f32 %v805, %v2117
          %v2119 = vpop.f32.mrb[0].mxu0
          %2120 = vmatprep.mubr.bf16.mxu0 0
          %2121 = vmatmul.mubr.bf16.gmra.mrb[0].mxu0 %v1974
          %v2122 = vpop.f32.mrb[0].mxu0
          %v2123 = vadd.f32 %v805, %v2122
          %v2124 = vpop.f32.mrb[0].mxu0
          %v2125 = vpop.f32.mrb[0].mxu0
          %v2126 = vadd.f32 %v805, %v2125
          %v2127 = vpop.f32.mrb[0].mxu0
          %2128 = vmatprep.mubr.bf16.mxu0 0
          %2129 = vmatmul.mubr.bf16.gmra.mrb[0].mxu0 %v1975
          %v2130 = vpop.f32.mrb[0].mxu0
          %v2131 = vadd.f32 %v805, %v2130
          %v2132 = vpop.f32.mrb[0].mxu0
          %v2133 = vpop.f32.mrb[0].mxu0
          %v2134 = vadd.f32 %v805, %v2133
          %v2135 = vpop.f32.mrb[0].mxu0
          %2136 = vdwg.mxu0
          %v2137 = vmax.f32 %v2011, 0.0
          %v2138 = vmax.f32 %v2014, 0.0
          %v2139 = vmax.f32 %v2019, 0.0
          %v2140 = vmax.f32 %v2022, 0.0
          %v2141 = vmax.f32 %v2027, 0.0
          %v2142 = vmax.f32 %v2030, 0.0
          %v2143 = vmax.f32 %v2035, 0.0
          %v2144 = vmax.f32 %v2038, 0.0
          %v2145 = vmax.f32 %v2043, 0.0
          %v2146 = vmax.f32 %v2046, 0.0
          %v2147 = vmax.f32 %v2051, 0.0
          %v2148 = vmax.f32 %v2054, 0.0
          %v2149 = vmax.f32 %v2059, 0.0
          %v2150 = vmax.f32 %v2062, 0.0
          %v2151 = vmax.f32 %v2067, 0.0
          %v2152 = vmax.f32 %v2070, 0.0
          %v2153 = vmax.f32 %v2075, 0.0
          %v2154 = vmax.f32 %v2078, 0.0
          %v2155 = vmax.f32 %v2083, 0.0
          %v2156 = vmax.f32 %v2086, 0.0
          %v2157 = vmax.f32 %v2091, 0.0
          %v2158 = vmax.f32 %v2094, 0.0
          %v2159 = vmax.f32 %v2099, 0.0
          %v2160 = vmax.f32 %v2102, 0.0
          %v2161 = vmax.f32 %v2107, 0.0
          %v2162 = vmax.f32 %v2110, 0.0
          %v2163 = vmax.f32 %v2115, 0.0
          %v2164 = vmax.f32 %v2118, 0.0
          %v2165 = vmax.f32 %v2123, 0.0
          %v2166 = vmax.f32 %v2126, 0.0
          %v2167 = vmax.f32 %v2131, 0.0
          %v2168 = vmax.f32 %v2134, 0.0
          %v2169 = vadd.f32 %v2137, %v1928
          %v2170 = vadd.f32 %v2138, %v1929
          %v2171 = vadd.f32 %v2139, %v1930
          %v2172 = vadd.f32 %v2140, %v1931
          %v2173 = vadd.f32 %v2141, %v1932
          %v2174 = vadd.f32 %v2142, %v1933
          %v2175 = vadd.f32 %v2143, %v1934
          %v2176 = vadd.f32 %v2144, %v1935
          %v2177 = vadd.f32 %v2145, %v1936
          %v2178 = vadd.f32 %v2146, %v1937
          %v2179 = vadd.f32 %v2147, %v1938
          %v2180 = vadd.f32 %v2148, %v1939
          %v2181 = vadd.f32 %v2149, %v1940
          %v2182 = vadd.f32 %v2150, %v1941
          %v2183 = vadd.f32 %v2151, %v1942
          %v2184 = vadd.f32 %v2152, %v1943
          %v2185 = vadd.f32 %v2153, %v1944
          %v2186 = vadd.f32 %v2154, %v1945
          %v2187 = vadd.f32 %v2155, %v1946
          %v2188 = vadd.f32 %v2156, %v1947
          %v2189 = vadd.f32 %v2157, %v1948
          %v2190 = vadd.f32 %v2158, %v1949
          %v2191 = vadd.f32 %v2159, %v1950
          %v2192 = vadd.f32 %v2160, %v1951
          %v2193 = vadd.f32 %v2161, %v1952
          %v2194 = vadd.f32 %v2162, %v1953
          %v2195 = vadd.f32 %v2163, %v1954
          %v2196 = vadd.f32 %v2164, %v1955
          %v2197 = vadd.f32 %v2165, %v1956
          %v2198 = vadd.f32 %v2166, %v1957
          %v2199 = vadd.f32 %v2167, %v1958
          %v2200 = vadd.f32 %v2168, %v1959
          %v2201 = vpack.c.bf16 %v2170, %v2169
          %v2202 = vpack.c.bf16 %v2172, %v2171
          %v2203 = vpack.c.bf16 %v2174, %v2173
          %v2204 = vpack.c.bf16 %v2176, %v2175
          %v2205 = vpack.c.bf16 %v2178, %v2177
          %v2206 = vpack.c.bf16 %v2180, %v2179
          %v2207 = vpack.c.bf16 %v2182, %v2181
          %v2208 = vpack.c.bf16 %v2184, %v2183
          %v2209 = vpack.c.bf16 %v2186, %v2185
          %v2210 = vpack.c.bf16 %v2188, %v2187
          %v2211 = vpack.c.bf16 %v2190, %v2189
          %v2212 = vpack.c.bf16 %v2192, %v2191
          %v2213 = vpack.c.bf16 %v2194, %v2193
          %v2214 = vpack.c.bf16 %v2196, %v2195
          %v2215 = vpack.c.bf16 %v2198, %v2197
          %v2216 = vpack.c.bf16 %v2200, %v2199
          %2217 = vmatprep.subr.bf16.mxu0 0
          %2218 = vmatpush1.bf16.msra.mxu0 %v1134
          %2219 = vmatprep.subr.bf16.mxu0 0
          %2220 = vmatpush1.bf16.msra.mxu0 %v1135
          %2221 = vmatprep.subr.bf16.mxu0 0
          %2222 = vmatpush1.bf16.msra.mxu0 %v1136
          %2223 = vmatprep.subr.bf16.mxu0 0
          %2224 = vmatpush1.bf16.msra.mxu0 %v1137
          %2225 = vmatprep.subr.bf16.mxu0 0
          %2226 = vmatpush1.bf16.msra.mxu0 %v1138
          %2227 = vmatprep.subr.bf16.mxu0 0
          %2228 = vmatpush1.bf16.msra.mxu0 %v1139
          %2229 = vmatprep.subr.bf16.mxu0 0
          %2230 = vmatpush1.bf16.msra.mxu0 %v1140
          %2231 = vmatprep.subr.bf16.mxu0 0
          %2232 = vmatpush1.bf16.msra.mxu0 %v1141
          %2233 = vmatprep.subr.bf16.mxu0 0
          %2234 = vmatpush1.bf16.msra.mxu0 0
          %2235 = vmatprep.subr.bf16.mxu0 0
          %2236 = vmatpush1.bf16.msra.mxu0 0
          %2237 = vmatprep.subr.bf16.mxu0 0
          %2238 = vmatpush1.bf16.msra.mxu0 0
          %2239 = vmatprep.subr.bf16.mxu0 0
          %2240 = vmatpush1.bf16.msra.mxu0 0
          %2241 = vmatprep.subr.bf16.mxu0 0
          %2242 = vmatpush1.bf16.msra.mxu0 0
          %2243 = vmatprep.subr.bf16.mxu0 0
          %2244 = vmatpush1.bf16.msra.mxu0 0
          %2245 = vmatprep.subr.bf16.mxu0 0
          %2246 = vmatpush1.bf16.msra.mxu0 0
          %2247 = vmatprep.subr.bf16.mxu0 0
          %2248 = vmatpush1.bf16.msra.mxu0 0
          %2249 = vmatprep.mubr.bf16.mxu0 0
          %2250 = vmatmul.mubr.bf16.gmra.mrb[0].mxu0 %v2201
          %v2251 = vpop.f32.mrb[0].mxu0
          %v2252 = vadd.f32 %v1100, %v2251
          %v2253 = vpop.f32.mrb[0].mxu0
          %v2254 = vpop.f32.mrb[0].mxu0
          %v2255 = vadd.f32 %v1100, %v2254
          %v2256 = vpop.f32.mrb[0].mxu0
          %2257 = vmatprep.mubr.bf16.mxu0 0
          %2258 = vmatmul.mubr.bf16.gmra.mrb[0].mxu0 %v2202
          %v2259 = vpop.f32.mrb[0].mxu0
          %v2260 = vadd.f32 %v1100, %v2259
          %v2261 = vpop.f32.mrb[0].mxu0
          %v2262 = vpop.f32.mrb[0].mxu0
          %v2263 = vadd.f32 %v1100, %v2262
          %v2264 = vpop.f32.mrb[0].mxu0
          %2265 = vmatprep.mubr.bf16.mxu0 0
          %2266 = vmatmul.mubr.bf16.gmra.mrb[0].mxu0 %v2203
          %v2267 = vpop.f32.mrb[0].mxu0
          %v2268 = vadd.f32 %v1100, %v2267
          %v2269 = vpop.f32.mrb[0].mxu0
          %v2270 = vpop.f32.mrb[0].mxu0
          %v2271 = vadd.f32 %v1100, %v2270
          %v2272 = vpop.f32.mrb[0].mxu0
          %2273 = vmatprep.mubr.bf16.mxu0 0
          %2274 = vmatmul.mubr.bf16.gmra.mrb[0].mxu0 %v2204
          %v2275 = vpop.f32.mrb[0].mxu0
          %v2276 = vadd.f32 %v1100, %v2275
          %v2277 = vpop.f32.mrb[0].mxu0
          %v2278 = vpop.f32.mrb[0].mxu0
          %v2279 = vadd.f32 %v1100, %v2278
          %v2280 = vpop.f32.mrb[0].mxu0
          %2281 = vmatprep.mubr.bf16.mxu0 0
          %2282 = vmatmul.mubr.bf16.gmra.mrb[0].mxu0 %v2205
          %v2283 = vpop.f32.mrb[0].mxu0
          %v2284 = vadd.f32 %v1100, %v2283
          %v2285 = vpop.f32.mrb[0].mxu0
          %v2286 = vpop.f32.mrb[0].mxu0
          %v2287 = vadd.f32 %v1100, %v2286
          %v2288 = vpop.f32.mrb[0].mxu0
          %2289 = vmatprep.mubr.bf16.mxu0 0
          %2290 = vmatmul.mubr.bf16.gmra.mrb[0].mxu0 %v2206
          %v2291 = vpop.f32.mrb[0].mxu0
          %v2292 = vadd.f32 %v1100, %v2291
          %v2293 = vpop.f32.mrb[0].mxu0
          %v2294 = vpop.f32.mrb[0].mxu0
          %v2295 = vadd.f32 %v1100, %v2294
          %v2296 = vpop.f32.mrb[0].mxu0
          %2297 = vmatprep.mubr.bf16.mxu0 0
          %2298 = vmatmul.mubr.bf16.gmra.mrb[0].mxu0 %v2207
          %v2299 = vpop.f32.mrb[0].mxu0
          %v2300 = vadd.f32 %v1100, %v2299
          %v2301 = vpop.f32.mrb[0].mxu0
          %v2302 = vpop.f32.mrb[0].mxu0
          %v2303 = vadd.f32 %v1100, %v2302
          %v2304 = vpop.f32.mrb[0].mxu0
          %2305 = vmatprep.mubr.bf16.mxu0 0
          %2306 = vmatmul.mubr.bf16.gmra.mrb[0].mxu0 %v2208
          %v2307 = vpop.f32.mrb[0].mxu0
          %v2308 = vadd.f32 %v1100, %v2307
          %v2309 = vpop.f32.mrb[0].mxu0
          %v2310 = vpop.f32.mrb[0].mxu0
          %v2311 = vadd.f32 %v1100, %v2310
          %v2312 = vpop.f32.mrb[0].mxu0
          %2313 = vmatprep.mubr.bf16.mxu0 0
          %2314 = vmatmul.mubr.bf16.gmra.mrb[0].mxu0 %v2209
          %v2315 = vpop.f32.mrb[0].mxu0
          %v2316 = vadd.f32 %v1100, %v2315
          %v2317 = vpop.f32.mrb[0].mxu0
          %v2318 = vpop.f32.mrb[0].mxu0
          %v2319 = vadd.f32 %v1100, %v2318
          %v2320 = vpop.f32.mrb[0].mxu0
          %2321 = vmatprep.mubr.bf16.mxu0 0
          %2322 = vmatmul.mubr.bf16.gmra.mrb[0].mxu0 %v2210
          %v2323 = vpop.f32.mrb[0].mxu0
          %v2324 = vadd.f32 %v1100, %v2323
          %v2325 = vpop.f32.mrb[0].mxu0
          %v2326 = vpop.f32.mrb[0].mxu0
          %v2327 = vadd.f32 %v1100, %v2326
          %v2328 = vpop.f32.mrb[0].mxu0
          %2329 = vmatprep.mubr.bf16.mxu0 0
          %2330 = vmatmul.mubr.bf16.gmra.mrb[0].mxu0 %v2211
          %v2331 = vpop.f32.mrb[0].mxu0
          %v2332 = vadd.f32 %v1100, %v2331
          %v2333 = vpop.f32.mrb[0].mxu0
          %v2334 = vpop.f32.mrb[0].mxu0
          %v2335 = vadd.f32 %v1100, %v2334
          %v2336 = vpop.f32.mrb[0].mxu0
          %2337 = vmatprep.mubr.bf16.mxu0 0
          %2338 = vmatmul.mubr.bf16.gmra.mrb[0].mxu0 %v2212
          %v2339 = vpop.f32.mrb[0].mxu0
          %v2340 = vadd.f32 %v1100, %v2339
          %v2341 = vpop.f32.mrb[0].mxu0
          %v2342 = vpop.f32.mrb[0].mxu0
          %v2343 = vadd.f32 %v1100, %v2342
          %v2344 = vpop.f32.mrb[0].mxu0
          %2345 = vmatprep.mubr.bf16.mxu0 0
          %2346 = vmatmul.mubr.bf16.gmra.mrb[0].mxu0 %v2213
          %v2347 = vpop.f32.mrb[0].mxu0
          %v2348 = vadd.f32 %v1100, %v2347
          %v2349 = vpop.f32.mrb[0].mxu0
          %v2350 = vpop.f32.mrb[0].mxu0
          %v2351 = vadd.f32 %v1100, %v2350
          %v2352 = vpop.f32.mrb[0].mxu0
          %2353 = vmatprep.mubr.bf16.mxu0 0
          %2354 = vmatmul.mubr.bf16.gmra.mrb[0].mxu0 %v2214
          %v2355 = vpop.f32.mrb[0].mxu0
          %v2356 = vadd.f32 %v1100, %v2355
          %v2357 = vpop.f32.mrb[0].mxu0
          %v2358 = vpop.f32.mrb[0].mxu0
          %v2359 = vadd.f32 %v1100, %v2358
          %v2360 = vpop.f32.mrb[0].mxu0
          %2361 = vmatprep.mubr.bf16.mxu0 0
          %2362 = vmatmul.mubr.bf16.gmra.mrb[0].mxu0 %v2215
          %v2363 = vpop.f32.mrb[0].mxu0
          %v2364 = vadd.f32 %v1100, %v2363
          %v2365 = vpop.f32.mrb[0].mxu0
          %v2366 = vpop.f32.mrb[0].mxu0
          %v2367 = vadd.f32 %v1100, %v2366
          %v2368 = vpop.f32.mrb[0].mxu0
          %2369 = vmatprep.mubr.bf16.mxu0 0
          %2370 = vmatmul.mubr.bf16.gmra.mrb[0].mxu0 %v2216
          %v2371 = vpop.f32.mrb[0].mxu0
          %v2372 = vadd.f32 %v1100, %v2371
          %v2373 = vpop.f32.mrb[0].mxu0
          %v2374 = vpop.f32.mrb[0].mxu0
          %v2375 = vadd.f32 %v1100, %v2374
          %v2376 = vpop.f32.mrb[0].mxu0
          %2377 = vdwg.mxu0
          %v2378 = vmax.f32 %v2252, 0.0
          %v2379 = vmax.f32 %v2255, 0.0
          %v2380 = vmax.f32 %v2260, 0.0
          %v2381 = vmax.f32 %v2263, 0.0
          %v2382 = vmax.f32 %v2268, 0.0
          %v2383 = vmax.f32 %v2271, 0.0
          %v2384 = vmax.f32 %v2276, 0.0
          %v2385 = vmax.f32 %v2279, 0.0
          %v2386 = vmax.f32 %v2284, 0.0
          %v2387 = vmax.f32 %v2287, 0.0
          %v2388 = vmax.f32 %v2292, 0.0
          %v2389 = vmax.f32 %v2295, 0.0
          %v2390 = vmax.f32 %v2300, 0.0
          %v2391 = vmax.f32 %v2303, 0.0
          %v2392 = vmax.f32 %v2308, 0.0
          %v2393 = vmax.f32 %v2311, 0.0
          %v2394 = vmax.f32 %v2316, 0.0
          %v2395 = vmax.f32 %v2319, 0.0
          %v2396 = vmax.f32 %v2324, 0.0
          %v2397 = vmax.f32 %v2327, 0.0
          %v2398 = vmax.f32 %v2332, 0.0
          %v2399 = vmax.f32 %v2335, 0.0
          %v2400 = vmax.f32 %v2340, 0.0
          %v2401 = vmax.f32 %v2343, 0.0
          %v2402 = vmax.f32 %v2348, 0.0
          %v2403 = vmax.f32 %v2351, 0.0
          %v2404 = vmax.f32 %v2356, 0.0
          %v2405 = vmax.f32 %v2359, 0.0
          %v2406 = vmax.f32 %v2364, 0.0
          %v2407 = vmax.f32 %v2367, 0.0
          %v2408 = vmax.f32 %v2372, 0.0
          %v2409 = vmax.f32 %v2375, 0.0
          %v2410 = vadd.f32 %v2378, %v2169
          %v2411 = vadd.f32 %v2379, %v2170
          %v2412 = vadd.f32 %v2380, %v2171
          %v2413 = vadd.f32 %v2381, %v2172
          %v2414 = vadd.f32 %v2382, %v2173
          %v2415 = vadd.f32 %v2383, %v2174
          %v2416 = vadd.f32 %v2384, %v2175
          %v2417 = vadd.f32 %v2385, %v2176
          %v2418 = vadd.f32 %v2386, %v2177
          %v2419 = vadd.f32 %v2387, %v2178
          %v2420 = vadd.f32 %v2388, %v2179
          %v2421 = vadd.f32 %v2389, %v2180
          %v2422 = vadd.f32 %v2390, %v2181
          %v2423 = vadd.f32 %v2391, %v2182
          %v2424 = vadd.f32 %v2392, %v2183
          %v2425 = vadd.f32 %v2393, %v2184
          %v2426 = vadd.f32 %v2394, %v2185
          %v2427 = vadd.f32 %v2395, %v2186
          %v2428 = vadd.f32 %v2396, %v2187
          %v2429 = vadd.f32 %v2397, %v2188
          %v2430 = vadd.f32 %v2398, %v2189
          %v2431 = vadd.f32 %v2399, %v2190
          %v2432 = vadd.f32 %v2400, %v2191
          %v2433 = vadd.f32 %v2401, %v2192
          %v2434 = vadd.f32 %v2402, %v2193
          %v2435 = vadd.f32 %v2403, %v2194
          %v2436 = vadd.f32 %v2404, %v2195
          %v2437 = vadd.f32 %v2405, %v2196
          %v2438 = vadd.f32 %v2406, %v2197
          %v2439 = vadd.f32 %v2407, %v2198
          %v2440 = vadd.f32 %v2408, %v2199
          %v2441 = vadd.f32 %v2409, %v2200
          %v2442 = vpack.c.bf16 %v2411, %v2410
          %v2443 = vpack.c.bf16 %v2413, %v2412
          %v2444 = vpack.c.bf16 %v2415, %v2414
          %v2445 = vpack.c.bf16 %v2417, %v2416
          %v2446 = vpack.c.bf16 %v2419, %v2418
          %v2447 = vpack.c.bf16 %v2421, %v2420
          %v2448 = vpack.c.bf16 %v2423, %v2422
          %v2449 = vpack.c.bf16 %v2425, %v2424
          %v2450 = vpack.c.bf16 %v2427, %v2426
          %v2451 = vpack.c.bf16 %v2429, %v2428
          %v2452 = vpack.c.bf16 %v2431, %v2430
          %v2453 = vpack.c.bf16 %v2433, %v2432
          %v2454 = vpack.c.bf16 %v2435, %v2434
          %v2455 = vpack.c.bf16 %v2437, %v2436
          %v2456 = vpack.c.bf16 %v2439, %v2438
          %v2457 = vpack.c.bf16 %v2441, %v2440
          %2458 = vmatprep.subr.bf16.mxu0 0
          %2459 = vmatpush1.bf16.msra.mxu0 %v1429
          %2460 = vmatprep.subr.bf16.mxu0 0
          %2461 = vmatpush1.bf16.msra.mxu0 %v1430
          %2462 = vmatprep.subr.bf16.mxu0 0
          %2463 = vmatpush1.bf16.msra.mxu0 %v1431
          %2464 = vmatprep.subr.bf16.mxu0 0
          %2465 = vmatpush1.bf16.msra.mxu0 %v1432
          %2466 = vmatprep.subr.bf16.mxu0 0
          %2467 = vmatpush1.bf16.msra.mxu0 %v1433
          %2468 = vmatprep.subr.bf16.mxu0 0
          %2469 = vmatpush1.bf16.msra.mxu0 %v1434
          %2470 = vmatprep.subr.bf16.mxu0 0
          %2471 = vmatpush1.bf16.msra.mxu0 %v1435
          %2472 = vmatprep.subr.bf16.mxu0 0
          %2473 = vmatpush1.bf16.msra.mxu0 %v1436
          %2474 = vmatprep.subr.bf16.mxu0 0
          %2475 = vmatpush1.bf16.msra.mxu0 0
          %2476 = vmatprep.subr.bf16.mxu0 0
          %2477 = vmatpush1.bf16.msra.mxu0 0
          %2478 = vmatprep.subr.bf16.mxu0 0
          %2479 = vmatpush1.bf16.msra.mxu0 0
          %2480 = vmatprep.subr.bf16.mxu0 0
          %2481 = vmatpush1.bf16.msra.mxu0 0
          %2482 = vmatprep.subr.bf16.mxu0 0
          %2483 = vmatpush1.bf16.msra.mxu0 0
          %2484 = vmatprep.subr.bf16.mxu0 0
          %2485 = vmatpush1.bf16.msra.mxu0 0
          %2486 = vmatprep.subr.bf16.mxu0 0
          %2487 = vmatpush1.bf16.msra.mxu0 0
          %2488 = vmatprep.subr.bf16.mxu0 0
          %2489 = vmatpush1.bf16.msra.mxu0 0
          %2490 = vmatprep.mubr.bf16.mxu0 0
          %2491 = vmatmul.mubr.bf16.gmra.mrb[0].mxu0 %v2442
          %v2492 = vpop.f32.mrb[0].mxu0
          %v2493 = vadd.f32 %v1395, %v2492
          %v2494 = vpop.f32.mrb[0].mxu0
          %v2495 = vpop.f32.mrb[0].mxu0
          %v2496 = vadd.f32 %v1395, %v2495
          %v2497 = vpop.f32.mrb[0].mxu0
          %2498 = vmatprep.mubr.bf16.mxu0 0
          %2499 = vmatmul.mubr.bf16.gmra.mrb[0].mxu0 %v2443
          %v2500 = vpop.f32.mrb[0].mxu0
          %v2501 = vadd.f32 %v1395, %v2500
          %v2502 = vpop.f32.mrb[0].mxu0
          %v2503 = vpop.f32.mrb[0].mxu0
          %v2504 = vadd.f32 %v1395, %v2503
          %v2505 = vpop.f32.mrb[0].mxu0
          %2506 = vmatprep.mubr.bf16.mxu0 0
          %2507 = vmatmul.mubr.bf16.gmra.mrb[0].mxu0 %v2444
          %v2508 = vpop.f32.mrb[0].mxu0
          %v2509 = vadd.f32 %v1395, %v2508
          %v2510 = vpop.f32.mrb[0].mxu0
          %v2511 = vpop.f32.mrb[0].mxu0
          %v2512 = vadd.f32 %v1395, %v2511
          %v2513 = vpop.f32.mrb[0].mxu0
          %2514 = vmatprep.mubr.bf16.mxu0 0
          %2515 = vmatmul.mubr.bf16.gmra.mrb[0].mxu0 %v2445
          %v2516 = vpop.f32.mrb[0].mxu0
          %v2517 = vadd.f32 %v1395, %v2516
          %v2518 = vpop.f32.mrb[0].mxu0
          %v2519 = vpop.f32.mrb[0].mxu0
          %v2520 = vadd.f32 %v1395, %v2519
          %v2521 = vpop.f32.mrb[0].mxu0
          %2522 = vmatprep.mubr.bf16.mxu0 0
          %2523 = vmatmul.mubr.bf16.gmra.mrb[0].mxu0 %v2446
          %v2524 = vpop.f32.mrb[0].mxu0
          %v2525 = vadd.f32 %v1395, %v2524
          %v2526 = vpop.f32.mrb[0].mxu0
          %v2527 = vpop.f32.mrb[0].mxu0
          %v2528 = vadd.f32 %v1395, %v2527
          %v2529 = vpop.f32.mrb[0].mxu0
          %2530 = vmatprep.mubr.bf16.mxu0 0
          %2531 = vmatmul.mubr.bf16.gmra.mrb[0].mxu0 %v2447
          %v2532 = vpop.f32.mrb[0].mxu0
          %v2533 = vadd.f32 %v1395, %v2532
          %v2534 = vpop.f32.mrb[0].mxu0
          %v2535 = vpop.f32.mrb[0].mxu0
          %v2536 = vadd.f32 %v1395, %v2535
          %v2537 = vpop.f32.mrb[0].mxu0
          %2538 = vmatprep.mubr.bf16.mxu0 0
          %2539 = vmatmul.mubr.bf16.gmra.mrb[0].mxu0 %v2448
          %v2540 = vpop.f32.mrb[0].mxu0
          %v2541 = vadd.f32 %v1395, %v2540
          %v2542 = vpop.f32.mrb[0].mxu0
          %v2543 = vpop.f32.mrb[0].mxu0
          %v2544 = vadd.f32 %v1395, %v2543
          %v2545 = vpop.f32.mrb[0].mxu0
          %2546 = vmatprep.mubr.bf16.mxu0 0
          %2547 = vmatmul.mubr.bf16.gmra.mrb[0].mxu0 %v2449
          %v2548 = vpop.f32.mrb[0].mxu0
          %v2549 = vadd.f32 %v1395, %v2548
          %v2550 = vpop.f32.mrb[0].mxu0
          %v2551 = vpop.f32.mrb[0].mxu0
          %v2552 = vadd.f32 %v1395, %v2551
          %v2553 = vpop.f32.mrb[0].mxu0
          %2554 = vmatprep.mubr.bf16.mxu0 0
          %2555 = vmatmul.mubr.bf16.gmra.mrb[0].mxu0 %v2450
          %v2556 = vpop.f32.mrb[0].mxu0
          %v2557 = vadd.f32 %v1395, %v2556
          %v2558 = vpop.f32.mrb[0].mxu0
          %v2559 = vpop.f32.mrb[0].mxu0
          %v2560 = vadd.f32 %v1395, %v2559
          %v2561 = vpop.f32.mrb[0].mxu0
          %2562 = vmatprep.mubr.bf16.mxu0 0
          %2563 = vmatmul.mubr.bf16.gmra.mrb[0].mxu0 %v2451
          %v2564 = vpop.f32.mrb[0].mxu0
          %v2565 = vadd.f32 %v1395, %v2564
          %v2566 = vpop.f32.mrb[0].mxu0
          %v2567 = vpop.f32.mrb[0].mxu0
          %v2568 = vadd.f32 %v1395, %v2567
          %v2569 = vpop.f32.mrb[0].mxu0
          %2570 = vmatprep.mubr.bf16.mxu0 0
          %2571 = vmatmul.mubr.bf16.gmra.mrb[0].mxu0 %v2452
          %v2572 = vpop.f32.mrb[0].mxu0
          %v2573 = vadd.f32 %v1395, %v2572
          %v2574 = vpop.f32.mrb[0].mxu0
          %v2575 = vpop.f32.mrb[0].mxu0
          %v2576 = vadd.f32 %v1395, %v2575
          %v2577 = vpop.f32.mrb[0].mxu0
          %2578 = vmatprep.mubr.bf16.mxu0 0
          %2579 = vmatmul.mubr.bf16.gmra.mrb[0].mxu0 %v2453
          %v2580 = vpop.f32.mrb[0].mxu0
          %v2581 = vadd.f32 %v1395, %v2580
          %v2582 = vpop.f32.mrb[0].mxu0
          %v2583 = vpop.f32.mrb[0].mxu0
          %v2584 = vadd.f32 %v1395, %v2583
          %v2585 = vpop.f32.mrb[0].mxu0
          %2586 = vmatprep.mubr.bf16.mxu0 0
          %2587 = vmatmul.mubr.bf16.gmra.mrb[0].mxu0 %v2454
          %v2588 = vpop.f32.mrb[0].mxu0
          %v2589 = vadd.f32 %v1395, %v2588
          %v2590 = vpop.f32.mrb[0].mxu0
          %v2591 = vpop.f32.mrb[0].mxu0
          %v2592 = vadd.f32 %v1395, %v2591
          %v2593 = vpop.f32.mrb[0].mxu0
          %2594 = vmatprep.mubr.bf16.mxu0 0
          %2595 = vmatmul.mubr.bf16.gmra.mrb[0].mxu0 %v2455
          %v2596 = vpop.f32.mrb[0].mxu0
          %v2597 = vadd.f32 %v1395, %v2596
          %v2598 = vpop.f32.mrb[0].mxu0
          %v2599 = vpop.f32.mrb[0].mxu0
          %v2600 = vadd.f32 %v1395, %v2599
          %v2601 = vpop.f32.mrb[0].mxu0
          %2602 = vmatprep.mubr.bf16.mxu0 0
          %2603 = vmatmul.mubr.bf16.gmra.mrb[0].mxu0 %v2456
          %v2604 = vpop.f32.mrb[0].mxu0
          %v2605 = vadd.f32 %v1395, %v2604
          %v2606 = vpop.f32.mrb[0].mxu0
          %v2607 = vpop.f32.mrb[0].mxu0
          %v2608 = vadd.f32 %v1395, %v2607
          %v2609 = vpop.f32.mrb[0].mxu0
          %2610 = vmatprep.mubr.bf16.mxu0 0
          %2611 = vmatmul.mubr.bf16.gmra.mrb[0].mxu0 %v2457
          %v2612 = vpop.f32.mrb[0].mxu0
          %v2613 = vadd.f32 %v1395, %v2612
          %v2614 = vpop.f32.mrb[0].mxu0
          %v2615 = vpop.f32.mrb[0].mxu0
          %v2616 = vadd.f32 %v1395, %v2615
          %v2617 = vpop.f32.mrb[0].mxu0
          %2618 = vdwg.mxu0
          %v2619 = vmax.f32 %v2493, 0.0
          %v2620 = vmax.f32 %v2496, 0.0
          %v2621 = vmax.f32 %v2501, 0.0
          %v2622 = vmax.f32 %v2504, 0.0
          %v2623 = vmax.f32 %v2509, 0.0
          %v2624 = vmax.f32 %v2512, 0.0
          %v2625 = vmax.f32 %v2517, 0.0
          %v2626 = vmax.f32 %v2520, 0.0
          %v2627 = vmax.f32 %v2525, 0.0
          %v2628 = vmax.f32 %v2528, 0.0
          %v2629 = vmax.f32 %v2533, 0.0
          %v2630 = vmax.f32 %v2536, 0.0
          %v2631 = vmax.f32 %v2541, 0.0
          %v2632 = vmax.f32 %v2544, 0.0
          %v2633 = vmax.f32 %v2549, 0.0
          %v2634 = vmax.f32 %v2552, 0.0
          %v2635 = vmax.f32 %v2557, 0.0
          %v2636 = vmax.f32 %v2560, 0.0
          %v2637 = vmax.f32 %v2565, 0.0
          %v2638 = vmax.f32 %v2568, 0.0
          %v2639 = vmax.f32 %v2573, 0.0
          %v2640 = vmax.f32 %v2576, 0.0
          %v2641 = vmax.f32 %v2581, 0.0
          %v2642 = vmax.f32 %v2584, 0.0
          %v2643 = vmax.f32 %v2589, 0.0
          %v2644 = vmax.f32 %v2592, 0.0
          %v2645 = vmax.f32 %v2597, 0.0
          %v2646 = vmax.f32 %v2600, 0.0
          %v2647 = vmax.f32 %v2605, 0.0
          %v2648 = vmax.f32 %v2608, 0.0
          %v2649 = vmax.f32 %v2613, 0.0
          %v2650 = vmax.f32 %v2616, 0.0
          %v2651 = vmul.f32 %v2619, 2.0
          %v2652 = vmul.f32 %v2620, 2.0
          %v2653 = vmul.f32 %v2621, 2.0
          %v2654 = vmul.f32 %v2622, 2.0
          %v2655 = vmul.f32 %v2623, 2.0
          %v2656 = vmul.f32 %v2624, 2.0
          %v2657 = vmul.f32 %v2625, 2.0
          %v2658 = vmul.f32 %v2626, 2.0
          %v2659 = vmul.f32 %v2627, 2.0
          %v2660 = vmul.f32 %v2628, 2.0
          %v2661 = vmul.f32 %v2629, 2.0
          %v2662 = vmul.f32 %v2630, 2.0
          %v2663 = vmul.f32 %v2631, 2.0
          %v2664 = vmul.f32 %v2632, 2.0
          %v2665 = vmul.f32 %v2633, 2.0
          %v2666 = vmul.f32 %v2634, 2.0
          %v2667 = vmul.f32 %v2635, 2.0
          %v2668 = vmul.f32 %v2636, 2.0
          %v2669 = vmul.f32 %v2637, 2.0
          %v2670 = vmul.f32 %v2638, 2.0
          %v2671 = vmul.f32 %v2639, 2.0
          %v2672 = vmul.f32 %v2640, 2.0
          %v2673 = vmul.f32 %v2641, 2.0
          %v2674 = vmul.f32 %v2642, 2.0
          %v2675 = vmul.f32 %v2643, 2.0
          %v2676 = vmul.f32 %v2644, 2.0
          %v2677 = vmul.f32 %v2645, 2.0
          %v2678 = vmul.f32 %v2646, 2.0
          %v2679 = vmul.f32 %v2647, 2.0
          %v2680 = vmul.f32 %v2648, 2.0
          %v2681 = vmul.f32 %v2649, 2.0
          %v2682 = vmul.f32 %v2650, 2.0
          %v2683 = vadd.f32 %v1606, %v2651
          %v2684 = vadd.f32 %v1607, %v2652
          %v2685 = vadd.f32 %v1608, %v2653
          %v2686 = vadd.f32 %v1609, %v2654
          %v2687 = vadd.f32 %v1610, %v2655
          %v2688 = vadd.f32 %v1611, %v2656
          %v2689 = vadd.f32 %v1612, %v2657
          %v2690 = vadd.f32 %v1613, %v2658
          %v2691 = vadd.f32 %v1614, %v2659
          %v2692 = vadd.f32 %v1615, %v2660
          %v2693 = vadd.f32 %v1616, %v2661
          %v2694 = vadd.f32 %v1617, %v2662
          %v2695 = vadd.f32 %v1618, %v2663
          %v2696 = vadd.f32 %v1619, %v2664
          %v2697 = vadd.f32 %v1620, %v2665
          %v2698 = vadd.f32 %v1621, %v2666
          %v2699 = vadd.f32 %v1622, %v2667
          %v2700 = vadd.f32 %v1623, %v2668
          %v2701 = vadd.f32 %v1624, %v2669
          %v2702 = vadd.f32 %v1625, %v2670
          %v2703 = vadd.f32 %v1626, %v2671
          %v2704 = vadd.f32 %v1627, %v2672
          %v2705 = vadd.f32 %v1628, %v2673
          %v2706 = vadd.f32 %v1629, %v2674
          %v2707 = vadd.f32 %v1630, %v2675
          %v2708 = vadd.f32 %v1631, %v2676
          %v2709 = vadd.f32 %v1632, %v2677
          %v2710 = vadd.f32 %v1633, %v2678
          %v2711 = vadd.f32 %v1634, %v2679
          %v2712 = vadd.f32 %v1635, %v2680
          %v2713 = vadd.f32 %v1636, %v2681
          %v2714 = vadd.f32 %v1637, %v2682
          %v2715 = vmul.f32 %v1638, %v2619
          %v2716 = vmul.f32 %v1638, %v2620
          %v2717 = vmul.f32 %v1638, %v2621
          %v2718 = vmul.f32 %v1638, %v2622
          %v2719 = vmul.f32 %v1638, %v2623
          %v2720 = vmul.f32 %v1638, %v2624
          %v2721 = vmul.f32 %v1638, %v2625
          %v2722 = vmul.f32 %v1638, %v2626
          %v2723 = vmul.f32 %v1638, %v2627
          %v2724 = vmul.f32 %v1638, %v2628
          %v2725 = vmul.f32 %v1638, %v2629
          %v2726 = vmul.f32 %v1638, %v2630
          %v2727 = vmul.f32 %v1638, %v2631
          %v2728 = vmul.f32 %v1638, %v2632
          %v2729 = vmul.f32 %v1638, %v2633
          %v2730 = vmul.f32 %v1638, %v2634
          %v2731 = vmul.f32 %v1638, %v2635
          %v2732 = vmul.f32 %v1638, %v2636
          %v2733 = vmul.f32 %v1638, %v2637
          %v2734 = vmul.f32 %v1638, %v2638
          %v2735 = vmul.f32 %v1638, %v2639
          %v2736 = vmul.f32 %v1638, %v2640
          %v2737 = vmul.f32 %v1638, %v2641
          %v2738 = vmul.f32 %v1638, %v2642
          %v2739 = vmul.f32 %v1638, %v2643
          %v2740 = vmul.f32 %v1638, %v2644
          %v2741 = vmul.f32 %v1638, %v2645
          %v2742 = vmul.f32 %v1638, %v2646
          %v2743 = vmul.f32 %v1638, %v2647
          %v2744 = vmul.f32 %v1638, %v2648
          %v2745 = vmul.f32 %v1638, %v2649
          %v2746 = vmul.f32 %v1638, %v2650
          %v2747 = vadd.f32 %v472, %v2715
          %v2748 = vadd.f32 %v473, %v2716
          %v2749 = vadd.f32 %v474, %v2717
          %v2750 = vadd.f32 %v475, %v2718
          %v2751 = vadd.f32 %v476, %v2719
          %v2752 = vadd.f32 %v477, %v2720
          %v2753 = vadd.f32 %v478, %v2721
          %v2754 = vadd.f32 %v479, %v2722
          %v2755 = vadd.f32 %v480, %v2723
          %v2756 = vadd.f32 %v481, %v2724
          %v2757 = vadd.f32 %v482, %v2725
          %v2758 = vadd.f32 %v483, %v2726
          %v2759 = vadd.f32 %v484, %v2727
          %v2760 = vadd.f32 %v485, %v2728
          %v2761 = vadd.f32 %v486, %v2729
          %v2762 = vadd.f32 %v487, %v2730
          %v2763 = vadd.f32 %v488, %v2731
          %v2764 = vadd.f32 %v489, %v2732
          %v2765 = vadd.f32 %v490, %v2733
          %v2766 = vadd.f32 %v491, %v2734
          %v2767 = vadd.f32 %v492, %v2735
          %v2768 = vadd.f32 %v493, %v2736
          %v2769 = vadd.f32 %v494, %v2737
          %v2770 = vadd.f32 %v495, %v2738
          %v2771 = vadd.f32 %v496, %v2739
          %v2772 = vadd.f32 %v497, %v2740
          %v2773 = vadd.f32 %v498, %v2741
          %v2774 = vadd.f32 %v499, %v2742
          %v2775 = vadd.f32 %v500, %v2743
          %v2776 = vadd.f32 %v501, %v2744
          %v2777 = vadd.f32 %v502, %v2745
          %v2778 = vadd.f32 %v503, %v2746
          %v2779 = vpack.c.bf16 %v2748, %v2747
          %v2780 = vpack.c.bf16 %v2750, %v2749
          %v2781 = vpack.c.bf16 %v2752, %v2751
          %v2782 = vpack.c.bf16 %v2754, %v2753
          %v2783 = vpack.c.bf16 %v2756, %v2755
          %v2784 = vpack.c.bf16 %v2758, %v2757
          %v2785 = vpack.c.bf16 %v2760, %v2759
          %v2786 = vpack.c.bf16 %v2762, %v2761
          %v2787 = vpack.c.bf16 %v2764, %v2763
          %v2788 = vpack.c.bf16 %v2766, %v2765
          %v2789 = vpack.c.bf16 %v2768, %v2767
          %v2790 = vpack.c.bf16 %v2770, %v2769
          %v2791 = vpack.c.bf16 %v2772, %v2771
          %v2792 = vpack.c.bf16 %v2774, %v2773
          %v2793 = vpack.c.bf16 %v2776, %v2775
          %v2794 = vpack.c.bf16 %v2778, %v2777
          %v2796 = vsel %vm543, %v2779, 0
          %v2799 = vsel %vm543, %v2780, 0
          %v2802 = vsel %vm543, %v2781, 0
          %v2805 = vsel %vm543, %v2782, 0
          %v2808 = vsel %vm543, %v2783, 0
          %v2811 = vsel %vm543, %v2784, 0
          %v2814 = vsel %vm543, %v2785, 0
          %v2817 = vsel %vm543, %v2786, 0
          %v2820 = vsel %vm543, %v2787, 0
          %v2823 = vsel %vm543, %v2788, 0
          %v2826 = vsel %vm543, %v2789, 0
          %v2829 = vsel %vm543, %v2790, 0
          %v2832 = vsel %vm543, %v2791, 0
          %v2835 = vsel %vm543, %v2792, 0
          %v2838 = vsel %vm543, %v2793, 0
          %v2841 = vsel %vm543, %v2794, 0
          %2843 = vmatprep.subr.bf16.mxu0 0
          %2844 = vmatpush1.bf16.msra.mxu0 %v539
          %2845 = vmatprep.subr.bf16.mxu0 0
          %2846 = vmatpush1.bf16.msra.mxu0 %v540
          %2847 = vmatprep.subr.bf16.mxu0 0
          %2848 = vmatpush1.bf16.msra.mxu0 0
          %2849 = vmatprep.subr.bf16.mxu0 0
          %2850 = vmatpush1.bf16.msra.mxu0 0
          %2851 = vmatprep.subr.bf16.mxu0 0
          %2852 = vmatpush1.bf16.msra.mxu0 0
          %2853 = vmatprep.subr.bf16.mxu0 0
          %2854 = vmatpush1.bf16.msra.mxu0 0
          %2855 = vmatprep.subr.bf16.mxu0 0
          %2856 = vmatpush1.bf16.msra.mxu0 0
          %2857 = vmatprep.subr.bf16.mxu0 0
          %2858 = vmatpush1.bf16.msra.mxu0 0
          %2859 = vmatprep.subr.bf16.mxu0 0
          %2860 = vmatpush1.bf16.msra.mxu0 0
          %2861 = vmatprep.subr.bf16.mxu0 0
          %2862 = vmatpush1.bf16.msra.mxu0 0
          %2863 = vmatprep.subr.bf16.mxu0 0
          %2864 = vmatpush1.bf16.msra.mxu0 0
          %2865 = vmatprep.subr.bf16.mxu0 0
          %2866 = vmatpush1.bf16.msra.mxu0 0
          %2867 = vmatprep.subr.bf16.mxu0 0
          %2868 = vmatpush1.bf16.msra.mxu0 0
          %2869 = vmatprep.subr.bf16.mxu0 0
          %2870 = vmatpush1.bf16.msra.mxu0 0
          %2871 = vmatprep.subr.bf16.mxu0 0
          %2872 = vmatpush1.bf16.msra.mxu0 0
          %2873 = vmatprep.subr.bf16.mxu0 0
          %2874 = vmatpush1.bf16.msra.mxu0 0
          %2875 = vmatprep.mubr.bf16.mxu0 0
          %2876 = vmatmul.mubr.bf16.gmra.mrb[0].mxu0 %v2796
          %v2877 = vpop.f32.mrb[0].mxu0
          %v2878 = vadd.f32 %v529, %v2877
          %v2879 = vpop.f32.mrb[0].mxu0
          %v2880 = vpop.f32.mrb[0].mxu0
          %v2881 = vadd.f32 %v529, %v2880
          %v2882 = vpop.f32.mrb[0].mxu0
          %2883 = vmatprep.mubr.bf16.mxu0 0
          %2884 = vmatmul.mubr.bf16.gmra.mrb[0].mxu0 %v2799
          %v2885 = vpop.f32.mrb[0].mxu0
          %v2886 = vadd.f32 %v529, %v2885
          %v2887 = vpop.f32.mrb[0].mxu0
          %v2888 = vpop.f32.mrb[0].mxu0
          %v2889 = vadd.f32 %v529, %v2888
          %v2890 = vpop.f32.mrb[0].mxu0
          %2891 = vmatprep.mubr.bf16.mxu0 0
          %2892 = vmatmul.mubr.bf16.gmra.mrb[0].mxu0 %v2802
          %v2893 = vpop.f32.mrb[0].mxu0
          %v2894 = vadd.f32 %v529, %v2893
          %v2895 = vpop.f32.mrb[0].mxu0
          %v2896 = vpop.f32.mrb[0].mxu0
          %v2897 = vadd.f32 %v529, %v2896
          %v2898 = vpop.f32.mrb[0].mxu0
          %2899 = vmatprep.mubr.bf16.mxu0 0
          %2900 = vmatmul.mubr.bf16.gmra.mrb[0].mxu0 %v2805
          %v2901 = vpop.f32.mrb[0].mxu0
          %v2902 = vadd.f32 %v529, %v2901
          %v2903 = vpop.f32.mrb[0].mxu0
          %v2904 = vpop.f32.mrb[0].mxu0
          %v2905 = vadd.f32 %v529, %v2904
          %v2906 = vpop.f32.mrb[0].mxu0
          %2907 = vmatprep.mubr.bf16.mxu0 0
          %2908 = vmatmul.mubr.bf16.gmra.mrb[0].mxu0 %v2808
          %v2909 = vpop.f32.mrb[0].mxu0
          %v2910 = vadd.f32 %v529, %v2909
          %v2911 = vpop.f32.mrb[0].mxu0
          %v2912 = vpop.f32.mrb[0].mxu0
          %v2913 = vadd.f32 %v529, %v2912
          %v2914 = vpop.f32.mrb[0].mxu0
          %2915 = vmatprep.mubr.bf16.mxu0 0
          %2916 = vmatmul.mubr.bf16.gmra.mrb[0].mxu0 %v2811
          %v2917 = vpop.f32.mrb[0].mxu0
          %v2918 = vadd.f32 %v529, %v2917
          %v2919 = vpop.f32.mrb[0].mxu0
          %v2920 = vpop.f32.mrb[0].mxu0
          %v2921 = vadd.f32 %v529, %v2920
          %v2922 = vpop.f32.mrb[0].mxu0
          %2923 = vmatprep.mubr.bf16.mxu0 0
          %2924 = vmatmul.mubr.bf16.gmra.mrb[0].mxu0 %v2814
          %v2925 = vpop.f32.mrb[0].mxu0
          %v2926 = vadd.f32 %v529, %v2925
          %v2927 = vpop.f32.mrb[0].mxu0
          %v2928 = vpop.f32.mrb[0].mxu0
          %v2929 = vadd.f32 %v529, %v2928
          %v2930 = vpop.f32.mrb[0].mxu0
          %2931 = vmatprep.mubr.bf16.mxu0 0
          %2932 = vmatmul.mubr.bf16.gmra.mrb[0].mxu0 %v2817
          %v2933 = vpop.f32.mrb[0].mxu0
          %v2934 = vadd.f32 %v529, %v2933
          %v2935 = vpop.f32.mrb[0].mxu0
          %v2936 = vpop.f32.mrb[0].mxu0
          %v2937 = vadd.f32 %v529, %v2936
          %v2938 = vpop.f32.mrb[0].mxu0
          %2939 = vmatprep.mubr.bf16.mxu0 0
          %2940 = vmatmul.mubr.bf16.gmra.mrb[0].mxu0 %v2820
          %v2941 = vpop.f32.mrb[0].mxu0
          %v2942 = vadd.f32 %v529, %v2941
          %v2943 = vpop.f32.mrb[0].mxu0
          %v2944 = vpop.f32.mrb[0].mxu0
          %v2945 = vadd.f32 %v529, %v2944
          %v2946 = vpop.f32.mrb[0].mxu0
          %2947 = vmatprep.mubr.bf16.mxu0 0
          %2948 = vmatmul.mubr.bf16.gmra.mrb[0].mxu0 %v2823
          %v2949 = vpop.f32.mrb[0].mxu0
          %v2950 = vadd.f32 %v529, %v2949
          %v2951 = vpop.f32.mrb[0].mxu0
          %v2952 = vpop.f32.mrb[0].mxu0
          %v2953 = vadd.f32 %v529, %v2952
          %v2954 = vpop.f32.mrb[0].mxu0
          %2955 = vmatprep.mubr.bf16.mxu0 0
          %2956 = vmatmul.mubr.bf16.gmra.mrb[0].mxu0 %v2826
          %v2957 = vpop.f32.mrb[0].mxu0
          %v2958 = vadd.f32 %v529, %v2957
          %v2959 = vpop.f32.mrb[0].mxu0
          %v2960 = vpop.f32.mrb[0].mxu0
          %v2961 = vadd.f32 %v529, %v2960
          %v2962 = vpop.f32.mrb[0].mxu0
          %2963 = vmatprep.mubr.bf16.mxu0 0
          %2964 = vmatmul.mubr.bf16.gmra.mrb[0].mxu0 %v2829
          %v2965 = vpop.f32.mrb[0].mxu0
          %v2966 = vadd.f32 %v529, %v2965
          %v2967 = vpop.f32.mrb[0].mxu0
          %v2968 = vpop.f32.mrb[0].mxu0
          %v2969 = vadd.f32 %v529, %v2968
          %v2970 = vpop.f32.mrb[0].mxu0
          %2971 = vmatprep.mubr.bf16.mxu0 0
          %2972 = vmatmul.mubr.bf16.gmra.mrb[0].mxu0 %v2832
          %v2973 = vpop.f32.mrb[0].mxu0
          %v2974 = vadd.f32 %v529, %v2973
          %v2975 = vpop.f32.mrb[0].mxu0
          %v2976 = vpop.f32.mrb[0].mxu0
          %v2977 = vadd.f32 %v529, %v2976
          %v2978 = vpop.f32.mrb[0].mxu0
          %2979 = vmatprep.mubr.bf16.mxu0 0
          %2980 = vmatmul.mubr.bf16.gmra.mrb[0].mxu0 %v2835
          %v2981 = vpop.f32.mrb[0].mxu0
          %v2982 = vadd.f32 %v529, %v2981
          %v2983 = vpop.f32.mrb[0].mxu0
          %v2984 = vpop.f32.mrb[0].mxu0
          %v2985 = vadd.f32 %v529, %v2984
          %v2986 = vpop.f32.mrb[0].mxu0
          %2987 = vmatprep.mubr.bf16.mxu0 0
          %2988 = vmatmul.mubr.bf16.gmra.mrb[0].mxu0 %v2838
          %v2989 = vpop.f32.mrb[0].mxu0
          %v2990 = vadd.f32 %v529, %v2989
          %v2991 = vpop.f32.mrb[0].mxu0
          %v2992 = vpop.f32.mrb[0].mxu0
          %v2993 = vadd.f32 %v529, %v2992
          %v2994 = vpop.f32.mrb[0].mxu0
          %2995 = vmatprep.mubr.bf16.mxu0 0
          %2996 = vmatmul.mubr.bf16.gmra.mrb[0].mxu0 %v2841
          %v2997 = vpop.f32.mrb[0].mxu0
          %v2998 = vadd.f32 %v529, %v2997
          %v2999 = vpop.f32.mrb[0].mxu0
          %v3000 = vpop.f32.mrb[0].mxu0
          %v3001 = vadd.f32 %v529, %v3000
          %v3002 = vpop.f32.mrb[0].mxu0
          %3003 = vdwg.mxu0
          %v3004 = vmax.f32 %v2878, 0.0
          %v3005 = vmax.f32 %v2881, 0.0
          %v3006 = vmax.f32 %v2886, 0.0
          %v3007 = vmax.f32 %v2889, 0.0
          %v3008 = vmax.f32 %v2894, 0.0
          %v3009 = vmax.f32 %v2897, 0.0
          %v3010 = vmax.f32 %v2902, 0.0
          %v3011 = vmax.f32 %v2905, 0.0
          %v3012 = vmax.f32 %v2910, 0.0
          %v3013 = vmax.f32 %v2913, 0.0
          %v3014 = vmax.f32 %v2918, 0.0
          %v3015 = vmax.f32 %v2921, 0.0
          %v3016 = vmax.f32 %v2926, 0.0
          %v3017 = vmax.f32 %v2929, 0.0
          %v3018 = vmax.f32 %v2934, 0.0
          %v3019 = vmax.f32 %v2937, 0.0
          %v3020 = vmax.f32 %v2942, 0.0
          %v3021 = vmax.f32 %v2945, 0.0
          %v3022 = vmax.f32 %v2950, 0.0
          %v3023 = vmax.f32 %v2953, 0.0
          %v3024 = vmax.f32 %v2958, 0.0
          %v3025 = vmax.f32 %v2961, 0.0
          %v3026 = vmax.f32 %v2966, 0.0
          %v3027 = vmax.f32 %v2969, 0.0
          %v3028 = vmax.f32 %v2974, 0.0
          %v3029 = vmax.f32 %v2977, 0.0
          %v3030 = vmax.f32 %v2982, 0.0
          %v3031 = vmax.f32 %v2985, 0.0
          %v3032 = vmax.f32 %v2990, 0.0
          %v3033 = vmax.f32 %v2993, 0.0
          %v3034 = vmax.f32 %v2998, 0.0
          %v3035 = vmax.f32 %v3001, 0.0
          %v3036 = vpack.c.bf16 %v3005, %v3004
          %v3037 = vpack.c.bf16 %v3007, %v3006
          %v3038 = vpack.c.bf16 %v3009, %v3008
          %v3039 = vpack.c.bf16 %v3011, %v3010
          %v3040 = vpack.c.bf16 %v3013, %v3012
          %v3041 = vpack.c.bf16 %v3015, %v3014
          %v3042 = vpack.c.bf16 %v3017, %v3016
          %v3043 = vpack.c.bf16 %v3019, %v3018
          %v3044 = vpack.c.bf16 %v3021, %v3020
          %v3045 = vpack.c.bf16 %v3023, %v3022
          %v3046 = vpack.c.bf16 %v3025, %v3024
          %v3047 = vpack.c.bf16 %v3027, %v3026
          %v3048 = vpack.c.bf16 %v3029, %v3028
          %v3049 = vpack.c.bf16 %v3031, %v3030
          %v3050 = vpack.c.bf16 %v3033, %v3032
          %v3051 = vpack.c.bf16 %v3035, %v3034
          %3052 = vmatprep.subr.bf16.mxu0 0
          %3053 = vmatpush1.bf16.msra.mxu0 %v839
          %3054 = vmatprep.subr.bf16.mxu0 0
          %3055 = vmatpush1.bf16.msra.mxu0 %v840
          %3056 = vmatprep.subr.bf16.mxu0 0
          %3057 = vmatpush1.bf16.msra.mxu0 %v841
          %3058 = vmatprep.subr.bf16.mxu0 0
          %3059 = vmatpush1.bf16.msra.mxu0 %v842
          %3060 = vmatprep.subr.bf16.mxu0 0
          %3061 = vmatpush1.bf16.msra.mxu0 %v843
          %3062 = vmatprep.subr.bf16.mxu0 0
          %3063 = vmatpush1.bf16.msra.mxu0 %v844
          %3064 = vmatprep.subr.bf16.mxu0 0
          %3065 = vmatpush1.bf16.msra.mxu0 %v845
          %3066 = vmatprep.subr.bf16.mxu0 0
          %3067 = vmatpush1.bf16.msra.mxu0 %v846
          %3068 = vmatprep.subr.bf16.mxu0 0
          %3069 = vmatpush1.bf16.msra.mxu0 0
          %3070 = vmatprep.subr.bf16.mxu0 0
          %3071 = vmatpush1.bf16.msra.mxu0 0
          %3072 = vmatprep.subr.bf16.mxu0 0
          %3073 = vmatpush1.bf16.msra.mxu0 0
          %3074 = vmatprep.subr.bf16.mxu0 0
          %3075 = vmatpush1.bf16.msra.mxu0 0
          %3076 = vmatprep.subr.bf16.mxu0 0
          %3077 = vmatpush1.bf16.msra.mxu0 0
          %3078 = vmatprep.subr.bf16.mxu0 0
          %3079 = vmatpush1.bf16.msra.mxu0 0
          %3080 = vmatprep.subr.bf16.mxu0 0
          %3081 = vmatpush1.bf16.msra.mxu0 0
          %3082 = vmatprep.subr.bf16.mxu0 0
          %3083 = vmatpush1.bf16.msra.mxu0 0
          %3084 = vmatprep.mubr.bf16.mxu0 0
          %3085 = vmatmul.mubr.bf16.gmra.mrb[0].mxu0 %v3036
          %v3086 = vpop.f32.mrb[0].mxu0
          %v3087 = vadd.f32 %v805, %v3086
          %v3088 = vpop.f32.mrb[0].mxu0
          %v3089 = vpop.f32.mrb[0].mxu0
          %v3090 = vadd.f32 %v805, %v3089
          %v3091 = vpop.f32.mrb[0].mxu0
          %3092 = vmatprep.mubr.bf16.mxu0 0
          %3093 = vmatmul.mubr.bf16.gmra.mrb[0].mxu0 %v3037
          %v3094 = vpop.f32.mrb[0].mxu0
          %v3095 = vadd.f32 %v805, %v3094
          %v3096 = vpop.f32.mrb[0].mxu0
          %v3097 = vpop.f32.mrb[0].mxu0
          %v3098 = vadd.f32 %v805, %v3097
          %v3099 = vpop.f32.mrb[0].mxu0
          %3100 = vmatprep.mubr.bf16.mxu0 0
          %3101 = vmatmul.mubr.bf16.gmra.mrb[0].mxu0 %v3038
          %v3102 = vpop.f32.mrb[0].mxu0
          %v3103 = vadd.f32 %v805, %v3102
          %v3104 = vpop.f32.mrb[0].mxu0
          %v3105 = vpop.f32.mrb[0].mxu0
          %v3106 = vadd.f32 %v805, %v3105
          %v3107 = vpop.f32.mrb[0].mxu0
          %3108 = vmatprep.mubr.bf16.mxu0 0
          %3109 = vmatmul.mubr.bf16.gmra.mrb[0].mxu0 %v3039
          %v3110 = vpop.f32.mrb[0].mxu0
          %v3111 = vadd.f32 %v805, %v3110
          %v3112 = vpop.f32.mrb[0].mxu0
          %v3113 = vpop.f32.mrb[0].mxu0
          %v3114 = vadd.f32 %v805, %v3113
          %v3115 = vpop.f32.mrb[0].mxu0
          %3116 = vmatprep.mubr.bf16.mxu0 0
          %3117 = vmatmul.mubr.bf16.gmra.mrb[0].mxu0 %v3040
          %v3118 = vpop.f32.mrb[0].mxu0
          %v3119 = vadd.f32 %v805, %v3118
          %v3120 = vpop.f32.mrb[0].mxu0
          %v3121 = vpop.f32.mrb[0].mxu0
          %v3122 = vadd.f32 %v805, %v3121
          %v3123 = vpop.f32.mrb[0].mxu0
          %3124 = vmatprep.mubr.bf16.mxu0 0
          %3125 = vmatmul.mubr.bf16.gmra.mrb[0].mxu0 %v3041
          %v3126 = vpop.f32.mrb[0].mxu0
          %v3127 = vadd.f32 %v805, %v3126
          %v3128 = vpop.f32.mrb[0].mxu0
          %v3129 = vpop.f32.mrb[0].mxu0
          %v3130 = vadd.f32 %v805, %v3129
          %v3131 = vpop.f32.mrb[0].mxu0
          %3132 = vmatprep.mubr.bf16.mxu0 0
          %3133 = vmatmul.mubr.bf16.gmra.mrb[0].mxu0 %v3042
          %v3134 = vpop.f32.mrb[0].mxu0
          %v3135 = vadd.f32 %v805, %v3134
          %v3136 = vpop.f32.mrb[0].mxu0
          %v3137 = vpop.f32.mrb[0].mxu0
          %v3138 = vadd.f32 %v805, %v3137
          %v3139 = vpop.f32.mrb[0].mxu0
          %3140 = vmatprep.mubr.bf16.mxu0 0
          %3141 = vmatmul.mubr.bf16.gmra.mrb[0].mxu0 %v3043
          %v3142 = vpop.f32.mrb[0].mxu0
          %v3143 = vadd.f32 %v805, %v3142
          %v3144 = vpop.f32.mrb[0].mxu0
          %v3145 = vpop.f32.mrb[0].mxu0
          %v3146 = vadd.f32 %v805, %v3145
          %v3147 = vpop.f32.mrb[0].mxu0
          %3148 = vmatprep.mubr.bf16.mxu0 0
          %3149 = vmatmul.mubr.bf16.gmra.mrb[0].mxu0 %v3044
          %v3150 = vpop.f32.mrb[0].mxu0
          %v3151 = vadd.f32 %v805, %v3150
          %v3152 = vpop.f32.mrb[0].mxu0
          %v3153 = vpop.f32.mrb[0].mxu0
          %v3154 = vadd.f32 %v805, %v3153
          %v3155 = vpop.f32.mrb[0].mxu0
          %3156 = vmatprep.mubr.bf16.mxu0 0
          %3157 = vmatmul.mubr.bf16.gmra.mrb[0].mxu0 %v3045
          %v3158 = vpop.f32.mrb[0].mxu0
          %v3159 = vadd.f32 %v805, %v3158
          %v3160 = vpop.f32.mrb[0].mxu0
          %v3161 = vpop.f32.mrb[0].mxu0
          %v3162 = vadd.f32 %v805, %v3161
          %v3163 = vpop.f32.mrb[0].mxu0
          %3164 = vmatprep.mubr.bf16.mxu0 0
          %3165 = vmatmul.mubr.bf16.gmra.mrb[0].mxu0 %v3046
          %v3166 = vpop.f32.mrb[0].mxu0
          %v3167 = vadd.f32 %v805, %v3166
          %v3168 = vpop.f32.mrb[0].mxu0
          %v3169 = vpop.f32.mrb[0].mxu0
          %v3170 = vadd.f32 %v805, %v3169
          %v3171 = vpop.f32.mrb[0].mxu0
          %3172 = vmatprep.mubr.bf16.mxu0 0
          %3173 = vmatmul.mubr.bf16.gmra.mrb[0].mxu0 %v3047
          %v3174 = vpop.f32.mrb[0].mxu0
          %v3175 = vadd.f32 %v805, %v3174
          %v3176 = vpop.f32.mrb[0].mxu0
          %v3177 = vpop.f32.mrb[0].mxu0
          %v3178 = vadd.f32 %v805, %v3177
          %v3179 = vpop.f32.mrb[0].mxu0
          %3180 = vmatprep.mubr.bf16.mxu0 0
          %3181 = vmatmul.mubr.bf16.gmra.mrb[0].mxu0 %v3048
          %v3182 = vpop.f32.mrb[0].mxu0
          %v3183 = vadd.f32 %v805, %v3182
          %v3184 = vpop.f32.mrb[0].mxu0
          %v3185 = vpop.f32.mrb[0].mxu0
          %v3186 = vadd.f32 %v805, %v3185
          %v3187 = vpop.f32.mrb[0].mxu0
          %3188 = vmatprep.mubr.bf16.mxu0 0
          %3189 = vmatmul.mubr.bf16.gmra.mrb[0].mxu0 %v3049
          %v3190 = vpop.f32.mrb[0].mxu0
          %v3191 = vadd.f32 %v805, %v3190
          %v3192 = vpop.f32.mrb[0].mxu0
          %v3193 = vpop.f32.mrb[0].mxu0
          %v3194 = vadd.f32 %v805, %v3193
          %v3195 = vpop.f32.mrb[0].mxu0
          %3196 = vmatprep.mubr.bf16.mxu0 0
          %3197 = vmatmul.mubr.bf16.gmra.mrb[0].mxu0 %v3050
          %v3198 = vpop.f32.mrb[0].mxu0
          %v3199 = vadd.f32 %v805, %v3198
          %v3200 = vpop.f32.mrb[0].mxu0
          %v3201 = vpop.f32.mrb[0].mxu0
          %v3202 = vadd.f32 %v805, %v3201
          %v3203 = vpop.f32.mrb[0].mxu0
          %3204 = vmatprep.mubr.bf16.mxu0 0
          %3205 = vmatmul.mubr.bf16.gmra.mrb[0].mxu0 %v3051
          %v3206 = vpop.f32.mrb[0].mxu0
          %v3207 = vadd.f32 %v805, %v3206
          %v3208 = vpop.f32.mrb[0].mxu0
          %v3209 = vpop.f32.mrb[0].mxu0
          %v3210 = vadd.f32 %v805, %v3209
          %v3211 = vpop.f32.mrb[0].mxu0
          %3212 = vdwg.mxu0
          %v3213 = vmax.f32 %v3087, 0.0
          %v3214 = vmax.f32 %v3090, 0.0
          %v3215 = vmax.f32 %v3095, 0.0
          %v3216 = vmax.f32 %v3098, 0.0
          %v3217 = vmax.f32 %v3103, 0.0
          %v3218 = vmax.f32 %v3106, 0.0
          %v3219 = vmax.f32 %v3111, 0.0
          %v3220 = vmax.f32 %v3114, 0.0
          %v3221 = vmax.f32 %v3119, 0.0
          %v3222 = vmax.f32 %v3122, 0.0
          %v3223 = vmax.f32 %v3127, 0.0
          %v3224 = vmax.f32 %v3130, 0.0
          %v3225 = vmax.f32 %v3135, 0.0
          %v3226 = vmax.f32 %v3138, 0.0
          %v3227 = vmax.f32 %v3143, 0.0
          %v3228 = vmax.f32 %v3146, 0.0
          %v3229 = vmax.f32 %v3151, 0.0
          %v3230 = vmax.f32 %v3154, 0.0
          %v3231 = vmax.f32 %v3159, 0.0
          %v3232 = vmax.f32 %v3162, 0.0
          %v3233 = vmax.f32 %v3167, 0.0
          %v3234 = vmax.f32 %v3170, 0.0
          %v3235 = vmax.f32 %v3175, 0.0
          %v3236 = vmax.f32 %v3178, 0.0
          %v3237 = vmax.f32 %v3183, 0.0
          %v3238 = vmax.f32 %v3186, 0.0
          %v3239 = vmax.f32 %v3191, 0.0
          %v3240 = vmax.f32 %v3194, 0.0
          %v3241 = vmax.f32 %v3199, 0.0
          %v3242 = vmax.f32 %v3202, 0.0
          %v3243 = vmax.f32 %v3207, 0.0
          %v3244 = vmax.f32 %v3210, 0.0
          %v3245 = vadd.f32 %v3213, %v3004
          %v3246 = vadd.f32 %v3214, %v3005
          %v3247 = vadd.f32 %v3215, %v3006
          %v3248 = vadd.f32 %v3216, %v3007
          %v3249 = vadd.f32 %v3217, %v3008
          %v3250 = vadd.f32 %v3218, %v3009
          %v3251 = vadd.f32 %v3219, %v3010
          %v3252 = vadd.f32 %v3220, %v3011
          %v3253 = vadd.f32 %v3221, %v3012
          %v3254 = vadd.f32 %v3222, %v3013
          %v3255 = vadd.f32 %v3223, %v3014
          %v3256 = vadd.f32 %v3224, %v3015
          %v3257 = vadd.f32 %v3225, %v3016
          %v3258 = vadd.f32 %v3226, %v3017
          %v3259 = vadd.f32 %v3227, %v3018
          %v3260 = vadd.f32 %v3228, %v3019
          %v3261 = vadd.f32 %v3229, %v3020
          %v3262 = vadd.f32 %v3230, %v3021
          %v3263 = vadd.f32 %v3231, %v3022
          %v3264 = vadd.f32 %v3232, %v3023
          %v3265 = vadd.f32 %v3233, %v3024
          %v3266 = vadd.f32 %v3234, %v3025
          %v3267 = vadd.f32 %v3235, %v3026
          %v3268 = vadd.f32 %v3236, %v3027
          %v3269 = vadd.f32 %v3237, %v3028
          %v3270 = vadd.f32 %v3238, %v3029
          %v3271 = vadd.f32 %v3239, %v3030
          %v3272 = vadd.f32 %v3240, %v3031
          %v3273 = vadd.f32 %v3241, %v3032
          %v3274 = vadd.f32 %v3242, %v3033
          %v3275 = vadd.f32 %v3243, %v3034
          %v3276 = vadd.f32 %v3244, %v3035
          %v3277 = vpack.c.bf16 %v3246, %v3245
          %v3278 = vpack.c.bf16 %v3248, %v3247
          %v3279 = vpack.c.bf16 %v3250, %v3249
          %v3280 = vpack.c.bf16 %v3252, %v3251
          %v3281 = vpack.c.bf16 %v3254, %v3253
          %v3282 = vpack.c.bf16 %v3256, %v3255
          %v3283 = vpack.c.bf16 %v3258, %v3257
          %v3284 = vpack.c.bf16 %v3260, %v3259
          %v3285 = vpack.c.bf16 %v3262, %v3261
          %v3286 = vpack.c.bf16 %v3264, %v3263
          %v3287 = vpack.c.bf16 %v3266, %v3265
          %v3288 = vpack.c.bf16 %v3268, %v3267
          %v3289 = vpack.c.bf16 %v3270, %v3269
          %v3290 = vpack.c.bf16 %v3272, %v3271
          %v3291 = vpack.c.bf16 %v3274, %v3273
          %v3292 = vpack.c.bf16 %v3276, %v3275
          %3293 = vmatprep.subr.bf16.mxu0 0
          %3294 = vmatpush1.bf16.msra.mxu0 %v1134
          %3295 = vmatprep.subr.bf16.mxu0 0
          %3296 = vmatpush1.bf16.msra.mxu0 %v1135
          %3297 = vmatprep.subr.bf16.mxu0 0
          %3298 = vmatpush1.bf16.msra.mxu0 %v1136
          %3299 = vmatprep.subr.bf16.mxu0 0
          %3300 = vmatpush1.bf16.msra.mxu0 %v1137
          %3301 = vmatprep.subr.bf16.mxu0 0
          %3302 = vmatpush1.bf16.msra.mxu0 %v1138
          %3303 = vmatprep.subr.bf16.mxu0 0
          %3304 = vmatpush1.bf16.msra.mxu0 %v1139
          %3305 = vmatprep.subr.bf16.mxu0 0
          %3306 = vmatpush1.bf16.msra.mxu0 %v1140
          %3307 = vmatprep.subr.bf16.mxu0 0
          %3308 = vmatpush1.bf16.msra.mxu0 %v1141
          %3309 = vmatprep.subr.bf16.mxu0 0
          %3310 = vmatpush1.bf16.msra.mxu0 0
          %3311 = vmatprep.subr.bf16.mxu0 0
          %3312 = vmatpush1.bf16.msra.mxu0 0
          %3313 = vmatprep.subr.bf16.mxu0 0
          %3314 = vmatpush1.bf16.msra.mxu0 0
          %3315 = vmatprep.subr.bf16.mxu0 0
          %3316 = vmatpush1.bf16.msra.mxu0 0
          %3317 = vmatprep.subr.bf16.mxu0 0
          %3318 = vmatpush1.bf16.msra.mxu0 0
          %3319 = vmatprep.subr.bf16.mxu0 0
          %3320 = vmatpush1.bf16.msra.mxu0 0
          %3321 = vmatprep.subr.bf16.mxu0 0
          %3322 = vmatpush1.bf16.msra.mxu0 0
          %3323 = vmatprep.subr.bf16.mxu0 0
          %3324 = vmatpush1.bf16.msra.mxu0 0
          %3325 = vmatprep.mubr.bf16.mxu0 0
          %3326 = vmatmul.mubr.bf16.gmra.mrb[0].mxu0 %v3277
          %v3327 = vpop.f32.mrb[0].mxu0
          %v3328 = vadd.f32 %v1100, %v3327
          %v3329 = vpop.f32.mrb[0].mxu0
          %v3330 = vpop.f32.mrb[0].mxu0
          %v3331 = vadd.f32 %v1100, %v3330
          %v3332 = vpop.f32.mrb[0].mxu0
          %3333 = vmatprep.mubr.bf16.mxu0 0
          %3334 = vmatmul.mubr.bf16.gmra.mrb[0].mxu0 %v3278
          %v3335 = vpop.f32.mrb[0].mxu0
          %v3336 = vadd.f32 %v1100, %v3335
          %v3337 = vpop.f32.mrb[0].mxu0
          %v3338 = vpop.f32.mrb[0].mxu0
          %v3339 = vadd.f32 %v1100, %v3338
          %v3340 = vpop.f32.mrb[0].mxu0
          %3341 = vmatprep.mubr.bf16.mxu0 0
          %3342 = vmatmul.mubr.bf16.gmra.mrb[0].mxu0 %v3279
          %v3343 = vpop.f32.mrb[0].mxu0
          %v3344 = vadd.f32 %v1100, %v3343
          %v3345 = vpop.f32.mrb[0].mxu0
          %v3346 = vpop.f32.mrb[0].mxu0
          %v3347 = vadd.f32 %v1100, %v3346
          %v3348 = vpop.f32.mrb[0].mxu0
          %3349 = vmatprep.mubr.bf16.mxu0 0
          %3350 = vmatmul.mubr.bf16.gmra.mrb[0].mxu0 %v3280
          %v3351 = vpop.f32.mrb[0].mxu0
          %v3352 = vadd.f32 %v1100, %v3351
          %v3353 = vpop.f32.mrb[0].mxu0
          %v3354 = vpop.f32.mrb[0].mxu0
          %v3355 = vadd.f32 %v1100, %v3354
          %v3356 = vpop.f32.mrb[0].mxu0
          %3357 = vmatprep.mubr.bf16.mxu0 0
          %3358 = vmatmul.mubr.bf16.gmra.mrb[0].mxu0 %v3281
          %v3359 = vpop.f32.mrb[0].mxu0
          %v3360 = vadd.f32 %v1100, %v3359
          %v3361 = vpop.f32.mrb[0].mxu0
          %v3362 = vpop.f32.mrb[0].mxu0
          %v3363 = vadd.f32 %v1100, %v3362
          %v3364 = vpop.f32.mrb[0].mxu0
          %3365 = vmatprep.mubr.bf16.mxu0 0
          %3366 = vmatmul.mubr.bf16.gmra.mrb[0].mxu0 %v3282
          %v3367 = vpop.f32.mrb[0].mxu0
          %v3368 = vadd.f32 %v1100, %v3367
          %v3369 = vpop.f32.mrb[0].mxu0
          %v3370 = vpop.f32.mrb[0].mxu0
          %v3371 = vadd.f32 %v1100, %v3370
          %v3372 = vpop.f32.mrb[0].mxu0
          %3373 = vmatprep.mubr.bf16.mxu0 0
          %3374 = vmatmul.mubr.bf16.gmra.mrb[0].mxu0 %v3283
          %v3375 = vpop.f32.mrb[0].mxu0
          %v3376 = vadd.f32 %v1100, %v3375
          %v3377 = vpop.f32.mrb[0].mxu0
          %v3378 = vpop.f32.mrb[0].mxu0
          %v3379 = vadd.f32 %v1100, %v3378
          %v3380 = vpop.f32.mrb[0].mxu0
          %3381 = vmatprep.mubr.bf16.mxu0 0
          %3382 = vmatmul.mubr.bf16.gmra.mrb[0].mxu0 %v3284
          %v3383 = vpop.f32.mrb[0].mxu0
          %v3384 = vadd.f32 %v1100, %v3383
          %v3385 = vpop.f32.mrb[0].mxu0
          %v3386 = vpop.f32.mrb[0].mxu0
          %v3387 = vadd.f32 %v1100, %v3386
          %v3388 = vpop.f32.mrb[0].mxu0
          %3389 = vmatprep.mubr.bf16.mxu0 0
          %3390 = vmatmul.mubr.bf16.gmra.mrb[0].mxu0 %v3285
          %v3391 = vpop.f32.mrb[0].mxu0
          %v3392 = vadd.f32 %v1100, %v3391
          %v3393 = vpop.f32.mrb[0].mxu0
          %v3394 = vpop.f32.mrb[0].mxu0
          %v3395 = vadd.f32 %v1100, %v3394
          %v3396 = vpop.f32.mrb[0].mxu0
          %3397 = vmatprep.mubr.bf16.mxu0 0
          %3398 = vmatmul.mubr.bf16.gmra.mrb[0].mxu0 %v3286
          %v3399 = vpop.f32.mrb[0].mxu0
          %v3400 = vadd.f32 %v1100, %v3399
          %v3401 = vpop.f32.mrb[0].mxu0
          %v3402 = vpop.f32.mrb[0].mxu0
          %v3403 = vadd.f32 %v1100, %v3402
          %v3404 = vpop.f32.mrb[0].mxu0
          %3405 = vmatprep.mubr.bf16.mxu0 0
          %3406 = vmatmul.mubr.bf16.gmra.mrb[0].mxu0 %v3287
          %v3407 = vpop.f32.mrb[0].mxu0
          %v3408 = vadd.f32 %v1100, %v3407
          %v3409 = vpop.f32.mrb[0].mxu0
          %v3410 = vpop.f32.mrb[0].mxu0
          %v3411 = vadd.f32 %v1100, %v3410
          %v3412 = vpop.f32.mrb[0].mxu0
          %3413 = vmatprep.mubr.bf16.mxu0 0
          %3414 = vmatmul.mubr.bf16.gmra.mrb[0].mxu0 %v3288
          %v3415 = vpop.f32.mrb[0].mxu0
          %v3416 = vadd.f32 %v1100, %v3415
          %v3417 = vpop.f32.mrb[0].mxu0
          %v3418 = vpop.f32.mrb[0].mxu0
          %v3419 = vadd.f32 %v1100, %v3418
          %v3420 = vpop.f32.mrb[0].mxu0
          %3421 = vmatprep.mubr.bf16.mxu0 0
          %3422 = vmatmul.mubr.bf16.gmra.mrb[0].mxu0 %v3289
          %v3423 = vpop.f32.mrb[0].mxu0
          %v3424 = vadd.f32 %v1100, %v3423
          %v3425 = vpop.f32.mrb[0].mxu0
          %v3426 = vpop.f32.mrb[0].mxu0
          %v3427 = vadd.f32 %v1100, %v3426
          %v3428 = vpop.f32.mrb[0].mxu0
          %3429 = vmatprep.mubr.bf16.mxu0 0
          %3430 = vmatmul.mubr.bf16.gmra.mrb[0].mxu0 %v3290
          %v3431 = vpop.f32.mrb[0].mxu0
          %v3432 = vadd.f32 %v1100, %v3431
          %v3433 = vpop.f32.mrb[0].mxu0
          %v3434 = vpop.f32.mrb[0].mxu0
          %v3435 = vadd.f32 %v1100, %v3434
          %v3436 = vpop.f32.mrb[0].mxu0
          %3437 = vmatprep.mubr.bf16.mxu0 0
          %3438 = vmatmul.mubr.bf16.gmra.mrb[0].mxu0 %v3291
          %v3439 = vpop.f32.mrb[0].mxu0
          %v3440 = vadd.f32 %v1100, %v3439
          %v3441 = vpop.f32.mrb[0].mxu0
          %v3442 = vpop.f32.mrb[0].mxu0
          %v3443 = vadd.f32 %v1100, %v3442
          %v3444 = vpop.f32.mrb[0].mxu0
          %3445 = vmatprep.mubr.bf16.mxu0 0
          %3446 = vmatmul.mubr.bf16.gmra.mrb[0].mxu0 %v3292
          %v3447 = vpop.f32.mrb[0].mxu0
          %v3448 = vadd.f32 %v1100, %v3447
          %v3449 = vpop.f32.mrb[0].mxu0
          %v3450 = vpop.f32.mrb[0].mxu0
          %v3451 = vadd.f32 %v1100, %v3450
          %v3452 = vpop.f32.mrb[0].mxu0
          %3453 = vdwg.mxu0
          %v3454 = vmax.f32 %v3328, 0.0
          %v3455 = vmax.f32 %v3331, 0.0
          %v3456 = vmax.f32 %v3336, 0.0
          %v3457 = vmax.f32 %v3339, 0.0
          %v3458 = vmax.f32 %v3344, 0.0
          %v3459 = vmax.f32 %v3347, 0.0
          %v3460 = vmax.f32 %v3352, 0.0
          %v3461 = vmax.f32 %v3355, 0.0
          %v3462 = vmax.f32 %v3360, 0.0
          %v3463 = vmax.f32 %v3363, 0.0
          %v3464 = vmax.f32 %v3368, 0.0
          %v3465 = vmax.f32 %v3371, 0.0
          %v3466 = vmax.f32 %v3376, 0.0
          %v3467 = vmax.f32 %v3379, 0.0
          %v3468 = vmax.f32 %v3384, 0.0
          %v3469 = vmax.f32 %v3387, 0.0
          %v3470 = vmax.f32 %v3392, 0.0
          %v3471 = vmax.f32 %v3395, 0.0
          %v3472 = vmax.f32 %v3400, 0.0
          %v3473 = vmax.f32 %v3403, 0.0
          %v3474 = vmax.f32 %v3408, 0.0
          %v3475 = vmax.f32 %v3411, 0.0
          %v3476 = vmax.f32 %v3416, 0.0
          %v3477 = vmax.f32 %v3419, 0.0
          %v3478 = vmax.f32 %v3424, 0.0
          %v3479 = vmax.f32 %v3427, 0.0
          %v3480 = vmax.f32 %v3432, 0.0
          %v3481 = vmax.f32 %v3435, 0.0
          %v3482 = vmax.f32 %v3440, 0.0
          %v3483 = vmax.f32 %v3443, 0.0
          %v3484 = vmax.f32 %v3448, 0.0
          %v3485 = vmax.f32 %v3451, 0.0
          %v3486 = vadd.f32 %v3454, %v3245
          %v3487 = vadd.f32 %v3455, %v3246
          %v3488 = vadd.f32 %v3456, %v3247
          %v3489 = vadd.f32 %v3457, %v3248
          %v3490 = vadd.f32 %v3458, %v3249
          %v3491 = vadd.f32 %v3459, %v3250
          %v3492 = vadd.f32 %v3460, %v3251
          %v3493 = vadd.f32 %v3461, %v3252
          %v3494 = vadd.f32 %v3462, %v3253
          %v3495 = vadd.f32 %v3463, %v3254
          %v3496 = vadd.f32 %v3464, %v3255
          %v3497 = vadd.f32 %v3465, %v3256
          %v3498 = vadd.f32 %v3466, %v3257
          %v3499 = vadd.f32 %v3467, %v3258
          %v3500 = vadd.f32 %v3468, %v3259
          %v3501 = vadd.f32 %v3469, %v3260
          %v3502 = vadd.f32 %v3470, %v3261
          %v3503 = vadd.f32 %v3471, %v3262
          %v3504 = vadd.f32 %v3472, %v3263
          %v3505 = vadd.f32 %v3473, %v3264
          %v3506 = vadd.f32 %v3474, %v3265
          %v3507 = vadd.f32 %v3475, %v3266
          %v3508 = vadd.f32 %v3476, %v3267
          %v3509 = vadd.f32 %v3477, %v3268
          %v3510 = vadd.f32 %v3478, %v3269
          %v3511 = vadd.f32 %v3479, %v3270
          %v3512 = vadd.f32 %v3480, %v3271
          %v3513 = vadd.f32 %v3481, %v3272
          %v3514 = vadd.f32 %v3482, %v3273
          %v3515 = vadd.f32 %v3483, %v3274
          %v3516 = vadd.f32 %v3484, %v3275
          %v3517 = vadd.f32 %v3485, %v3276
          %v3518 = vpack.c.bf16 %v3487, %v3486
          %v3519 = vpack.c.bf16 %v3489, %v3488
          %v3520 = vpack.c.bf16 %v3491, %v3490
          %v3521 = vpack.c.bf16 %v3493, %v3492
          %v3522 = vpack.c.bf16 %v3495, %v3494
          %v3523 = vpack.c.bf16 %v3497, %v3496
          %v3524 = vpack.c.bf16 %v3499, %v3498
          %v3525 = vpack.c.bf16 %v3501, %v3500
          %v3526 = vpack.c.bf16 %v3503, %v3502
          %v3527 = vpack.c.bf16 %v3505, %v3504
          %v3528 = vpack.c.bf16 %v3507, %v3506
          %v3529 = vpack.c.bf16 %v3509, %v3508
          %v3530 = vpack.c.bf16 %v3511, %v3510
          %v3531 = vpack.c.bf16 %v3513, %v3512
          %v3532 = vpack.c.bf16 %v3515, %v3514
          %v3533 = vpack.c.bf16 %v3517, %v3516
          %3534 = vmatprep.subr.bf16.mxu0 0
          %3535 = vmatpush1.bf16.msra.mxu0 %v1429
          %3536 = vmatprep.subr.bf16.mxu0 0
          %3537 = vmatpush1.bf16.msra.mxu0 %v1430
          %3538 = vmatprep.subr.bf16.mxu0 0
          %3539 = vmatpush1.bf16.msra.mxu0 %v1431
          %3540 = vmatprep.subr.bf16.mxu0 0
          %3541 = vmatpush1.bf16.msra.mxu0 %v1432
          %3542 = vmatprep.subr.bf16.mxu0 0
          %3543 = vmatpush1.bf16.msra.mxu0 %v1433
          %3544 = vmatprep.subr.bf16.mxu0 0
          %3545 = vmatpush1.bf16.msra.mxu0 %v1434
          %3546 = vmatprep.subr.bf16.mxu0 0
          %3547 = vmatpush1.bf16.msra.mxu0 %v1435
          %3548 = vmatprep.subr.bf16.mxu0 0
          %3549 = vmatpush1.bf16.msra.mxu0 %v1436
          %3550 = vmatprep.subr.bf16.mxu0 0
          %3551 = vmatpush1.bf16.msra.mxu0 0
          %3552 = vmatprep.subr.bf16.mxu0 0
          %3553 = vmatpush1.bf16.msra.mxu0 0
          %3554 = vmatprep.subr.bf16.mxu0 0
          %3555 = vmatpush1.bf16.msra.mxu0 0
          %3556 = vmatprep.subr.bf16.mxu0 0
          %3557 = vmatpush1.bf16.msra.mxu0 0
          %3558 = vmatprep.subr.bf16.mxu0 0
          %3559 = vmatpush1.bf16.msra.mxu0 0
          %3560 = vmatprep.subr.bf16.mxu0 0
          %3561 = vmatpush1.bf16.msra.mxu0 0
          %3562 = vmatprep.subr.bf16.mxu0 0
          %3563 = vmatpush1.bf16.msra.mxu0 0
          %3564 = vmatprep.subr.bf16.mxu0 0
          %3565 = vmatpush1.bf16.msra.mxu0 0
          %3566 = vmatprep.mubr.bf16.mxu0 0
          %3567 = vmatmul.mubr.bf16.gmra.mrb[0].mxu0 %v3518
          %v3568 = vpop.f32.mrb[0].mxu0
          %v3569 = vadd.f32 %v1395, %v3568
          %v3570 = vpop.f32.mrb[0].mxu0
          %v3571 = vpop.f32.mrb[0].mxu0
          %v3572 = vadd.f32 %v1395, %v3571
          %v3573 = vpop.f32.mrb[0].mxu0
          %3574 = vmatprep.mubr.bf16.mxu0 0
          %3575 = vmatmul.mubr.bf16.gmra.mrb[0].mxu0 %v3519
          %v3576 = vpop.f32.mrb[0].mxu0
          %v3577 = vadd.f32 %v1395, %v3576
          %v3578 = vpop.f32.mrb[0].mxu0
          %v3579 = vpop.f32.mrb[0].mxu0
          %v3580 = vadd.f32 %v1395, %v3579
          %v3581 = vpop.f32.mrb[0].mxu0
          %3582 = vmatprep.mubr.bf16.mxu0 0
          %3583 = vmatmul.mubr.bf16.gmra.mrb[0].mxu0 %v3520
          %v3584 = vpop.f32.mrb[0].mxu0
          %v3585 = vadd.f32 %v1395, %v3584
          %v3586 = vpop.f32.mrb[0].mxu0
          %v3587 = vpop.f32.mrb[0].mxu0
          %v3588 = vadd.f32 %v1395, %v3587
          %v3589 = vpop.f32.mrb[0].mxu0
          %3590 = vmatprep.mubr.bf16.mxu0 0
          %3591 = vmatmul.mubr.bf16.gmra.mrb[0].mxu0 %v3521
          %v3592 = vpop.f32.mrb[0].mxu0
          %v3593 = vadd.f32 %v1395, %v3592
          %v3594 = vpop.f32.mrb[0].mxu0
          %v3595 = vpop.f32.mrb[0].mxu0
          %v3596 = vadd.f32 %v1395, %v3595
          %v3597 = vpop.f32.mrb[0].mxu0
          %3598 = vmatprep.mubr.bf16.mxu0 0
          %3599 = vmatmul.mubr.bf16.gmra.mrb[0].mxu0 %v3522
          %v3600 = vpop.f32.mrb[0].mxu0
          %v3601 = vadd.f32 %v1395, %v3600
          %v3602 = vpop.f32.mrb[0].mxu0
          %v3603 = vpop.f32.mrb[0].mxu0
          %v3604 = vadd.f32 %v1395, %v3603
          %v3605 = vpop.f32.mrb[0].mxu0
          %3606 = vmatprep.mubr.bf16.mxu0 0
          %3607 = vmatmul.mubr.bf16.gmra.mrb[0].mxu0 %v3523
          %v3608 = vpop.f32.mrb[0].mxu0
          %v3609 = vadd.f32 %v1395, %v3608
          %v3610 = vpop.f32.mrb[0].mxu0
          %v3611 = vpop.f32.mrb[0].mxu0
          %v3612 = vadd.f32 %v1395, %v3611
          %v3613 = vpop.f32.mrb[0].mxu0
          %3614 = vmatprep.mubr.bf16.mxu0 0
          %3615 = vmatmul.mubr.bf16.gmra.mrb[0].mxu0 %v3524
          %v3616 = vpop.f32.mrb[0].mxu0
          %v3617 = vadd.f32 %v1395, %v3616
          %v3618 = vpop.f32.mrb[0].mxu0
          %v3619 = vpop.f32.mrb[0].mxu0
          %v3620 = vadd.f32 %v1395, %v3619
          %v3621 = vpop.f32.mrb[0].mxu0
          %3622 = vmatprep.mubr.bf16.mxu0 0
          %3623 = vmatmul.mubr.bf16.gmra.mrb[0].mxu0 %v3525
          %v3624 = vpop.f32.mrb[0].mxu0
          %v3625 = vadd.f32 %v1395, %v3624
          %v3626 = vpop.f32.mrb[0].mxu0
          %v3627 = vpop.f32.mrb[0].mxu0
          %v3628 = vadd.f32 %v1395, %v3627
          %v3629 = vpop.f32.mrb[0].mxu0
          %3630 = vmatprep.mubr.bf16.mxu0 0
          %3631 = vmatmul.mubr.bf16.gmra.mrb[0].mxu0 %v3526
          %v3632 = vpop.f32.mrb[0].mxu0
          %v3633 = vadd.f32 %v1395, %v3632
          %v3634 = vpop.f32.mrb[0].mxu0
          %v3635 = vpop.f32.mrb[0].mxu0
          %v3636 = vadd.f32 %v1395, %v3635
          %v3637 = vpop.f32.mrb[0].mxu0
          %3638 = vmatprep.mubr.bf16.mxu0 0
          %3639 = vmatmul.mubr.bf16.gmra.mrb[0].mxu0 %v3527
          %v3640 = vpop.f32.mrb[0].mxu0
          %v3641 = vadd.f32 %v1395, %v3640
          %v3642 = vpop.f32.mrb[0].mxu0
          %v3643 = vpop.f32.mrb[0].mxu0
          %v3644 = vadd.f32 %v1395, %v3643
          %v3645 = vpop.f32.mrb[0].mxu0
          %3646 = vmatprep.mubr.bf16.mxu0 0
          %3647 = vmatmul.mubr.bf16.gmra.mrb[0].mxu0 %v3528
          %v3648 = vpop.f32.mrb[0].mxu0
          %v3649 = vadd.f32 %v1395, %v3648
          %v3650 = vpop.f32.mrb[0].mxu0
          %v3651 = vpop.f32.mrb[0].mxu0
          %v3652 = vadd.f32 %v1395, %v3651
          %v3653 = vpop.f32.mrb[0].mxu0
          %3654 = vmatprep.mubr.bf16.mxu0 0
          %3655 = vmatmul.mubr.bf16.gmra.mrb[0].mxu0 %v3529
          %v3656 = vpop.f32.mrb[0].mxu0
          %v3657 = vadd.f32 %v1395, %v3656
          %v3658 = vpop.f32.mrb[0].mxu0
          %v3659 = vpop.f32.mrb[0].mxu0
          %v3660 = vadd.f32 %v1395, %v3659
          %v3661 = vpop.f32.mrb[0].mxu0
          %3662 = vmatprep.mubr.bf16.mxu0 0
          %3663 = vmatmul.mubr.bf16.gmra.mrb[0].mxu0 %v3530
          %v3664 = vpop.f32.mrb[0].mxu0
          %v3665 = vadd.f32 %v1395, %v3664
          %v3666 = vpop.f32.mrb[0].mxu0
          %v3667 = vpop.f32.mrb[0].mxu0
          %v3668 = vadd.f32 %v1395, %v3667
          %v3669 = vpop.f32.mrb[0].mxu0
          %3670 = vmatprep.mubr.bf16.mxu0 0
          %3671 = vmatmul.mubr.bf16.gmra.mrb[0].mxu0 %v3531
          %v3672 = vpop.f32.mrb[0].mxu0
          %v3673 = vadd.f32 %v1395, %v3672
          %v3674 = vpop.f32.mrb[0].mxu0
          %v3675 = vpop.f32.mrb[0].mxu0
          %v3676 = vadd.f32 %v1395, %v3675
          %v3677 = vpop.f32.mrb[0].mxu0
          %3678 = vmatprep.mubr.bf16.mxu0 0
          %3679 = vmatmul.mubr.bf16.gmra.mrb[0].mxu0 %v3532
          %v3680 = vpop.f32.mrb[0].mxu0
          %v3681 = vadd.f32 %v1395, %v3680
          %v3682 = vpop.f32.mrb[0].mxu0
          %v3683 = vpop.f32.mrb[0].mxu0
          %v3684 = vadd.f32 %v1395, %v3683
          %v3685 = vpop.f32.mrb[0].mxu0
          %3686 = vmatprep.mubr.bf16.mxu0 0
          %3687 = vmatmul.mubr.bf16.gmra.mrb[0].mxu0 %v3533
          %v3688 = vpop.f32.mrb[0].mxu0
          %v3689 = vadd.f32 %v1395, %v3688
          %v3690 = vpop.f32.mrb[0].mxu0
          %v3691 = vpop.f32.mrb[0].mxu0
          %v3692 = vadd.f32 %v1395, %v3691
          %v3693 = vpop.f32.mrb[0].mxu0
          %3694 = vdwg.mxu0
          %v3695 = vmax.f32 %v3569, 0.0
          %v3696 = vmax.f32 %v3572, 0.0
          %v3697 = vmax.f32 %v3577, 0.0
          %v3698 = vmax.f32 %v3580, 0.0
          %v3699 = vmax.f32 %v3585, 0.0
          %v3700 = vmax.f32 %v3588, 0.0
          %v3701 = vmax.f32 %v3593, 0.0
          %v3702 = vmax.f32 %v3596, 0.0
          %v3703 = vmax.f32 %v3601, 0.0
          %v3704 = vmax.f32 %v3604, 0.0
          %v3705 = vmax.f32 %v3609, 0.0
          %v3706 = vmax.f32 %v3612, 0.0
          %v3707 = vmax.f32 %v3617, 0.0
          %v3708 = vmax.f32 %v3620, 0.0
          %v3709 = vmax.f32 %v3625, 0.0
          %v3710 = vmax.f32 %v3628, 0.0
          %v3711 = vmax.f32 %v3633, 0.0
          %v3712 = vmax.f32 %v3636, 0.0
          %v3713 = vmax.f32 %v3641, 0.0
          %v3714 = vmax.f32 %v3644, 0.0
          %v3715 = vmax.f32 %v3649, 0.0
          %v3716 = vmax.f32 %v3652, 0.0
          %v3717 = vmax.f32 %v3657, 0.0
          %v3718 = vmax.f32 %v3660, 0.0
          %v3719 = vmax.f32 %v3665, 0.0
          %v3720 = vmax.f32 %v3668, 0.0
          %v3721 = vmax.f32 %v3673, 0.0
          %v3722 = vmax.f32 %v3676, 0.0
          %v3723 = vmax.f32 %v3681, 0.0
          %v3724 = vmax.f32 %v3684, 0.0
          %v3725 = vmax.f32 %v3689, 0.0
          %v3726 = vmax.f32 %v3692, 0.0
          %v3727 = vmul.f32 %v3695, 2.0
          %v3728 = vmul.f32 %v3696, 2.0
          %v3729 = vmul.f32 %v3697, 2.0
          %v3730 = vmul.f32 %v3698, 2.0
          %v3731 = vmul.f32 %v3699, 2.0
          %v3732 = vmul.f32 %v3700, 2.0
          %v3733 = vmul.f32 %v3701, 2.0
          %v3734 = vmul.f32 %v3702, 2.0
          %v3735 = vmul.f32 %v3703, 2.0
          %v3736 = vmul.f32 %v3704, 2.0
          %v3737 = vmul.f32 %v3705, 2.0
          %v3738 = vmul.f32 %v3706, 2.0
          %v3739 = vmul.f32 %v3707, 2.0
          %v3740 = vmul.f32 %v3708, 2.0
          %v3741 = vmul.f32 %v3709, 2.0
          %v3742 = vmul.f32 %v3710, 2.0
          %v3743 = vmul.f32 %v3711, 2.0
          %v3744 = vmul.f32 %v3712, 2.0
          %v3745 = vmul.f32 %v3713, 2.0
          %v3746 = vmul.f32 %v3714, 2.0
          %v3747 = vmul.f32 %v3715, 2.0
          %v3748 = vmul.f32 %v3716, 2.0
          %v3749 = vmul.f32 %v3717, 2.0
          %v3750 = vmul.f32 %v3718, 2.0
          %v3751 = vmul.f32 %v3719, 2.0
          %v3752 = vmul.f32 %v3720, 2.0
          %v3753 = vmul.f32 %v3721, 2.0
          %v3754 = vmul.f32 %v3722, 2.0
          %v3755 = vmul.f32 %v3723, 2.0
          %v3756 = vmul.f32 %v3724, 2.0
          %v3757 = vmul.f32 %v3725, 2.0
          %v3758 = vmul.f32 %v3726, 2.0
          %v3759 = vadd.f32 %v2683, %v3727
          %v3760 = vadd.f32 %v2684, %v3728
          %v3761 = vadd.f32 %v2685, %v3729
          %v3762 = vadd.f32 %v2686, %v3730
          %v3763 = vadd.f32 %v2687, %v3731
          %v3764 = vadd.f32 %v2688, %v3732
          %v3765 = vadd.f32 %v2689, %v3733
          %v3766 = vadd.f32 %v2690, %v3734
          %v3767 = vadd.f32 %v2691, %v3735
          %v3768 = vadd.f32 %v2692, %v3736
          %v3769 = vadd.f32 %v2693, %v3737
          %v3770 = vadd.f32 %v2694, %v3738
          %v3771 = vadd.f32 %v2695, %v3739
          %v3772 = vadd.f32 %v2696, %v3740
          %v3773 = vadd.f32 %v2697, %v3741
          %v3774 = vadd.f32 %v2698, %v3742
          %v3775 = vadd.f32 %v2699, %v3743
          %v3776 = vadd.f32 %v2700, %v3744
          %v3777 = vadd.f32 %v2701, %v3745
          %v3778 = vadd.f32 %v2702, %v3746
          %v3779 = vadd.f32 %v2703, %v3747
          %v3780 = vadd.f32 %v2704, %v3748
          %v3781 = vadd.f32 %v2705, %v3749
          %v3782 = vadd.f32 %v2706, %v3750
          %v3783 = vadd.f32 %v2707, %v3751
          %v3784 = vadd.f32 %v2708, %v3752
          %v3785 = vadd.f32 %v2709, %v3753
          %v3786 = vadd.f32 %v2710, %v3754
          %v3787 = vadd.f32 %v2711, %v3755
          %v3788 = vadd.f32 %v2712, %v3756
          %v3789 = vadd.f32 %v2713, %v3757
          %v3790 = vadd.f32 %v2714, %v3758
          %v3791 = vstv %s507
          %v3792 = vmul.f32 %v3791, %v3695
          %v3793 = vmul.f32 %v3791, %v3696
          %v3794 = vmul.f32 %v3791, %v3697
          %v3795 = vmul.f32 %v3791, %v3698
          %v3796 = vmul.f32 %v3791, %v3699
          %v3797 = vmul.f32 %v3791, %v3700
          %v3798 = vmul.f32 %v3791, %v3701
          %v3799 = vmul.f32 %v3791, %v3702
          %v3800 = vmul.f32 %v3791, %v3703
          %v3801 = vmul.f32 %v3791, %v3704
          %v3802 = vmul.f32 %v3791, %v3705
          %v3803 = vmul.f32 %v3791, %v3706
          %v3804 = vmul.f32 %v3791, %v3707
          %v3805 = vmul.f32 %v3791, %v3708
          %v3806 = vmul.f32 %v3791, %v3709
          %v3807 = vmul.f32 %v3791, %v3710
          %v3808 = vmul.f32 %v3791, %v3711
          %v3809 = vmul.f32 %v3791, %v3712
          %v3810 = vmul.f32 %v3791, %v3713
          %v3811 = vmul.f32 %v3791, %v3714
          %v3812 = vmul.f32 %v3791, %v3715
          %v3813 = vmul.f32 %v3791, %v3716
          %v3814 = vmul.f32 %v3791, %v3717
          %v3815 = vmul.f32 %v3791, %v3718
          %v3816 = vmul.f32 %v3791, %v3719
          %v3817 = vmul.f32 %v3791, %v3720
          %v3818 = vmul.f32 %v3791, %v3721
          %v3819 = vmul.f32 %v3791, %v3722
          %v3820 = vmul.f32 %v3791, %v3723
          %v3821 = vmul.f32 %v3791, %v3724
          %v3822 = vmul.f32 %v3791, %v3725
          %v3823 = vmul.f32 %v3791, %v3726
          %v3824 = vadd.f32 %v472, %v3792
          %v3825 = vadd.f32 %v473, %v3793
          %v3826 = vadd.f32 %v474, %v3794
          %v3827 = vadd.f32 %v475, %v3795
          %v3828 = vadd.f32 %v476, %v3796
          %v3829 = vadd.f32 %v477, %v3797
          %v3830 = vadd.f32 %v478, %v3798
          %v3831 = vadd.f32 %v479, %v3799
          %v3832 = vadd.f32 %v480, %v3800
          %v3833 = vadd.f32 %v481, %v3801
          %v3834 = vadd.f32 %v482, %v3802
          %v3835 = vadd.f32 %v483, %v3803
          %v3836 = vadd.f32 %v484, %v3804
          %v3837 = vadd.f32 %v485, %v3805
          %v3838 = vadd.f32 %v486, %v3806
          %v3839 = vadd.f32 %v487, %v3807
          %v3840 = vadd.f32 %v488, %v3808
          %v3841 = vadd.f32 %v489, %v3809
          %v3842 = vadd.f32 %v490, %v3810
          %v3843 = vadd.f32 %v491, %v3811
          %v3844 = vadd.f32 %v492, %v3812
          %v3845 = vadd.f32 %v493, %v3813
          %v3846 = vadd.f32 %v494, %v3814
          %v3847 = vadd.f32 %v495, %v3815
          %v3848 = vadd.f32 %v496, %v3816
          %v3849 = vadd.f32 %v497, %v3817
          %v3850 = vadd.f32 %v498, %v3818
          %v3851 = vadd.f32 %v499, %v3819
          %v3852 = vadd.f32 %v500, %v3820
          %v3853 = vadd.f32 %v501, %v3821
          %v3854 = vadd.f32 %v502, %v3822
          %v3855 = vadd.f32 %v503, %v3823
          %v3856 = vpack.c.bf16 %v3825, %v3824
          %v3857 = vpack.c.bf16 %v3827, %v3826
          %v3858 = vpack.c.bf16 %v3829, %v3828
          %v3859 = vpack.c.bf16 %v3831, %v3830
          %v3860 = vpack.c.bf16 %v3833, %v3832
          %v3861 = vpack.c.bf16 %v3835, %v3834
          %v3862 = vpack.c.bf16 %v3837, %v3836
          %v3863 = vpack.c.bf16 %v3839, %v3838
          %v3864 = vpack.c.bf16 %v3841, %v3840
          %v3865 = vpack.c.bf16 %v3843, %v3842
          %v3866 = vpack.c.bf16 %v3845, %v3844
          %v3867 = vpack.c.bf16 %v3847, %v3846
          %v3868 = vpack.c.bf16 %v3849, %v3848
          %v3869 = vpack.c.bf16 %v3851, %v3850
          %v3870 = vpack.c.bf16 %v3853, %v3852
          %v3871 = vpack.c.bf16 %v3855, %v3854
          %v3873 = vsel %vm543, %v3856, 0
          %v3876 = vsel %vm543, %v3857, 0
          %v3879 = vsel %vm543, %v3858, 0
          %v3882 = vsel %vm543, %v3859, 0
          %v3885 = vsel %vm543, %v3860, 0
          %v3888 = vsel %vm543, %v3861, 0
          %v3891 = vsel %vm543, %v3862, 0
          %v3894 = vsel %vm543, %v3863, 0
          %v3897 = vsel %vm543, %v3864, 0
          %v3900 = vsel %vm543, %v3865, 0
          %v3903 = vsel %vm543, %v3866, 0
          %v3906 = vsel %vm543, %v3867, 0
          %v3909 = vsel %vm543, %v3868, 0
          %v3912 = vsel %vm543, %v3869, 0
          %v3915 = vsel %vm543, %v3870, 0
          %v3918 = vsel %vm543, %v3871, 0
          %3920 = vmatprep.subr.bf16.mxu0 0
          %3921 = vmatpush1.bf16.msra.mxu0 %v539
          %3922 = vmatprep.subr.bf16.mxu0 0
          %3923 = vmatpush1.bf16.msra.mxu0 %v540
          %3924 = vmatprep.subr.bf16.mxu0 0
          %3925 = vmatpush1.bf16.msra.mxu0 0
          %3926 = vmatprep.subr.bf16.mxu0 0
          %3927 = vmatpush1.bf16.msra.mxu0 0
          %3928 = vmatprep.subr.bf16.mxu0 0
          %3929 = vmatpush1.bf16.msra.mxu0 0
          %3930 = vmatprep.subr.bf16.mxu0 0
          %3931 = vmatpush1.bf16.msra.mxu0 0
          %3932 = vmatprep.subr.bf16.mxu0 0
          %3933 = vmatpush1.bf16.msra.mxu0 0
          %3934 = vmatprep.subr.bf16.mxu0 0
          %3935 = vmatpush1.bf16.msra.mxu0 0
          %3936 = vmatprep.subr.bf16.mxu0 0
          %3937 = vmatpush1.bf16.msra.mxu0 0
          %3938 = vmatprep.subr.bf16.mxu0 0
          %3939 = vmatpush1.bf16.msra.mxu0 0
          %3940 = vmatprep.subr.bf16.mxu0 0
          %3941 = vmatpush1.bf16.msra.mxu0 0
          %3942 = vmatprep.subr.bf16.mxu0 0
          %3943 = vmatpush1.bf16.msra.mxu0 0
          %3944 = vmatprep.subr.bf16.mxu0 0
          %3945 = vmatpush1.bf16.msra.mxu0 0
          %3946 = vmatprep.subr.bf16.mxu0 0
          %3947 = vmatpush1.bf16.msra.mxu0 0
          %3948 = vmatprep.subr.bf16.mxu0 0
          %3949 = vmatpush1.bf16.msra.mxu0 0
          %3950 = vmatprep.subr.bf16.mxu0 0
          %3951 = vmatpush1.bf16.msra.mxu0 0
          %3952 = vmatprep.mubr.bf16.mxu0 0
          %3953 = vmatmul.mubr.bf16.gmra.mrb[0].mxu0 %v3873
          %v3954 = vpop.f32.mrb[0].mxu0
          %v3955 = vadd.f32 %v529, %v3954
          %v3956 = vpop.f32.mrb[0].mxu0
          %v3957 = vpop.f32.mrb[0].mxu0
          %v3958 = vadd.f32 %v529, %v3957
          %v3959 = vpop.f32.mrb[0].mxu0
          %3960 = vmatprep.mubr.bf16.mxu0 0
          %3961 = vmatmul.mubr.bf16.gmra.mrb[0].mxu0 %v3876
          %v3962 = vpop.f32.mrb[0].mxu0
          %v3963 = vadd.f32 %v529, %v3962
          %v3964 = vpop.f32.mrb[0].mxu0
          %v3965 = vpop.f32.mrb[0].mxu0
          %v3966 = vadd.f32 %v529, %v3965
          %v3967 = vpop.f32.mrb[0].mxu0
          %3968 = vmatprep.mubr.bf16.mxu0 0
          %3969 = vmatmul.mubr.bf16.gmra.mrb[0].mxu0 %v3879
          %v3970 = vpop.f32.mrb[0].mxu0
          %v3971 = vadd.f32 %v529, %v3970
          %v3972 = vpop.f32.mrb[0].mxu0
          %v3973 = vpop.f32.mrb[0].mxu0
          %v3974 = vadd.f32 %v529, %v3973
          %v3975 = vpop.f32.mrb[0].mxu0
          %3976 = vmatprep.mubr.bf16.mxu0 0
          %3977 = vmatmul.mubr.bf16.gmra.mrb[0].mxu0 %v3882
          %v3978 = vpop.f32.mrb[0].mxu0
          %v3979 = vadd.f32 %v529, %v3978
          %v3980 = vpop.f32.mrb[0].mxu0
          %v3981 = vpop.f32.mrb[0].mxu0
          %v3982 = vadd.f32 %v529, %v3981
          %v3983 = vpop.f32.mrb[0].mxu0
          %3984 = vmatprep.mubr.bf16.mxu0 0
          %3985 = vmatmul.mubr.bf16.gmra.mrb[0].mxu0 %v3885
          %v3986 = vpop.f32.mrb[0].mxu0
          %v3987 = vadd.f32 %v529, %v3986
          %v3988 = vpop.f32.mrb[0].mxu0
          %v3989 = vpop.f32.mrb[0].mxu0
          %v3990 = vadd.f32 %v529, %v3989
          %v3991 = vpop.f32.mrb[0].mxu0
          %3992 = vmatprep.mubr.bf16.mxu0 0
          %3993 = vmatmul.mubr.bf16.gmra.mrb[0].mxu0 %v3888
          %v3994 = vpop.f32.mrb[0].mxu0
          %v3995 = vadd.f32 %v529, %v3994
          %v3996 = vpop.f32.mrb[0].mxu0
          %v3997 = vpop.f32.mrb[0].mxu0
          %v3998 = vadd.f32 %v529, %v3997
          %v3999 = vpop.f32.mrb[0].mxu0
          %4000 = vmatprep.mubr.bf16.mxu0 0
          %4001 = vmatmul.mubr.bf16.gmra.mrb[0].mxu0 %v3891
          %v4002 = vpop.f32.mrb[0].mxu0
          %v4003 = vadd.f32 %v529, %v4002
          %v4004 = vpop.f32.mrb[0].mxu0
          %v4005 = vpop.f32.mrb[0].mxu0
          %v4006 = vadd.f32 %v529, %v4005
          %v4007 = vpop.f32.mrb[0].mxu0
          %4008 = vmatprep.mubr.bf16.mxu0 0
          %4009 = vmatmul.mubr.bf16.gmra.mrb[0].mxu0 %v3894
          %v4010 = vpop.f32.mrb[0].mxu0
          %v4011 = vadd.f32 %v529, %v4010
          %v4012 = vpop.f32.mrb[0].mxu0
          %v4013 = vpop.f32.mrb[0].mxu0
          %v4014 = vadd.f32 %v529, %v4013
          %v4015 = vpop.f32.mrb[0].mxu0
          %4016 = vmatprep.mubr.bf16.mxu0 0
          %4017 = vmatmul.mubr.bf16.gmra.mrb[0].mxu0 %v3897
          %v4018 = vpop.f32.mrb[0].mxu0
          %v4019 = vadd.f32 %v529, %v4018
          %v4020 = vpop.f32.mrb[0].mxu0
          %v4021 = vpop.f32.mrb[0].mxu0
          %v4022 = vadd.f32 %v529, %v4021
          %v4023 = vpop.f32.mrb[0].mxu0
          %4024 = vmatprep.mubr.bf16.mxu0 0
          %4025 = vmatmul.mubr.bf16.gmra.mrb[0].mxu0 %v3900
          %v4026 = vpop.f32.mrb[0].mxu0
          %v4027 = vadd.f32 %v529, %v4026
          %v4028 = vpop.f32.mrb[0].mxu0
          %v4029 = vpop.f32.mrb[0].mxu0
          %v4030 = vadd.f32 %v529, %v4029
          %v4031 = vpop.f32.mrb[0].mxu0
          %4032 = vmatprep.mubr.bf16.mxu0 0
          %4033 = vmatmul.mubr.bf16.gmra.mrb[0].mxu0 %v3903
          %v4034 = vpop.f32.mrb[0].mxu0
          %v4035 = vadd.f32 %v529, %v4034
          %v4036 = vpop.f32.mrb[0].mxu0
          %v4037 = vpop.f32.mrb[0].mxu0
          %v4038 = vadd.f32 %v529, %v4037
          %v4039 = vpop.f32.mrb[0].mxu0
          %4040 = vmatprep.mubr.bf16.mxu0 0
          %4041 = vmatmul.mubr.bf16.gmra.mrb[0].mxu0 %v3906
          %v4042 = vpop.f32.mrb[0].mxu0
          %v4043 = vadd.f32 %v529, %v4042
          %v4044 = vpop.f32.mrb[0].mxu0
          %v4045 = vpop.f32.mrb[0].mxu0
          %v4046 = vadd.f32 %v529, %v4045
          %v4047 = vpop.f32.mrb[0].mxu0
          %4048 = vmatprep.mubr.bf16.mxu0 0
          %4049 = vmatmul.mubr.bf16.gmra.mrb[0].mxu0 %v3909
          %v4050 = vpop.f32.mrb[0].mxu0
          %v4051 = vadd.f32 %v529, %v4050
          %v4052 = vpop.f32.mrb[0].mxu0
          %v4053 = vpop.f32.mrb[0].mxu0
          %v4054 = vadd.f32 %v529, %v4053
          %v4055 = vpop.f32.mrb[0].mxu0
          %4056 = vmatprep.mubr.bf16.mxu0 0
          %4057 = vmatmul.mubr.bf16.gmra.mrb[0].mxu0 %v3912
          %v4058 = vpop.f32.mrb[0].mxu0
          %v4059 = vadd.f32 %v529, %v4058
          %v4060 = vpop.f32.mrb[0].mxu0
          %v4061 = vpop.f32.mrb[0].mxu0
          %v4062 = vadd.f32 %v529, %v4061
          %v4063 = vpop.f32.mrb[0].mxu0
          %4064 = vmatprep.mubr.bf16.mxu0 0
          %4065 = vmatmul.mubr.bf16.gmra.mrb[0].mxu0 %v3915
          %v4066 = vpop.f32.mrb[0].mxu0
          %v4067 = vadd.f32 %v529, %v4066
          %v4068 = vpop.f32.mrb[0].mxu0
          %v4069 = vpop.f32.mrb[0].mxu0
          %v4070 = vadd.f32 %v529, %v4069
          %v4071 = vpop.f32.mrb[0].mxu0
          %4072 = vmatprep.mubr.bf16.mxu0 0
          %4073 = vmatmul.mubr.bf16.gmra.mrb[0].mxu0 %v3918
          %v4074 = vpop.f32.mrb[0].mxu0
          %v4075 = vadd.f32 %v529, %v4074
          %v4076 = vpop.f32.mrb[0].mxu0
          %v4077 = vpop.f32.mrb[0].mxu0
          %v4078 = vadd.f32 %v529, %v4077
          %v4079 = vpop.f32.mrb[0].mxu0
          %4080 = vdwg.mxu0
          %v4081 = vmax.f32 %v3955, 0.0
          %v4082 = vmax.f32 %v3958, 0.0
          %v4083 = vmax.f32 %v3963, 0.0
          %v4084 = vmax.f32 %v3966, 0.0
          %v4085 = vmax.f32 %v3971, 0.0
          %v4086 = vmax.f32 %v3974, 0.0
          %v4087 = vmax.f32 %v3979, 0.0
          %v4088 = vmax.f32 %v3982, 0.0
          %v4089 = vmax.f32 %v3987, 0.0
          %v4090 = vmax.f32 %v3990, 0.0
          %v4091 = vmax.f32 %v3995, 0.0
          %v4092 = vmax.f32 %v3998, 0.0
          %v4093 = vmax.f32 %v4003, 0.0
          %v4094 = vmax.f32 %v4006, 0.0
          %v4095 = vmax.f32 %v4011, 0.0
          %v4096 = vmax.f32 %v4014, 0.0
          %v4097 = vmax.f32 %v4019, 0.0
          %v4098 = vmax.f32 %v4022, 0.0
          %v4099 = vmax.f32 %v4027, 0.0
          %v4100 = vmax.f32 %v4030, 0.0
          %v4101 = vmax.f32 %v4035, 0.0
          %v4102 = vmax.f32 %v4038, 0.0
          %v4103 = vmax.f32 %v4043, 0.0
          %v4104 = vmax.f32 %v4046, 0.0
          %v4105 = vmax.f32 %v4051, 0.0
          %v4106 = vmax.f32 %v4054, 0.0
          %v4107 = vmax.f32 %v4059, 0.0
          %v4108 = vmax.f32 %v4062, 0.0
          %v4109 = vmax.f32 %v4067, 0.0
          %v4110 = vmax.f32 %v4070, 0.0
          %v4111 = vmax.f32 %v4075, 0.0
          %v4112 = vmax.f32 %v4078, 0.0
          %v4113 = vpack.c.bf16 %v4082, %v4081
          %v4114 = vpack.c.bf16 %v4084, %v4083
          %v4115 = vpack.c.bf16 %v4086, %v4085
          %v4116 = vpack.c.bf16 %v4088, %v4087
          %v4117 = vpack.c.bf16 %v4090, %v4089
          %v4118 = vpack.c.bf16 %v4092, %v4091
          %v4119 = vpack.c.bf16 %v4094, %v4093
          %v4120 = vpack.c.bf16 %v4096, %v4095
          %v4121 = vpack.c.bf16 %v4098, %v4097
          %v4122 = vpack.c.bf16 %v4100, %v4099
          %v4123 = vpack.c.bf16 %v4102, %v4101
          %v4124 = vpack.c.bf16 %v4104, %v4103
          %v4125 = vpack.c.bf16 %v4106, %v4105
          %v4126 = vpack.c.bf16 %v4108, %v4107
          %v4127 = vpack.c.bf16 %v4110, %v4109
          %v4128 = vpack.c.bf16 %v4112, %v4111
          %4129 = vmatprep.subr.bf16.mxu0 0
          %4130 = vmatpush1.bf16.msra.mxu0 %v839
          %4131 = vmatprep.subr.bf16.mxu0 0
          %4132 = vmatpush1.bf16.msra.mxu0 %v840
          %4133 = vmatprep.subr.bf16.mxu0 0
          %4134 = vmatpush1.bf16.msra.mxu0 %v841
          %4135 = vmatprep.subr.bf16.mxu0 0
          %4136 = vmatpush1.bf16.msra.mxu0 %v842
          %4137 = vmatprep.subr.bf16.mxu0 0
          %4138 = vmatpush1.bf16.msra.mxu0 %v843
          %4139 = vmatprep.subr.bf16.mxu0 0
          %4140 = vmatpush1.bf16.msra.mxu0 %v844
          %4141 = vmatprep.subr.bf16.mxu0 0
          %4142 = vmatpush1.bf16.msra.mxu0 %v845
          %4143 = vmatprep.subr.bf16.mxu0 0
          %4144 = vmatpush1.bf16.msra.mxu0 %v846
          %4145 = vmatprep.subr.bf16.mxu0 0
          %4146 = vmatpush1.bf16.msra.mxu0 0
          %4147 = vmatprep.subr.bf16.mxu0 0
          %4148 = vmatpush1.bf16.msra.mxu0 0
          %4149 = vmatprep.subr.bf16.mxu0 0
          %4150 = vmatpush1.bf16.msra.mxu0 0
          %4151 = vmatprep.subr.bf16.mxu0 0
          %4152 = vmatpush1.bf16.msra.mxu0 0
          %4153 = vmatprep.subr.bf16.mxu0 0
          %4154 = vmatpush1.bf16.msra.mxu0 0
          %4155 = vmatprep.subr.bf16.mxu0 0
          %4156 = vmatpush1.bf16.msra.mxu0 0
          %4157 = vmatprep.subr.bf16.mxu0 0
          %4158 = vmatpush1.bf16.msra.mxu0 0
          %4159 = vmatprep.subr.bf16.mxu0 0
          %4160 = vmatpush1.bf16.msra.mxu0 0
          %4161 = vmatprep.mubr.bf16.mxu0 0
          %4162 = vmatmul.mubr.bf16.gmra.mrb[0].mxu0 %v4113
          %v4163 = vpop.f32.mrb[0].mxu0
          %v4164 = vadd.f32 %v805, %v4163
          %v4165 = vpop.f32.mrb[0].mxu0
          %v4166 = vpop.f32.mrb[0].mxu0
          %v4167 = vadd.f32 %v805, %v4166
          %v4168 = vpop.f32.mrb[0].mxu0
          %4169 = vmatprep.mubr.bf16.mxu0 0
          %4170 = vmatmul.mubr.bf16.gmra.mrb[0].mxu0 %v4114
          %v4171 = vpop.f32.mrb[0].mxu0
          %v4172 = vadd.f32 %v805, %v4171
          %v4173 = vpop.f32.mrb[0].mxu0
          %v4174 = vpop.f32.mrb[0].mxu0
          %v4175 = vadd.f32 %v805, %v4174
          %v4176 = vpop.f32.mrb[0].mxu0
          %4177 = vmatprep.mubr.bf16.mxu0 0
          %4178 = vmatmul.mubr.bf16.gmra.mrb[0].mxu0 %v4115
          %v4179 = vpop.f32.mrb[0].mxu0
          %v4180 = vadd.f32 %v805, %v4179
          %v4181 = vpop.f32.mrb[0].mxu0
          %v4182 = vpop.f32.mrb[0].mxu0
          %v4183 = vadd.f32 %v805, %v4182
          %v4184 = vpop.f32.mrb[0].mxu0
          %4185 = vmatprep.mubr.bf16.mxu0 0
          %4186 = vmatmul.mubr.bf16.gmra.mrb[0].mxu0 %v4116
          %v4187 = vpop.f32.mrb[0].mxu0
          %v4188 = vadd.f32 %v805, %v4187
          %v4189 = vpop.f32.mrb[0].mxu0
          %v4190 = vpop.f32.mrb[0].mxu0
          %v4191 = vadd.f32 %v805, %v4190
          %v4192 = vpop.f32.mrb[0].mxu0
          %4193 = vmatprep.mubr.bf16.mxu0 0
          %4194 = vmatmul.mubr.bf16.gmra.mrb[0].mxu0 %v4117
          %v4195 = vpop.f32.mrb[0].mxu0
          %v4196 = vadd.f32 %v805, %v4195
          %v4197 = vpop.f32.mrb[0].mxu0
          %v4198 = vpop.f32.mrb[0].mxu0
          %v4199 = vadd.f32 %v805, %v4198
          %v4200 = vpop.f32.mrb[0].mxu0
          %4201 = vmatprep.mubr.bf16.mxu0 0
          %4202 = vmatmul.mubr.bf16.gmra.mrb[0].mxu0 %v4118
          %v4203 = vpop.f32.mrb[0].mxu0
          %v4204 = vadd.f32 %v805, %v4203
          %v4205 = vpop.f32.mrb[0].mxu0
          %v4206 = vpop.f32.mrb[0].mxu0
          %v4207 = vadd.f32 %v805, %v4206
          %v4208 = vpop.f32.mrb[0].mxu0
          %4209 = vmatprep.mubr.bf16.mxu0 0
          %4210 = vmatmul.mubr.bf16.gmra.mrb[0].mxu0 %v4119
          %v4211 = vpop.f32.mrb[0].mxu0
          %v4212 = vadd.f32 %v805, %v4211
          %v4213 = vpop.f32.mrb[0].mxu0
          %v4214 = vpop.f32.mrb[0].mxu0
          %v4215 = vadd.f32 %v805, %v4214
          %v4216 = vpop.f32.mrb[0].mxu0
          %4217 = vmatprep.mubr.bf16.mxu0 0
          %4218 = vmatmul.mubr.bf16.gmra.mrb[0].mxu0 %v4120
          %v4219 = vpop.f32.mrb[0].mxu0
          %v4220 = vadd.f32 %v805, %v4219
          %v4221 = vpop.f32.mrb[0].mxu0
          %v4222 = vpop.f32.mrb[0].mxu0
          %v4223 = vadd.f32 %v805, %v4222
          %v4224 = vpop.f32.mrb[0].mxu0
          %4225 = vmatprep.mubr.bf16.mxu0 0
          %4226 = vmatmul.mubr.bf16.gmra.mrb[0].mxu0 %v4121
          %v4227 = vpop.f32.mrb[0].mxu0
          %v4228 = vadd.f32 %v805, %v4227
          %v4229 = vpop.f32.mrb[0].mxu0
          %v4230 = vpop.f32.mrb[0].mxu0
          %v4231 = vadd.f32 %v805, %v4230
          %v4232 = vpop.f32.mrb[0].mxu0
          %4233 = vmatprep.mubr.bf16.mxu0 0
          %4234 = vmatmul.mubr.bf16.gmra.mrb[0].mxu0 %v4122
          %v4235 = vpop.f32.mrb[0].mxu0
          %v4236 = vadd.f32 %v805, %v4235
          %v4237 = vpop.f32.mrb[0].mxu0
          %v4238 = vpop.f32.mrb[0].mxu0
          %v4239 = vadd.f32 %v805, %v4238
          %v4240 = vpop.f32.mrb[0].mxu0
          %4241 = vmatprep.mubr.bf16.mxu0 0
          %4242 = vmatmul.mubr.bf16.gmra.mrb[0].mxu0 %v4123
          %v4243 = vpop.f32.mrb[0].mxu0
          %v4244 = vadd.f32 %v805, %v4243
          %v4245 = vpop.f32.mrb[0].mxu0
          %v4246 = vpop.f32.mrb[0].mxu0
          %v4247 = vadd.f32 %v805, %v4246
          %v4248 = vpop.f32.mrb[0].mxu0
          %4249 = vmatprep.mubr.bf16.mxu0 0
          %4250 = vmatmul.mubr.bf16.gmra.mrb[0].mxu0 %v4124
          %v4251 = vpop.f32.mrb[0].mxu0
          %v4252 = vadd.f32 %v805, %v4251
          %v4253 = vpop.f32.mrb[0].mxu0
          %v4254 = vpop.f32.mrb[0].mxu0
          %v4255 = vadd.f32 %v805, %v4254
          %v4256 = vpop.f32.mrb[0].mxu0
          %4257 = vmatprep.mubr.bf16.mxu0 0
          %4258 = vmatmul.mubr.bf16.gmra.mrb[0].mxu0 %v4125
          %v4259 = vpop.f32.mrb[0].mxu0
          %v4260 = vadd.f32 %v805, %v4259
          %v4261 = vpop.f32.mrb[0].mxu0
          %v4262 = vpop.f32.mrb[0].mxu0
          %v4263 = vadd.f32 %v805, %v4262
          %v4264 = vpop.f32.mrb[0].mxu0
          %4265 = vmatprep.mubr.bf16.mxu0 0
          %4266 = vmatmul.mubr.bf16.gmra.mrb[0].mxu0 %v4126
          %v4267 = vpop.f32.mrb[0].mxu0
          %v4268 = vadd.f32 %v805, %v4267
          %v4269 = vpop.f32.mrb[0].mxu0
          %v4270 = vpop.f32.mrb[0].mxu0
          %v4271 = vadd.f32 %v805, %v4270
          %v4272 = vpop.f32.mrb[0].mxu0
          %4273 = vmatprep.mubr.bf16.mxu0 0
          %4274 = vmatmul.mubr.bf16.gmra.mrb[0].mxu0 %v4127
          %v4275 = vpop.f32.mrb[0].mxu0
          %v4276 = vadd.f32 %v805, %v4275
          %v4277 = vpop.f32.mrb[0].mxu0
          %v4278 = vpop.f32.mrb[0].mxu0
          %v4279 = vadd.f32 %v805, %v4278
          %v4280 = vpop.f32.mrb[0].mxu0
          %4281 = vmatprep.mubr.bf16.mxu0 0
          %4282 = vmatmul.mubr.bf16.gmra.mrb[0].mxu0 %v4128
          %v4283 = vpop.f32.mrb[0].mxu0
          %v4284 = vadd.f32 %v805, %v4283
          %v4285 = vpop.f32.mrb[0].mxu0
          %v4286 = vpop.f32.mrb[0].mxu0
          %v4287 = vadd.f32 %v805, %v4286
          %v4288 = vpop.f32.mrb[0].mxu0
          %4289 = vdwg.mxu0
          %v4290 = vmax.f32 %v4164, 0.0
          %v4291 = vmax.f32 %v4167, 0.0
          %v4292 = vmax.f32 %v4172, 0.0
          %v4293 = vmax.f32 %v4175, 0.0
          %v4294 = vmax.f32 %v4180, 0.0
          %v4295 = vmax.f32 %v4183, 0.0
          %v4296 = vmax.f32 %v4188, 0.0
          %v4297 = vmax.f32 %v4191, 0.0
          %v4298 = vmax.f32 %v4196, 0.0
          %v4299 = vmax.f32 %v4199, 0.0
          %v4300 = vmax.f32 %v4204, 0.0
          %v4301 = vmax.f32 %v4207, 0.0
          %v4302 = vmax.f32 %v4212, 0.0
          %v4303 = vmax.f32 %v4215, 0.0
          %v4304 = vmax.f32 %v4220, 0.0
          %v4305 = vmax.f32 %v4223, 0.0
          %v4306 = vmax.f32 %v4228, 0.0
          %v4307 = vmax.f32 %v4231, 0.0
          %v4308 = vmax.f32 %v4236, 0.0
          %v4309 = vmax.f32 %v4239, 0.0
          %v4310 = vmax.f32 %v4244, 0.0
          %v4311 = vmax.f32 %v4247, 0.0
          %v4312 = vmax.f32 %v4252, 0.0
          %v4313 = vmax.f32 %v4255, 0.0
          %v4314 = vmax.f32 %v4260, 0.0
          %v4315 = vmax.f32 %v4263, 0.0
          %v4316 = vmax.f32 %v4268, 0.0
          %v4317 = vmax.f32 %v4271, 0.0
          %v4318 = vmax.f32 %v4276, 0.0
          %v4319 = vmax.f32 %v4279, 0.0
          %v4320 = vmax.f32 %v4284, 0.0
          %v4321 = vmax.f32 %v4287, 0.0
          %v4322 = vadd.f32 %v4290, %v4081
          %v4323 = vadd.f32 %v4291, %v4082
          %v4324 = vadd.f32 %v4292, %v4083
          %v4325 = vadd.f32 %v4293, %v4084
          %v4326 = vadd.f32 %v4294, %v4085
          %v4327 = vadd.f32 %v4295, %v4086
          %v4328 = vadd.f32 %v4296, %v4087
          %v4329 = vadd.f32 %v4297, %v4088
          %v4330 = vadd.f32 %v4298, %v4089
          %v4331 = vadd.f32 %v4299, %v4090
          %v4332 = vadd.f32 %v4300, %v4091
          %v4333 = vadd.f32 %v4301, %v4092
          %v4334 = vadd.f32 %v4302, %v4093
          %v4335 = vadd.f32 %v4303, %v4094
          %v4336 = vadd.f32 %v4304, %v4095
          %v4337 = vadd.f32 %v4305, %v4096
          %v4338 = vadd.f32 %v4306, %v4097
          %v4339 = vadd.f32 %v4307, %v4098
          %v4340 = vadd.f32 %v4308, %v4099
          %v4341 = vadd.f32 %v4309, %v4100
          %v4342 = vadd.f32 %v4310, %v4101
          %v4343 = vadd.f32 %v4311, %v4102
          %v4344 = vadd.f32 %v4312, %v4103
          %v4345 = vadd.f32 %v4313, %v4104
          %v4346 = vadd.f32 %v4314, %v4105
          %v4347 = vadd.f32 %v4315, %v4106
          %v4348 = vadd.f32 %v4316, %v4107
          %v4349 = vadd.f32 %v4317, %v4108
          %v4350 = vadd.f32 %v4318, %v4109
          %v4351 = vadd.f32 %v4319, %v4110
          %v4352 = vadd.f32 %v4320, %v4111
          %v4353 = vadd.f32 %v4321, %v4112
          %v4354 = vpack.c.bf16 %v4323, %v4322
          %v4355 = vpack.c.bf16 %v4325, %v4324
          %v4356 = vpack.c.bf16 %v4327, %v4326
          %v4357 = vpack.c.bf16 %v4329, %v4328
          %v4358 = vpack.c.bf16 %v4331, %v4330
          %v4359 = vpack.c.bf16 %v4333, %v4332
          %v4360 = vpack.c.bf16 %v4335, %v4334
          %v4361 = vpack.c.bf16 %v4337, %v4336
          %v4362 = vpack.c.bf16 %v4339, %v4338
          %v4363 = vpack.c.bf16 %v4341, %v4340
          %v4364 = vpack.c.bf16 %v4343, %v4342
          %v4365 = vpack.c.bf16 %v4345, %v4344
          %v4366 = vpack.c.bf16 %v4347, %v4346
          %v4367 = vpack.c.bf16 %v4349, %v4348
          %v4368 = vpack.c.bf16 %v4351, %v4350
          %v4369 = vpack.c.bf16 %v4353, %v4352
          %4370 = vmatprep.subr.bf16.mxu0 0
          %4371 = vmatpush1.bf16.msra.mxu0 %v1134
          %4372 = vmatprep.subr.bf16.mxu0 0
          %4373 = vmatpush1.bf16.msra.mxu0 %v1135
          %4374 = vmatprep.subr.bf16.mxu0 0
          %4375 = vmatpush1.bf16.msra.mxu0 %v1136
          %4376 = vmatprep.subr.bf16.mxu0 0
          %4377 = vmatpush1.bf16.msra.mxu0 %v1137
          %4378 = vmatprep.subr.bf16.mxu0 0
          %4379 = vmatpush1.bf16.msra.mxu0 %v1138
          %4380 = vmatprep.subr.bf16.mxu0 0
          %4381 = vmatpush1.bf16.msra.mxu0 %v1139
          %4382 = vmatprep.subr.bf16.mxu0 0
          %4383 = vmatpush1.bf16.msra.mxu0 %v1140
          %4384 = vmatprep.subr.bf16.mxu0 0
          %4385 = vmatpush1.bf16.msra.mxu0 %v1141
          %4386 = vmatprep.subr.bf16.mxu0 0
          %4387 = vmatpush1.bf16.msra.mxu0 0
          %4388 = vmatprep.subr.bf16.mxu0 0
          %4389 = vmatpush1.bf16.msra.mxu0 0
          %4390 = vmatprep.subr.bf16.mxu0 0
          %4391 = vmatpush1.bf16.msra.mxu0 0
          %4392 = vmatprep.subr.bf16.mxu0 0
          %4393 = vmatpush1.bf16.msra.mxu0 0
          %4394 = vmatprep.subr.bf16.mxu0 0
          %4395 = vmatpush1.bf16.msra.mxu0 0
          %4396 = vmatprep.subr.bf16.mxu0 0
          %4397 = vmatpush1.bf16.msra.mxu0 0
          %4398 = vmatprep.subr.bf16.mxu0 0
          %4399 = vmatpush1.bf16.msra.mxu0 0
          %4400 = vmatprep.subr.bf16.mxu0 0
          %4401 = vmatpush1.bf16.msra.mxu0 0
          %4402 = vmatprep.mubr.bf16.mxu0 0
          %4403 = vmatmul.mubr.bf16.gmra.mrb[0].mxu0 %v4354
          %v4404 = vpop.f32.mrb[0].mxu0
          %v4405 = vadd.f32 %v1100, %v4404
          %v4406 = vpop.f32.mrb[0].mxu0
          %v4407 = vpop.f32.mrb[0].mxu0
          %v4408 = vadd.f32 %v1100, %v4407
          %v4409 = vpop.f32.mrb[0].mxu0
          %4410 = vmatprep.mubr.bf16.mxu0 0
          %4411 = vmatmul.mubr.bf16.gmra.mrb[0].mxu0 %v4355
          %v4412 = vpop.f32.mrb[0].mxu0
          %v4413 = vadd.f32 %v1100, %v4412
          %v4414 = vpop.f32.mrb[0].mxu0
          %v4415 = vpop.f32.mrb[0].mxu0
          %v4416 = vadd.f32 %v1100, %v4415
          %v4417 = vpop.f32.mrb[0].mxu0
          %4418 = vmatprep.mubr.bf16.mxu0 0
          %4419 = vmatmul.mubr.bf16.gmra.mrb[0].mxu0 %v4356
          %v4420 = vpop.f32.mrb[0].mxu0
          %v4421 = vadd.f32 %v1100, %v4420
          %v4422 = vpop.f32.mrb[0].mxu0
          %v4423 = vpop.f32.mrb[0].mxu0
          %v4424 = vadd.f32 %v1100, %v4423
          %v4425 = vpop.f32.mrb[0].mxu0
          %4426 = vmatprep.mubr.bf16.mxu0 0
          %4427 = vmatmul.mubr.bf16.gmra.mrb[0].mxu0 %v4357
          %v4428 = vpop.f32.mrb[0].mxu0
          %v4429 = vadd.f32 %v1100, %v4428
          %v4430 = vpop.f32.mrb[0].mxu0
          %v4431 = vpop.f32.mrb[0].mxu0
          %v4432 = vadd.f32 %v1100, %v4431
          %v4433 = vpop.f32.mrb[0].mxu0
          %4434 = vmatprep.mubr.bf16.mxu0 0
          %4435 = vmatmul.mubr.bf16.gmra.mrb[0].mxu0 %v4358
          %v4436 = vpop.f32.mrb[0].mxu0
          %v4437 = vadd.f32 %v1100, %v4436
          %v4438 = vpop.f32.mrb[0].mxu0
          %v4439 = vpop.f32.mrb[0].mxu0
          %v4440 = vadd.f32 %v1100, %v4439
          %v4441 = vpop.f32.mrb[0].mxu0
          %4442 = vmatprep.mubr.bf16.mxu0 0
          %4443 = vmatmul.mubr.bf16.gmra.mrb[0].mxu0 %v4359
          %v4444 = vpop.f32.mrb[0].mxu0
          %v4445 = vadd.f32 %v1100, %v4444
          %v4446 = vpop.f32.mrb[0].mxu0
          %v4447 = vpop.f32.mrb[0].mxu0
          %v4448 = vadd.f32 %v1100, %v4447
          %v4449 = vpop.f32.mrb[0].mxu0
          %4450 = vmatprep.mubr.bf16.mxu0 0
          %4451 = vmatmul.mubr.bf16.gmra.mrb[0].mxu0 %v4360
          %v4452 = vpop.f32.mrb[0].mxu0
          %v4453 = vadd.f32 %v1100, %v4452
          %v4454 = vpop.f32.mrb[0].mxu0
          %v4455 = vpop.f32.mrb[0].mxu0
          %v4456 = vadd.f32 %v1100, %v4455
          %v4457 = vpop.f32.mrb[0].mxu0
          %4458 = vmatprep.mubr.bf16.mxu0 0
          %4459 = vmatmul.mubr.bf16.gmra.mrb[0].mxu0 %v4361
          %v4460 = vpop.f32.mrb[0].mxu0
          %v4461 = vadd.f32 %v1100, %v4460
          %v4462 = vpop.f32.mrb[0].mxu0
          %v4463 = vpop.f32.mrb[0].mxu0
          %v4464 = vadd.f32 %v1100, %v4463
          %v4465 = vpop.f32.mrb[0].mxu0
          %4466 = vmatprep.mubr.bf16.mxu0 0
          %4467 = vmatmul.mubr.bf16.gmra.mrb[0].mxu0 %v4362
          %v4468 = vpop.f32.mrb[0].mxu0
          %v4469 = vadd.f32 %v1100, %v4468
          %v4470 = vpop.f32.mrb[0].mxu0
          %v4471 = vpop.f32.mrb[0].mxu0
          %v4472 = vadd.f32 %v1100, %v4471
          %v4473 = vpop.f32.mrb[0].mxu0
          %4474 = vmatprep.mubr.bf16.mxu0 0
          %4475 = vmatmul.mubr.bf16.gmra.mrb[0].mxu0 %v4363
          %v4476 = vpop.f32.mrb[0].mxu0
          %v4477 = vadd.f32 %v1100, %v4476
          %v4478 = vpop.f32.mrb[0].mxu0
          %v4479 = vpop.f32.mrb[0].mxu0
          %v4480 = vadd.f32 %v1100, %v4479
          %v4481 = vpop.f32.mrb[0].mxu0
          %4482 = vmatprep.mubr.bf16.mxu0 0
          %4483 = vmatmul.mubr.bf16.gmra.mrb[0].mxu0 %v4364
          %v4484 = vpop.f32.mrb[0].mxu0
          %v4485 = vadd.f32 %v1100, %v4484
          %v4486 = vpop.f32.mrb[0].mxu0
          %v4487 = vpop.f32.mrb[0].mxu0
          %v4488 = vadd.f32 %v1100, %v4487
          %v4489 = vpop.f32.mrb[0].mxu0
          %4490 = vmatprep.mubr.bf16.mxu0 0
          %4491 = vmatmul.mubr.bf16.gmra.mrb[0].mxu0 %v4365
          %v4492 = vpop.f32.mrb[0].mxu0
          %v4493 = vadd.f32 %v1100, %v4492
          %v4494 = vpop.f32.mrb[0].mxu0
          %v4495 = vpop.f32.mrb[0].mxu0
          %v4496 = vadd.f32 %v1100, %v4495
          %v4497 = vpop.f32.mrb[0].mxu0
          %4498 = vmatprep.mubr.bf16.mxu0 0
          %4499 = vmatmul.mubr.bf16.gmra.mrb[0].mxu0 %v4366
          %v4500 = vpop.f32.mrb[0].mxu0
          %v4501 = vadd.f32 %v1100, %v4500
          %v4502 = vpop.f32.mrb[0].mxu0
          %v4503 = vpop.f32.mrb[0].mxu0
          %v4504 = vadd.f32 %v1100, %v4503
          %v4505 = vpop.f32.mrb[0].mxu0
          %4506 = vmatprep.mubr.bf16.mxu0 0
          %4507 = vmatmul.mubr.bf16.gmra.mrb[0].mxu0 %v4367
          %v4508 = vpop.f32.mrb[0].mxu0
          %v4509 = vadd.f32 %v1100, %v4508
          %v4510 = vpop.f32.mrb[0].mxu0
          %v4511 = vpop.f32.mrb[0].mxu0
          %v4512 = vadd.f32 %v1100, %v4511
          %v4513 = vpop.f32.mrb[0].mxu0
          %4514 = vmatprep.mubr.bf16.mxu0 0
          %4515 = vmatmul.mubr.bf16.gmra.mrb[0].mxu0 %v4368
          %v4516 = vpop.f32.mrb[0].mxu0
          %v4517 = vadd.f32 %v1100, %v4516
          %v4518 = vpop.f32.mrb[0].mxu0
          %v4519 = vpop.f32.mrb[0].mxu0
          %v4520 = vadd.f32 %v1100, %v4519
          %v4521 = vpop.f32.mrb[0].mxu0
          %4522 = vmatprep.mubr.bf16.mxu0 0
          %4523 = vmatmul.mubr.bf16.gmra.mrb[0].mxu0 %v4369
          %v4524 = vpop.f32.mrb[0].mxu0
          %v4525 = vadd.f32 %v1100, %v4524
          %v4526 = vpop.f32.mrb[0].mxu0
          %v4527 = vpop.f32.mrb[0].mxu0
          %v4528 = vadd.f32 %v1100, %v4527
          %v4529 = vpop.f32.mrb[0].mxu0
          %4530 = vdwg.mxu0
          %v4531 = vmax.f32 %v4405, 0.0
          %v4532 = vmax.f32 %v4408, 0.0
          %v4533 = vmax.f32 %v4413, 0.0
          %v4534 = vmax.f32 %v4416, 0.0
          %v4535 = vmax.f32 %v4421, 0.0
          %v4536 = vmax.f32 %v4424, 0.0
          %v4537 = vmax.f32 %v4429, 0.0
          %v4538 = vmax.f32 %v4432, 0.0
          %v4539 = vmax.f32 %v4437, 0.0
          %v4540 = vmax.f32 %v4440, 0.0
          %v4541 = vmax.f32 %v4445, 0.0
          %v4542 = vmax.f32 %v4448, 0.0
          %v4543 = vmax.f32 %v4453, 0.0
          %v4544 = vmax.f32 %v4456, 0.0
          %v4545 = vmax.f32 %v4461, 0.0
          %v4546 = vmax.f32 %v4464, 0.0
          %v4547 = vmax.f32 %v4469, 0.0
          %v4548 = vmax.f32 %v4472, 0.0
          %v4549 = vmax.f32 %v4477, 0.0
          %v4550 = vmax.f32 %v4480, 0.0
          %v4551 = vmax.f32 %v4485, 0.0
          %v4552 = vmax.f32 %v4488, 0.0
          %v4553 = vmax.f32 %v4493, 0.0
          %v4554 = vmax.f32 %v4496, 0.0
          %v4555 = vmax.f32 %v4501, 0.0
          %v4556 = vmax.f32 %v4504, 0.0
          %v4557 = vmax.f32 %v4509, 0.0
          %v4558 = vmax.f32 %v4512, 0.0
          %v4559 = vmax.f32 %v4517, 0.0
          %v4560 = vmax.f32 %v4520, 0.0
          %v4561 = vmax.f32 %v4525, 0.0
          %v4562 = vmax.f32 %v4528, 0.0
          %v4563 = vadd.f32 %v4531, %v4322
          %v4564 = vadd.f32 %v4532, %v4323
          %v4565 = vadd.f32 %v4533, %v4324
          %v4566 = vadd.f32 %v4534, %v4325
          %v4567 = vadd.f32 %v4535, %v4326
          %v4568 = vadd.f32 %v4536, %v4327
          %v4569 = vadd.f32 %v4537, %v4328
          %v4570 = vadd.f32 %v4538, %v4329
          %v4571 = vadd.f32 %v4539, %v4330
          %v4572 = vadd.f32 %v4540, %v4331
          %v4573 = vadd.f32 %v4541, %v4332
          %v4574 = vadd.f32 %v4542, %v4333
          %v4575 = vadd.f32 %v4543, %v4334
          %v4576 = vadd.f32 %v4544, %v4335
          %v4577 = vadd.f32 %v4545, %v4336
          %v4578 = vadd.f32 %v4546, %v4337
          %v4579 = vadd.f32 %v4547, %v4338
          %v4580 = vadd.f32 %v4548, %v4339
          %v4581 = vadd.f32 %v4549, %v4340
          %v4582 = vadd.f32 %v4550, %v4341
          %v4583 = vadd.f32 %v4551, %v4342
          %v4584 = vadd.f32 %v4552, %v4343
          %v4585 = vadd.f32 %v4553, %v4344
          %v4586 = vadd.f32 %v4554, %v4345
          %v4587 = vadd.f32 %v4555, %v4346
          %v4588 = vadd.f32 %v4556, %v4347
          %v4589 = vadd.f32 %v4557, %v4348
          %v4590 = vadd.f32 %v4558, %v4349
          %v4591 = vadd.f32 %v4559, %v4350
          %v4592 = vadd.f32 %v4560, %v4351
          %v4593 = vadd.f32 %v4561, %v4352
          %v4594 = vadd.f32 %v4562, %v4353
          %v4595 = vpack.c.bf16 %v4564, %v4563
          %v4596 = vpack.c.bf16 %v4566, %v4565
          %v4597 = vpack.c.bf16 %v4568, %v4567
          %v4598 = vpack.c.bf16 %v4570, %v4569
          %v4599 = vpack.c.bf16 %v4572, %v4571
          %v4600 = vpack.c.bf16 %v4574, %v4573
          %v4601 = vpack.c.bf16 %v4576, %v4575
          %v4602 = vpack.c.bf16 %v4578, %v4577
          %v4603 = vpack.c.bf16 %v4580, %v4579
          %v4604 = vpack.c.bf16 %v4582, %v4581
          %v4605 = vpack.c.bf16 %v4584, %v4583
          %v4606 = vpack.c.bf16 %v4586, %v4585
          %v4607 = vpack.c.bf16 %v4588, %v4587
          %v4608 = vpack.c.bf16 %v4590, %v4589
          %v4609 = vpack.c.bf16 %v4592, %v4591
          %v4610 = vpack.c.bf16 %v4594, %v4593
          %4611 = vmatprep.subr.bf16.mxu0 0
          %4612 = vmatpush1.bf16.msra.mxu0 %v1429
          %4613 = vmatprep.subr.bf16.mxu0 0
          %4614 = vmatpush1.bf16.msra.mxu0 %v1430
          %4615 = vmatprep.subr.bf16.mxu0 0
          %4616 = vmatpush1.bf16.msra.mxu0 %v1431
          %4617 = vmatprep.subr.bf16.mxu0 0
          %4618 = vmatpush1.bf16.msra.mxu0 %v1432
          %4619 = vmatprep.subr.bf16.mxu0 0
          %4620 = vmatpush1.bf16.msra.mxu0 %v1433
          %4621 = vmatprep.subr.bf16.mxu0 0
          %4622 = vmatpush1.bf16.msra.mxu0 %v1434
          %4623 = vmatprep.subr.bf16.mxu0 0
          %4624 = vmatpush1.bf16.msra.mxu0 %v1435
          %4625 = vmatprep.subr.bf16.mxu0 0
          %4626 = vmatpush1.bf16.msra.mxu0 %v1436
          %4627 = vmatprep.subr.bf16.mxu0 0
          %4628 = vmatpush1.bf16.msra.mxu0 0
          %4629 = vmatprep.subr.bf16.mxu0 0
          %4630 = vmatpush1.bf16.msra.mxu0 0
          %4631 = vmatprep.subr.bf16.mxu0 0
          %4632 = vmatpush1.bf16.msra.mxu0 0
          %4633 = vmatprep.subr.bf16.mxu0 0
          %4634 = vmatpush1.bf16.msra.mxu0 0
          %4635 = vmatprep.subr.bf16.mxu0 0
          %4636 = vmatpush1.bf16.msra.mxu0 0
          %4637 = vmatprep.subr.bf16.mxu0 0
          %4638 = vmatpush1.bf16.msra.mxu0 0
          %4639 = vmatprep.subr.bf16.mxu0 0
          %4640 = vmatpush1.bf16.msra.mxu0 0
          %4641 = vmatprep.subr.bf16.mxu0 0
          %4642 = vmatpush1.bf16.msra.mxu0 0
          %4643 = vmatprep.mubr.bf16.mxu0 0
          %4644 = vmatmul.mubr.bf16.gmra.mrb[0].mxu0 %v4595
          %v4645 = vpop.f32.mrb[0].mxu0
          %v4646 = vadd.f32 %v1395, %v4645
          %v4647 = vpop.f32.mrb[0].mxu0
          %v4648 = vpop.f32.mrb[0].mxu0
          %v4649 = vadd.f32 %v1395, %v4648
          %v4650 = vpop.f32.mrb[0].mxu0
          %4651 = vmatprep.mubr.bf16.mxu0 0
          %4652 = vmatmul.mubr.bf16.gmra.mrb[0].mxu0 %v4596
          %v4653 = vpop.f32.mrb[0].mxu0
          %v4654 = vadd.f32 %v1395, %v4653
          %v4655 = vpop.f32.mrb[0].mxu0
          %v4656 = vpop.f32.mrb[0].mxu0
          %v4657 = vadd.f32 %v1395, %v4656
          %v4658 = vpop.f32.mrb[0].mxu0
          %4659 = vmatprep.mubr.bf16.mxu0 0
          %4660 = vmatmul.mubr.bf16.gmra.mrb[0].mxu0 %v4597
          %v4661 = vpop.f32.mrb[0].mxu0
          %v4662 = vadd.f32 %v1395, %v4661
          %v4663 = vpop.f32.mrb[0].mxu0
          %v4664 = vpop.f32.mrb[0].mxu0
          %v4665 = vadd.f32 %v1395, %v4664
          %v4666 = vpop.f32.mrb[0].mxu0
          %4667 = vmatprep.mubr.bf16.mxu0 0
          %4668 = vmatmul.mubr.bf16.gmra.mrb[0].mxu0 %v4598
          %v4669 = vpop.f32.mrb[0].mxu0
          %v4670 = vadd.f32 %v1395, %v4669
          %v4671 = vpop.f32.mrb[0].mxu0
          %v4672 = vpop.f32.mrb[0].mxu0
          %v4673 = vadd.f32 %v1395, %v4672
          %v4674 = vpop.f32.mrb[0].mxu0
          %4675 = vmatprep.mubr.bf16.mxu0 0
          %4676 = vmatmul.mubr.bf16.gmra.mrb[0].mxu0 %v4599
          %v4677 = vpop.f32.mrb[0].mxu0
          %v4678 = vadd.f32 %v1395, %v4677
          %v4679 = vpop.f32.mrb[0].mxu0
          %v4680 = vpop.f32.mrb[0].mxu0
          %v4681 = vadd.f32 %v1395, %v4680
          %v4682 = vpop.f32.mrb[0].mxu0
          %4683 = vmatprep.mubr.bf16.mxu0 0
          %4684 = vmatmul.mubr.bf16.gmra.mrb[0].mxu0 %v4600
          %v4685 = vpop.f32.mrb[0].mxu0
          %v4686 = vadd.f32 %v1395, %v4685
          %v4687 = vpop.f32.mrb[0].mxu0
          %v4688 = vpop.f32.mrb[0].mxu0
          %v4689 = vadd.f32 %v1395, %v4688
          %v4690 = vpop.f32.mrb[0].mxu0
          %4691 = vmatprep.mubr.bf16.mxu0 0
          %4692 = vmatmul.mubr.bf16.gmra.mrb[0].mxu0 %v4601
          %v4693 = vpop.f32.mrb[0].mxu0
          %v4694 = vadd.f32 %v1395, %v4693
          %v4695 = vpop.f32.mrb[0].mxu0
          %v4696 = vpop.f32.mrb[0].mxu0
          %v4697 = vadd.f32 %v1395, %v4696
          %v4698 = vpop.f32.mrb[0].mxu0
          %4699 = vmatprep.mubr.bf16.mxu0 0
          %4700 = vmatmul.mubr.bf16.gmra.mrb[0].mxu0 %v4602
          %v4701 = vpop.f32.mrb[0].mxu0
          %v4702 = vadd.f32 %v1395, %v4701
          %v4703 = vpop.f32.mrb[0].mxu0
          %v4704 = vpop.f32.mrb[0].mxu0
          %v4705 = vadd.f32 %v1395, %v4704
          %v4706 = vpop.f32.mrb[0].mxu0
          %4707 = vmatprep.mubr.bf16.mxu0 0
          %4708 = vmatmul.mubr.bf16.gmra.mrb[0].mxu0 %v4603
          %v4709 = vpop.f32.mrb[0].mxu0
          %v4710 = vadd.f32 %v1395, %v4709
          %v4711 = vpop.f32.mrb[0].mxu0
          %v4712 = vpop.f32.mrb[0].mxu0
          %v4713 = vadd.f32 %v1395, %v4712
          %v4714 = vpop.f32.mrb[0].mxu0
          %4715 = vmatprep.mubr.bf16.mxu0 0
          %4716 = vmatmul.mubr.bf16.gmra.mrb[0].mxu0 %v4604
          %v4717 = vpop.f32.mrb[0].mxu0
          %v4718 = vadd.f32 %v1395, %v4717
          %v4719 = vpop.f32.mrb[0].mxu0
          %v4720 = vpop.f32.mrb[0].mxu0
          %v4721 = vadd.f32 %v1395, %v4720
          %v4722 = vpop.f32.mrb[0].mxu0
          %4723 = vmatprep.mubr.bf16.mxu0 0
          %4724 = vmatmul.mubr.bf16.gmra.mrb[0].mxu0 %v4605
          %v4725 = vpop.f32.mrb[0].mxu0
          %v4726 = vadd.f32 %v1395, %v4725
          %v4727 = vpop.f32.mrb[0].mxu0
          %v4728 = vpop.f32.mrb[0].mxu0
          %v4729 = vadd.f32 %v1395, %v4728
          %v4730 = vpop.f32.mrb[0].mxu0
          %4731 = vmatprep.mubr.bf16.mxu0 0
          %4732 = vmatmul.mubr.bf16.gmra.mrb[0].mxu0 %v4606
          %v4733 = vpop.f32.mrb[0].mxu0
          %v4734 = vadd.f32 %v1395, %v4733
          %v4735 = vpop.f32.mrb[0].mxu0
          %v4736 = vpop.f32.mrb[0].mxu0
          %v4737 = vadd.f32 %v1395, %v4736
          %v4738 = vpop.f32.mrb[0].mxu0
          %4739 = vmatprep.mubr.bf16.mxu0 0
          %4740 = vmatmul.mubr.bf16.gmra.mrb[0].mxu0 %v4607
          %v4741 = vpop.f32.mrb[0].mxu0
          %v4742 = vadd.f32 %v1395, %v4741
          %v4743 = vpop.f32.mrb[0].mxu0
          %v4744 = vpop.f32.mrb[0].mxu0
          %v4745 = vadd.f32 %v1395, %v4744
          %v4746 = vpop.f32.mrb[0].mxu0
          %4747 = vmatprep.mubr.bf16.mxu0 0
          %4748 = vmatmul.mubr.bf16.gmra.mrb[0].mxu0 %v4608
          %v4749 = vpop.f32.mrb[0].mxu0
          %v4750 = vadd.f32 %v1395, %v4749
          %v4751 = vpop.f32.mrb[0].mxu0
          %v4752 = vpop.f32.mrb[0].mxu0
          %v4753 = vadd.f32 %v1395, %v4752
          %v4754 = vpop.f32.mrb[0].mxu0
          %4755 = vmatprep.mubr.bf16.mxu0 0
          %4756 = vmatmul.mubr.bf16.gmra.mrb[0].mxu0 %v4609
          %v4757 = vpop.f32.mrb[0].mxu0
          %v4758 = vadd.f32 %v1395, %v4757
          %v4759 = vpop.f32.mrb[0].mxu0
          %v4760 = vpop.f32.mrb[0].mxu0
          %v4761 = vadd.f32 %v1395, %v4760
          %v4762 = vpop.f32.mrb[0].mxu0
          %4763 = vmatprep.mubr.bf16.mxu0 0
          %4764 = vmatmul.mubr.bf16.gmra.mrb[0].mxu0 %v4610
          %v4765 = vpop.f32.mrb[0].mxu0
          %v4766 = vadd.f32 %v1395, %v4765
          %v4767 = vpop.f32.mrb[0].mxu0
          %v4768 = vpop.f32.mrb[0].mxu0
          %v4769 = vadd.f32 %v1395, %v4768
          %v4770 = vpop.f32.mrb[0].mxu0
          %4771 = vdwg.mxu0
          %v4772 = vmax.f32 %v4646, 0.0
          %v4773 = vmax.f32 %v4649, 0.0
          %v4774 = vmax.f32 %v4654, 0.0
          %v4775 = vmax.f32 %v4657, 0.0
          %v4776 = vmax.f32 %v4662, 0.0
          %v4777 = vmax.f32 %v4665, 0.0
          %v4778 = vmax.f32 %v4670, 0.0
          %v4779 = vmax.f32 %v4673, 0.0
          %v4780 = vmax.f32 %v4678, 0.0
          %v4781 = vmax.f32 %v4681, 0.0
          %v4782 = vmax.f32 %v4686, 0.0
          %v4783 = vmax.f32 %v4689, 0.0
          %v4784 = vmax.f32 %v4694, 0.0
          %v4785 = vmax.f32 %v4697, 0.0
          %v4786 = vmax.f32 %v4702, 0.0
          %v4787 = vmax.f32 %v4705, 0.0
          %v4788 = vmax.f32 %v4710, 0.0
          %v4789 = vmax.f32 %v4713, 0.0
          %v4790 = vmax.f32 %v4718, 0.0
          %v4791 = vmax.f32 %v4721, 0.0
          %v4792 = vmax.f32 %v4726, 0.0
          %v4793 = vmax.f32 %v4729, 0.0
          %v4794 = vmax.f32 %v4734, 0.0
          %v4795 = vmax.f32 %v4737, 0.0
          %v4796 = vmax.f32 %v4742, 0.0
          %v4797 = vmax.f32 %v4745, 0.0
          %v4798 = vmax.f32 %v4750, 0.0
          %v4799 = vmax.f32 %v4753, 0.0
          %v4800 = vmax.f32 %v4758, 0.0
          %v4801 = vmax.f32 %v4761, 0.0
          %v4802 = vmax.f32 %v4766, 0.0
          %v4803 = vmax.f32 %v4769, 0.0
          %v4804 = vadd.f32 %v3759, %v4772
          %v4805 = vadd.f32 %v3760, %v4773
          %v4806 = vadd.f32 %v3761, %v4774
          %v4807 = vadd.f32 %v3762, %v4775
          %v4808 = vadd.f32 %v3763, %v4776
          %v4809 = vadd.f32 %v3764, %v4777
          %v4810 = vadd.f32 %v3765, %v4778
          %v4811 = vadd.f32 %v3766, %v4779
          %v4812 = vadd.f32 %v3767, %v4780
          %v4813 = vadd.f32 %v3768, %v4781
          %v4814 = vadd.f32 %v3769, %v4782
          %v4815 = vadd.f32 %v3770, %v4783
          %v4816 = vadd.f32 %v3771, %v4784
          %v4817 = vadd.f32 %v3772, %v4785
          %v4818 = vadd.f32 %v3773, %v4786
          %v4819 = vadd.f32 %v3774, %v4787
          %v4820 = vadd.f32 %v3775, %v4788
          %v4821 = vadd.f32 %v3776, %v4789
          %v4822 = vadd.f32 %v3777, %v4790
          %v4823 = vadd.f32 %v3778, %v4791
          %v4824 = vadd.f32 %v3779, %v4792
          %v4825 = vadd.f32 %v3780, %v4793
          %v4826 = vadd.f32 %v3781, %v4794
          %v4827 = vadd.f32 %v3782, %v4795
          %v4828 = vadd.f32 %v3783, %v4796
          %v4829 = vadd.f32 %v3784, %v4797
          %v4830 = vadd.f32 %v3785, %v4798
          %v4831 = vadd.f32 %v3786, %v4799
          %v4832 = vadd.f32 %v3787, %v4800
          %v4833 = vadd.f32 %v3788, %v4801
          %v4834 = vadd.f32 %v3789, %v4802
          %v4835 = vadd.f32 %v3790, %v4803
          %v4836 = vrcp.pop 6.0
          %s4837 = vtos %v4836
          %s4838 = smul.f32 %s507, %s4837
          %v4839 = vstv %s4838
          %v4840 = vmul.f32 %v4839, %v4804
          %v4841 = vmul.f32 %v4839, %v4805
          %v4842 = vmul.f32 %v4839, %v4806
          %v4843 = vmul.f32 %v4839, %v4807
          %v4844 = vmul.f32 %v4839, %v4808
          %v4845 = vmul.f32 %v4839, %v4809
          %v4846 = vmul.f32 %v4839, %v4810
          %v4847 = vmul.f32 %v4839, %v4811
          %v4848 = vmul.f32 %v4839, %v4812
          %v4849 = vmul.f32 %v4839, %v4813
          %v4850 = vmul.f32 %v4839, %v4814
          %v4851 = vmul.f32 %v4839, %v4815
          %v4852 = vmul.f32 %v4839, %v4816
          %v4853 = vmul.f32 %v4839, %v4817
          %v4854 = vmul.f32 %v4839, %v4818
          %v4855 = vmul.f32 %v4839, %v4819
          %v4856 = vmul.f32 %v4839, %v4820
          %v4857 = vmul.f32 %v4839, %v4821
          %v4858 = vmul.f32 %v4839, %v4822
          %v4859 = vmul.f32 %v4839, %v4823
          %v4860 = vmul.f32 %v4839, %v4824
          %v4861 = vmul.f32 %v4839, %v4825
          %v4862 = vmul.f32 %v4839, %v4826
          %v4863 = vmul.f32 %v4839, %v4827
          %v4864 = vmul.f32 %v4839, %v4828
          %v4865 = vmul.f32 %v4839, %v4829
          %v4866 = vmul.f32 %v4839, %v4830
          %v4867 = vmul.f32 %v4839, %v4831
          %v4868 = vmul.f32 %v4839, %v4832
          %v4869 = vmul.f32 %v4839, %v4833
          %v4870 = vmul.f32 %v4839, %v4834
          %v4871 = vmul.f32 %v4839, %v4835
          %v4872 = vadd.f32 %v472, %v4840
          %v4873 = vadd.f32 %v473, %v4841
          %v4874 = vadd.f32 %v474, %v4842
          %v4875 = vadd.f32 %v475, %v4843
          %v4876 = vadd.f32 %v476, %v4844
          %v4877 = vadd.f32 %v477, %v4845
          %v4878 = vadd.f32 %v478, %v4846
          %v4879 = vadd.f32 %v479, %v4847
          %v4880 = vadd.f32 %v480, %v4848
          %v4881 = vadd.f32 %v481, %v4849
          %v4882 = vadd.f32 %v482, %v4850
          %v4883 = vadd.f32 %v483, %v4851
          %v4884 = vadd.f32 %v484, %v4852
          %v4885 = vadd.f32 %v485, %v4853
          %v4886 = vadd.f32 %v486, %v4854
          %v4887 = vadd.f32 %v487, %v4855
          %v4888 = vadd.f32 %v488, %v4856
          %v4889 = vadd.f32 %v489, %v4857
          %v4890 = vadd.f32 %v490, %v4858
          %v4891 = vadd.f32 %v491, %v4859
          %v4892 = vadd.f32 %v492, %v4860
          %v4893 = vadd.f32 %v493, %v4861
          %v4894 = vadd.f32 %v494, %v4862
          %v4895 = vadd.f32 %v495, %v4863
          %v4896 = vadd.f32 %v496, %v4864
          %v4897 = vadd.f32 %v497, %v4865
          %v4898 = vadd.f32 %v498, %v4866
          %v4899 = vadd.f32 %v499, %v4867
          %v4900 = vadd.f32 %v500, %v4868
          %v4901 = vadd.f32 %v501, %v4869
          %v4902 = vadd.f32 %v502, %v4870
          %v4903 = vadd.f32 %v503, %v4871
        $region69: #{tpu_custom_call.1} parent=59 // loop_footer
          %s471 = sadd.s32 1, %s467
        $region70: #{tpu_custom_call.1} parent=59 // loop_footer_branch
          %466 = sbr.rel target = $region66
        $region71: #{tpu_custom_call.1} parent=59 // loop_exit
          _
        %vm4904 = vcmask 261120
        %4905 = vst.msk [vmem:[%s375] sm:$0xff] %vm4904, %v472
        %4906 = vst.msk [vmem:[%s375 + $0x8] sm:$0xff] %vm4904, %v473
        %4907 = vst.msk [vmem:[%s375 + $0x10] sm:$0xff] %vm4904, %v474
        %4908 = vst.msk [vmem:[%s375 + $0x18] sm:$0xff] %vm4904, %v475
        %4909 = vst.msk [vmem:[%s375 + $0x20] sm:$0xff] %vm4904, %v476
        %4910 = vst.msk [vmem:[%s375 + $0x28] sm:$0xff] %vm4904, %v477
        %4911 = vst.msk [vmem:[%s375 + $0x30] sm:$0xff] %vm4904, %v478
        %4912 = vst.msk [vmem:[%s375 + $0x38] sm:$0xff] %vm4904, %v479
        %4913 = vst.msk [vmem:[%s375 + $0x40] sm:$0xff] %vm4904, %v480
        %4914 = vst.msk [vmem:[%s375 + $0x48] sm:$0xff] %vm4904, %v481
        %4915 = vst.msk [vmem:[%s375 + $0x50] sm:$0xff] %vm4904, %v482
        %4916 = vst.msk [vmem:[%s375 + $0x58] sm:$0xff] %vm4904, %v483
        %4917 = vst.msk [vmem:[%s375 + $0x60] sm:$0xff] %vm4904, %v484
        %4918 = vst.msk [vmem:[%s375 + $0x68] sm:$0xff] %vm4904, %v485
        %4919 = vst.msk [vmem:[%s375 + $0x70] sm:$0xff] %vm4904, %v486
        %4920 = vst.msk [vmem:[%s375 + $0x78] sm:$0xff] %vm4904, %v487
        %4921 = vst.msk [vmem:[%s375 + $0x80] sm:$0xff] %vm4904, %v488
        %4922 = vst.msk [vmem:[%s375 + $0x88] sm:$0xff] %vm4904, %v489
        %4923 = vst.msk [vmem:[%s375 + $0x90] sm:$0xff] %vm4904, %v490
        %4924 = vst.msk [vmem:[%s375 + $0x98] sm:$0xff] %vm4904, %v491
        %4925 = vst.msk [vmem:[%s375 + $0xa0] sm:$0xff] %vm4904, %v492
        %4926 = vst.msk [vmem:[%s375 + $0xa8] sm:$0xff] %vm4904, %v493
        %4927 = vst.msk [vmem:[%s375 + $0xb0] sm:$0xff] %vm4904, %v494
        %4928 = vst.msk [vmem:[%s375 + $0xb8] sm:$0xff] %vm4904, %v495
        %4929 = vst.msk [vmem:[%s375 + $0xc0] sm:$0xff] %vm4904, %v496
        %4930 = vst.msk [vmem:[%s375 + $0xc8] sm:$0xff] %vm4904, %v497
        %4931 = vst.msk [vmem:[%s375 + $0xd0] sm:$0xff] %vm4904, %v498
        %4932 = vst.msk [vmem:[%s375 + $0xd8] sm:$0xff] %vm4904, %v499
        %4933 = vst.msk [vmem:[%s375 + $0xe0] sm:$0xff] %vm4904, %v500
        %4934 = vst.msk [vmem:[%s375 + $0xe8] sm:$0xff] %vm4904, %v501
        %4935 = vst.msk [vmem:[%s375 + $0xf0] sm:$0xff] %vm4904, %v502
        %4936 = vst.msk [vmem:[%s375 + $0xf8] sm:$0xff] %vm4904, %v503
        %s4937 = smul.u32 32, %s22
        %p4938 = scmp.lt.s32.totalorder %s4937, 63
        %s4939 = scalar_select %p4938, %s4937, 63
        %s4940 = smul.addr %s4939, 8
        %s4941 = scalar_lea.vmem %s10, %s4940
        // Predicated region
        $region72: #{tpu_custom_call.1} parent=59 // pred_check
          %p4942 = pneg %p255
        $region73: #{tpu_custom_call.1} parent=59 // pred_check_branch
          %4944 = sbr.rel (%p4942) target = $region75
        $region74: #{tpu_custom_call.1} parent=59 // pred_region
          %s4945 = smul.u32 32, %s22
        $region75: #{tpu_custom_call.1} parent=59 // pred_fallthru
          _
      $region60: #{tpu_custom_call.1} parent=5 // pred_fallthru
        _
      %p4946 = scmp.le.s32.totalorder 2, %s17
      // Predicated region
      $region76: #{tpu_custom_call.1} parent=5 // pred_check
        %p4947 = pneg %p4946
      $region77: #{tpu_custom_call.1} parent=5 // pred_check_branch
        %4949 = sbr.rel (%p4947) target = $region79
      $region78: #{tpu_custom_call.1} parent=5 // pred_region
        %s4950 = ssub.s32 %s17, 2
        // Predicated region
        $region80: #{tpu_custom_call.1} parent=78 // pred_check
          %p4951 = pneg %p261
        $region81: #{tpu_custom_call.1} parent=78 // pred_check_branch
          %4953 = sbr.rel (%p4951) target = $region83
        $region82: #{tpu_custom_call.1} parent=78 // pred_region
          %s4954 = smul.u32 32, %s23
          %p4955 = scmp.lt.s32.totalorder %s4954, 63
          %s4956 = scalar_select %p4955, %s4954, 63
          %s4957 = smul.addr %s4956, 8
          %s4958 = scalar_lea.vmem %s10, %s4957
        $region83: #{tpu_custom_call.1} parent=78 // pred_fallthru
          _
      $region79: #{tpu_custom_call.1} parent=5 // pred_fallthru
        _
    $region6: #{tpu_custom_call.1} parent=1 // loop_footer
      %s21 = sadd.s32 1, %s17
    $region7: #{tpu_custom_call.1} parent=1 // loop_footer_branch
      %16 = sbr.rel target = $region3
    $region8: #{tpu_custom_call.1} parent=1 // loop_exit
      _
    %4959 = vsyncpa [#allocation3], 1
    %s4960 = scalar_lea.sflag [#allocation3], 1
    %4961 = vsyncpa %s4960, 1

</llo_original>
